<compile_context>
chip_gen: v7x
topology: tpu7x:2x2x1
jax: 0.10.0
libtpu: 0.0.40
codegen_flags: <defaults>
</compile_context>

<pallas_src>
import functools

import jax
import jax.numpy as jnp
import numpy as np
from jax import lax
from jax.experimental import pallas as pl
from jax.experimental.pallas import tpu as pltpu


def _lstm_kernel(x_ref, wih_ref, whh_ref, b_ref, wd_ref, bd_ref,
                 feats_ref, scores_ref, xg_sc, *, seq_len, batch, hidden):
    """Single-invocation LSTM forward.

    x_ref   : (T*B, D)  time-major flattened input
    wih_ref : (D, 4H)   W_ih^T
    whh_ref : (H, 4H)   W_hh^T
    b_ref   : (1, 4H)   b_ih + b_hh
    wd_ref  : (H, C)    dense W^T
    bd_ref  : (1, C)    dense bias
    xg_sc   : (T*B, 4H) VMEM scratch for the precomputed input projection
    """
    T, B, H = seq_len, batch, hidden

    # ---- Phase 1: input projection for ALL timesteps in one MXU op ---------
    # Only h @ W_hh^T remains on the serial (recurrent) critical path.
    xg_sc[...] = (jnp.dot(x_ref[...], wih_ref[...],
                          preferred_element_type=jnp.float32)
                  + b_ref[...])

    # ---- Phase 2: recurrence with (h, c) carried in vregs -------------------
    h0 = jnp.zeros((B, H), jnp.float32)
    c0 = jnp.zeros((B, H), jnp.float32)

    def step(t, carry):
        h, c = carry
        base = pl.multiple_of(t * B, B)
        x_gates = xg_sc[pl.ds(base, B), :]                      # (B, 4H) precomputed
        gates = x_gates + jnp.dot(h, whh_ref[...],
                                  preferred_element_type=jnp.float32)
        # H == 128 -> each gate slice is a lane-aligned full-vreg view.
        i = jax.nn.sigmoid(gates[:, 0 * H:1 * H])
        f = jax.nn.sigmoid(gates[:, 1 * H:2 * H])
        g = jnp.tanh(gates[:, 2 * H:3 * H])
        o = jax.nn.sigmoid(gates[:, 3 * H:4 * H])
        c_new = f * c + i * g
        h_new = o * jnp.tanh(c_new)
        return (h_new, c_new)

    h, _ = lax.fori_loop(0, T, step, (h0, c0), unroll=True)

    # ---- Phase 3: outputs (runs once) ---------------------------------------
    feats_ref[...] = h                                           # (B, H) lane-dense
    logits = (jnp.dot(h, wd_ref[...], preferred_element_type=jnp.float32)
              + bd_ref[...])
    scores_ref[...] = jax.nn.sigmoid(logits)


def lstm_forward(x, seq_lengths, params):
    """x: (B, input_dim, T) float32. Returns (scores, feats)."""
    del seq_lengths  # unused, as in the PyTorch reference forward
    B, D, T = x.shape
    wih, whh, b, wd, bd = params
    H = whh.shape[0]
    C = wd.shape[1]

    # Time-major, flattened for the batched input projection (tiny: T*B*D*4 bytes).
    x2d = jnp.transpose(x, (2, 0, 1)).reshape(T * B, D)          # (T*B, D)

    kernel = functools.partial(_lstm_kernel, seq_len=T, batch=B, hidden=H)

    feats, scores = pl.pallas_call(
        kernel,
        out_shape=(jax.ShapeDtypeStruct((B, H), jnp.float32),    # feats
                   jax.ShapeDtypeStruct((B, C), jnp.float32)),   # scores
        # No grid: every operand is brought fully into VMEM once; the whole
        # recurrence runs inside a single kernel invocation.
        scratch_shapes=[pltpu.VMEM((T * B, 4 * H), jnp.float32)],
    )(x2d, wih, whh, b, wd, bd)
    return scores, feats


# ----------------------------- init & reference ------------------------------

def _xavier_uniform(key, fan_out, fan_in):
    bound = float(np.sqrt(6.0 / (fan_in + fan_out)))
    return jax.random.uniform(key, (fan_out, fan_in), jnp.float32,
                              minval=-bound, maxval=bound)


def _orthogonal(key, rows, cols):
    a = jax.random.normal(key, (rows, cols), jnp.float32)
    q, r = jnp.linalg.qr(a)
    q = q * jnp.sign(jnp.diag(r))[None, :]
    return q  # (rows, cols), orthonormal columns (rows >= cols here)


def init_params(key, input_dim, hidden_dim, num_classes):
    k1, k2, k3 = jax.random.split(key, 3)
    # nn.LSTM weights: weight_ih_l0 (4H, D) xavier, weight_hh_l0 (4H, H) orthogonal,
    # biases zero. Pre-transpose for the kernel.
    w_ih = _xavier_uniform(k1, 4 * hidden_dim, input_dim)        # (4H, D)
    w_hh = _orthogonal(k2, 4 * hidden_dim, hidden_dim)           # (4H, H)
    b = jnp.zeros((1, 4 * hidden_dim), jnp.float32)              # b_ih + b_hh
    # nn.Linear: weight (C, H) xavier, bias zero
    w_d = _xavier_uniform(k3, num_classes, hidden_dim)           # (C, H)
    b_d = jnp.zeros((1, num_classes), jnp.float32)
    return (w_ih.T.astype(jnp.float32),    # (D, 4H)
            w_hh.T.astype(jnp.float32),    # (H, 4H)
            b,
            w_d.T.astype(jnp.float32),     # (H, C)
            b_d)


def reference_forward(x, params):
    """Pure-JAX reference (lax.scan LSTM) for correctness check."""
    wih, whh, b, wd, bd = params
    H = whh.shape[0]
    B, D, T = x.shape
    x_tbd = jnp.transpose(x, (2, 0, 1))                          # (T, B, D)
    # Same association as the kernel: input projection (+bias) precomputed.
    xg = (x_tbd.reshape(T * B, D) @ wih + b).reshape(T, B, 4 * H)

    def step(carry, xg_t):
        h, c = carry
        gates = xg_t + h @ whh
        i = jax.nn.sigmoid(gates[:, 0:H])
        f = jax.nn.sigmoid(gates[:, H:2 * H])
        g = jnp.tanh(gates[:, 2 * H:3 * H])
        o = jax.nn.sigmoid(gates[:, 3 * H:4 * H])
        c = f * c + i * g
        h = o * jnp.tanh(c)
        return (h, c), None

    (h, _), _ = jax.lax.scan(step,
                             (jnp.zeros((B, H), jnp.float32),
                              jnp.zeros((B, H), jnp.float32)),
                             xg)
    feats = h
    scores = jax.nn.sigmoid(feats @ wd + bd)
    return scores, feats


if __name__ == "__main__":
    # Module defaults: input_dim=12, hidden_dim=128, num_classes=1, layers=1.
    B, D, T = 8, 12, 16         # batch, input_dim, seq_len
    H, C = 128, 1               # hidden_dim (module default), num_classes

    key = jax.random.PRNGKey(0)
    kx, kp = jax.random.split(key)
    x = jax.random.normal(kx, (B, D, T), jnp.float32)
    seq_lengths = jnp.full((B,), T, jnp.int32)   # unused (matches reference)
    params = init_params(kp, D, H, C)

    scores, feats = jax.jit(functools.partial(lstm_forward, params=params))(
        x, seq_lengths)
    jax.block_until_ready((scores, feats))

    ref_scores, ref_feats = reference_forward(x, params)
    np.testing.assert_allclose(np.asarray(feats), np.asarray(ref_feats),
                               rtol=1e-5, atol=1e-5)
    np.testing.assert_allclose(np.asarray(scores), np.asarray(ref_scores),
                               rtol=1e-5, atol=1e-5)

    assert scores.shape == (B, C) and feats.shape == (B, H)
    print("KERNEL_OK")
</pallas_src>

<mosaic_0001>
module attributes {stable_mosaic.version = 11 : i64} {
  func.func @_lstm_kernel(%arg0: memref<128x12xf32, #tpu.memory_space<vmem>>, %arg1: memref<12x512xf32, #tpu.memory_space<vmem>>, %arg2: memref<128x512xf32, #tpu.memory_space<vmem>>, %arg3: memref<1x512xf32, #tpu.memory_space<vmem>>, %arg4: memref<128x1xf32, #tpu.memory_space<vmem>>, %arg5: memref<1x1xf32, #tpu.memory_space<vmem>>, %arg6: memref<8x128xf32, #tpu.memory_space<vmem>>, %arg7: memref<8x1xf32, #tpu.memory_space<vmem>>, %arg8: memref<128x512xf32, #tpu.memory_space<vmem>>) attributes {dimension_semantics = [], scalar_prefetch = 0 : i64, scratch_operands = 1 : i64, tpu.core_type = #tpu.core_type<tc>} {
    %c0 = arith.constant 0 : index
    %c0_0 = arith.constant 0 : index
    %0 = vector.load %arg0[%c0, %c0_0] : memref<128x12xf32, #tpu.memory_space<vmem>>, vector<128x12xf32>
    %c0_1 = arith.constant 0 : index
    %c0_2 = arith.constant 0 : index
    %1 = vector.load %arg1[%c0_1, %c0_2] : memref<12x512xf32, #tpu.memory_space<vmem>>, vector<12x512xf32>
    %cst = arith.constant dense<0.000000e+00> : vector<128x512xf32>
    %2 = tpu.matmul %0, %1, %cst {dimension_numbers = #tpu.dot_dimension_numbers<[1], [0], [0], [1], [0, 0, 1, 1], [], []>} : vector<128x12xf32>, vector<12x512xf32>, vector<128x512xf32> -> vector<128x512xf32>
    %c0_3 = arith.constant 0 : index
    %c0_4 = arith.constant 0 : index
    %3 = vector.load %arg3[%c0_3, %c0_4] : memref<1x512xf32, #tpu.memory_space<vmem>>, vector<1x512xf32>
    %4 = vector.broadcast %3 : vector<1x512xf32> to vector<128x512xf32>
    %5 = arith.addf %2, %4 : vector<128x512xf32>
    %c0_5 = arith.constant 0 : index
    %c0_6 = arith.constant 0 : index
    %6 = vector.load %arg8[%c0_5, %c0_6] : memref<128x512xf32, #tpu.memory_space<vmem>>, vector<128x512xf32>
    tpu.vector_store %arg8[%c0_5, %c0_6], %5 {strides = array<i32>} : memref<128x512xf32, #tpu.memory_space<vmem>>, vector<128x512xf32>,
    %cst_7 = arith.constant 0.000000e+00 : f32
    %7 = vector.broadcast %cst_7 : f32 to vector<8x128xf32>
    %cst_8 = arith.constant 0.000000e+00 : f32
    %8 = vector.broadcast %cst_8 : f32 to vector<8x128xf32>
    %c0_i32 = arith.constant 0 : i32
    %c8_i32 = arith.constant 8 : i32
    %9 = arith.muli %c0_i32, %c8_i32 : i32
    %10 = tpu.assume_multiple %9, 8 : i32
    %11 = arith.index_cast %10 : i32 to index
    %c0_9 = arith.constant 0 : index
    %12 = vector.load %arg8[%11, %c0_9] : memref<128x512xf32, #tpu.memory_space<vmem>>, vector<8x512xf32>
    %c0_10 = arith.constant 0 : index
    %c0_11 = arith.constant 0 : index
    %13 = vector.load %arg2[%c0_10, %c0_11] : memref<128x512xf32, #tpu.memory_space<vmem>>, vector<128x512xf32>
    %cst_12 = arith.constant dense<0.000000e+00> : vector<8x512xf32>
    %14 = tpu.matmul %7, %13, %cst_12 {dimension_numbers = #tpu.dot_dimension_numbers<[1], [0], [0], [1], [0, 0, 1, 1], [], []>} : vector<8x128xf32>, vector<128x512xf32>, vector<8x512xf32> -> vector<8x512xf32>
    %15 = arith.addf %12, %14 : vector<8x512xf32>
    %16 = vector.extract_strided_slice %15 {offsets = [0, 0], sizes = [8, 128], strides = [1, 1]} : vector<8x512xf32> to vector<8x128xf32>
    %17 = arith.negf %16 : vector<8x128xf32>
    %18 = math.exp %17 : vector<8x128xf32>
    %cst_13 = arith.constant 1.000000e+00 : f32
    %19 = vector.broadcast %cst_13 : f32 to vector<8x128xf32>
    %20 = arith.addf %19, %18 : vector<8x128xf32>
    %21 = arith.divf %19, %20 : vector<8x128xf32>
    %22 = vector.extract_strided_slice %15 {offsets = [0, 128], sizes = [8, 128], strides = [1, 1]} : vector<8x512xf32> to vector<8x128xf32>
    %23 = arith.negf %22 : vector<8x128xf32>
    %24 = math.exp %23 : vector<8x128xf32>
    %cst_14 = arith.constant 1.000000e+00 : f32
    %25 = vector.broadcast %cst_14 : f32 to vector<8x128xf32>
    %26 = arith.addf %25, %24 : vector<8x128xf32>
    %27 = arith.divf %25, %26 : vector<8x128xf32>
    %28 = vector.extract_strided_slice %15 {offsets = [0, 256], sizes = [8, 128], strides = [1, 1]} : vector<8x512xf32> to vector<8x128xf32>
    %29 = math.tanh %28 : vector<8x128xf32>
    %30 = vector.extract_strided_slice %15 {offsets = [0, 384], sizes = [8, 128], strides = [1, 1]} : vector<8x512xf32> to vector<8x128xf32>
    %31 = arith.negf %30 : vector<8x128xf32>
    %32 = math.exp %31 : vector<8x128xf32>
    %cst_15 = arith.constant 1.000000e+00 : f32
    %33 = vector.broadcast %cst_15 : f32 to vector<8x128xf32>
    %34 = arith.addf %33, %32 : vector<8x128xf32>
    %35 = arith.divf %33, %34 : vector<8x128xf32>
    %36 = arith.mulf %27, %8 : vector<8x128xf32>
    %37 = arith.mulf %21, %29 : vector<8x128xf32>
    %38 = arith.addf %36, %37 : vector<8x128xf32>
    %39 = math.tanh %38 : vector<8x128xf32>
    %40 = arith.mulf %35, %39 : vector<8x128xf32>
    %c1_i32 = arith.constant 1 : i32
    %c8_i32_16 = arith.constant 8 : i32
    %41 = arith.muli %c1_i32, %c8_i32_16 : i32
    %42 = tpu.assume_multiple %41, 8 : i32
    %43 = arith.index_cast %42 : i32 to index
    %c0_17 = arith.constant 0 : index
    %44 = vector.load %arg8[%43, %c0_17] : memref<128x512xf32, #tpu.memory_space<vmem>>, vector<8x512xf32>
    %c0_18 = arith.constant 0 : index
    %c0_19 = arith.constant 0 : index
    %45 = vector.load %arg2[%c0_18, %c0_19] : memref<128x512xf32, #tpu.memory_space<vmem>>, vector<128x512xf32>
    %cst_20 = arith.constant dense<0.000000e+00> : vector<8x512xf32>
    %46 = tpu.matmul %40, %45, %cst_20 {dimension_numbers = #tpu.dot_dimension_numbers<[1], [0], [0], [1], [0, 0, 1, 1], [], []>} : vector<8x128xf32>, vector<128x512xf32>, vector<8x512xf32> -> vector<8x512xf32>
    %47 = arith.addf %44, %46 : vector<8x512xf32>
    %48 = vector.extract_strided_slice %47 {offsets = [0, 0], sizes = [8, 128], strides = [1, 1]} : vector<8x512xf32> to vector<8x128xf32>
    %49 = arith.negf %48 : vector<8x128xf32>
    %50 = math.exp %49 : vector<8x128xf32>
    %cst_21 = arith.constant 1.000000e+00 : f32
    %51 = vector.broadcast %cst_21 : f32 to vector<8x128xf32>
    %52 = arith.addf %51, %50 : vector<8x128xf32>
    %53 = arith.divf %51, %52 : vector<8x128xf32>
    %54 = vector.extract_strided_slice %47 {offsets = [0, 128], sizes = [8, 128], strides = [1, 1]} : vector<8x512xf32> to vector<8x128xf32>
    %55 = arith.negf %54 : vector<8x128xf32>
    %56 = math.exp %55 : vector<8x128xf32>
    %cst_22 = arith.constant 1.000000e+00 : f32
    %57 = vector.broadcast %cst_22 : f32 to vector<8x128xf32>
    %58 = arith.addf %57, %56 : vector<8x128xf32>
    %59 = arith.divf %57, %58 : vector<8x128xf32>
    %60 = vector.extract_strided_slice %47 {offsets = [0, 256], sizes = [8, 128], strides = [1, 1]} : vector<8x512xf32> to vector<8x128xf32>
    %61 = math.tanh %60 : vector<8x128xf32>
    %62 = vector.extract_strided_slice %47 {offsets = [0, 384], sizes = [8, 128], strides = [1, 1]} : vector<8x512xf32> to vector<8x128xf32>
    %63 = arith.negf %62 : vector<8x128xf32>
    %64 = math.exp %63 : vector<8x128xf32>
    %cst_23 = arith.constant 1.000000e+00 : f32
    %65 = vector.broadcast %cst_23 : f32 to vector<8x128xf32>
    %66 = arith.addf %65, %64 : vector<8x128xf32>
    %67 = arith.divf %65, %66 : vector<8x128xf32>
    %68 = arith.mulf %59, %38 : vector<8x128xf32>
    %69 = arith.mulf %53, %61 : vector<8x128xf32>
    %70 = arith.addf %68, %69 : vector<8x128xf32>
    %71 = math.tanh %70 : vector<8x128xf32>
    %72 = arith.mulf %67, %71 : vector<8x128xf32>
    %c2_i32 = arith.constant 2 : i32
    %c8_i32_24 = arith.constant 8 : i32
    %73 = arith.muli %c2_i32, %c8_i32_24 : i32
    %74 = tpu.assume_multiple %73, 8 : i32
    %75 = arith.index_cast %74 : i32 to index
    %c0_25 = arith.constant 0 : index
    %76 = vector.load %arg8[%75, %c0_25] : memref<128x512xf32, #tpu.memory_space<vmem>>, vector<8x512xf32>
    %c0_26 = arith.constant 0 : index
    %c0_27 = arith.constant 0 : index
    %77 = vector.load %arg2[%c0_26, %c0_27] : memref<128x512xf32, #tpu.memory_space<vmem>>, vector<128x512xf32>
    %cst_28 = arith.constant dense<0.000000e+00> : vector<8x512xf32>
    %78 = tpu.matmul %72, %77, %cst_28 {dimension_numbers = #tpu.dot_dimension_numbers<[1], [0], [0], [1], [0, 0, 1, 1], [], []>} : vector<8x128xf32>, vector<128x512xf32>, vector<8x512xf32> -> vector<8x512xf32>
    %79 = arith.addf %76, %78 : vector<8x512xf32>
    %80 = vector.extract_strided_slice %79 {offsets = [0, 0], sizes = [8, 128], strides = [1, 1]} : vector<8x512xf32> to vector<8x128xf32>
    %81 = arith.negf %80 : vector<8x128xf32>
    %82 = math.exp %81 : vector<8x128xf32>
    %cst_29 = arith.constant 1.000000e+00 : f32
    %83 = vector.broadcast %cst_29 : f32 to vector<8x128xf32>
    %84 = arith.addf %83, %82 : vector<8x128xf32>
    %85 = arith.divf %83, %84 : vector<8x128xf32>
    %86 = vector.extract_strided_slice %79 {offsets = [0, 128], sizes = [8, 128], strides = [1, 1]} : vector<8x512xf32> to vector<8x128xf32>
    %87 = arith.negf %86 : vector<8x128xf32>
    %88 = math.exp %87 : vector<8x128xf32>
    %cst_30 = arith.constant 1.000000e+00 : f32
    %89 = vector.broadcast %cst_30 : f32 to vector<8x128xf32>
    %90 = arith.addf %89, %88 : vector<8x128xf32>
    %91 = arith.divf %89, %90 : vector<8x128xf32>
    %92 = vector.extract_strided_slice %79 {offsets = [0, 256], sizes = [8, 128], strides = [1, 1]} : vector<8x512xf32> to vector<8x128xf32>
    %93 = math.tanh %92 : vector<8x128xf32>
    %94 = vector.extract_strided_slice %79 {offsets = [0, 384], sizes = [8, 128], strides = [1, 1]} : vector<8x512xf32> to vector<8x128xf32>
    %95 = arith.negf %94 : vector<8x128xf32>
    %96 = math.exp %95 : vector<8x128xf32>
    %cst_31 = arith.constant 1.000000e+00 : f32
    %97 = vector.broadcast %cst_31 : f32 to vector<8x128xf32>
    %98 = arith.addf %97, %96 : vector<8x128xf32>
    %99 = arith.divf %97, %98 : vector<8x128xf32>
    %100 = arith.mulf %91, %70 : vector<8x128xf32>
    %101 = arith.mulf %85, %93 : vector<8x128xf32>
    %102 = arith.addf %100, %101 : vector<8x128xf32>
    %103 = math.tanh %102 : vector<8x128xf32>
    %104 = arith.mulf %99, %103 : vector<8x128xf32>
    %c3_i32 = arith.constant 3 : i32
    %c8_i32_32 = arith.constant 8 : i32
    %105 = arith.muli %c3_i32, %c8_i32_32 : i32
    %106 = tpu.assume_multiple %105, 8 : i32
    %107 = arith.index_cast %106 : i32 to index
    %c0_33 = arith.constant 0 : index
    %108 = vector.load %arg8[%107, %c0_33] : memref<128x512xf32, #tpu.memory_space<vmem>>, vector<8x512xf32>
    %c0_34 = arith.constant 0 : index
    %c0_35 = arith.constant 0 : index
    %109 = vector.load %arg2[%c0_34, %c0_35] : memref<128x512xf32, #tpu.memory_space<vmem>>, vector<128x512xf32>
    %cst_36 = arith.constant dense<0.000000e+00> : vector<8x512xf32>
    %110 = tpu.matmul %104, %109, %cst_36 {dimension_numbers = #tpu.dot_dimension_numbers<[1], [0], [0], [1], [0, 0, 1, 1], [], []>} : vector<8x128xf32>, vector<128x512xf32>, vector<8x512xf32> -> vector<8x512xf32>
    %111 = arith.addf %108, %110 : vector<8x512xf32>
    %112 = vector.extract_strided_slice %111 {offsets = [0, 0], sizes = [8, 128], strides = [1, 1]} : vector<8x512xf32> to vector<8x128xf32>
    %113 = arith.negf %112 : vector<8x128xf32>
    %114 = math.exp %113 : vector<8x128xf32>
    %cst_37 = arith.constant 1.000000e+00 : f32
    %115 = vector.broadcast %cst_37 : f32 to vector<8x128xf32>
    %116 = arith.addf %115, %114 : vector<8x128xf32>
    %117 = arith.divf %115, %116 : vector<8x128xf32>
    %118 = vector.extract_strided_slice %111 {offsets = [0, 128], sizes = [8, 128], strides = [1, 1]} : vector<8x512xf32> to vector<8x128xf32>
    %119 = arith.negf %118 : vector<8x128xf32>
    %120 = math.exp %119 : vector<8x128xf32>
    %cst_38 = arith.constant 1.000000e+00 : f32
    %121 = vector.broadcast %cst_38 : f32 to vector<8x128xf32>
    %122 = arith.addf %121, %120 : vector<8x128xf32>
    %123 = arith.divf %121, %122 : vector<8x128xf32>
    %124 = vector.extract_strided_slice %111 {offsets = [0, 256], sizes = [8, 128], strides = [1, 1]} : vector<8x512xf32> to vector<8x128xf32>
    %125 = math.tanh %124 : vector<8x128xf32>
    %126 = vector.extract_strided_slice %111 {offsets = [0, 384], sizes = [8, 128], strides = [1, 1]} : vector<8x512xf32> to vector<8x128xf32>
    %127 = arith.negf %126 : vector<8x128xf32>
    %128 = math.exp %127 : vector<8x128xf32>
    %cst_39 = arith.constant 1.000000e+00 : f32
    %129 = vector.broadcast %cst_39 : f32 to vector<8x128xf32>
    %130 = arith.addf %129, %128 : vector<8x128xf32>
    %131 = arith.divf %129, %130 : vector<8x128xf32>
    %132 = arith.mulf %123, %102 : vector<8x128xf32>
    %133 = arith.mulf %117, %125 : vector<8x128xf32>
    %134 = arith.addf %132, %133 : vector<8x128xf32>
    %135 = math.tanh %134 : vector<8x128xf32>
    %136 = arith.mulf %131, %135 : vector<8x128xf32>
    %c4_i32 = arith.constant 4 : i32
    %c8_i32_40 = arith.constant 8 : i32
    %137 = arith.muli %c4_i32, %c8_i32_40 : i32
    %138 = tpu.assume_multiple %137, 8 : i32
    %139 = arith.index_cast %138 : i32 to index
    %c0_41 = arith.constant 0 : index
    %140 = vector.load %arg8[%139, %c0_41] : memref<128x512xf32, #tpu.memory_space<vmem>>, vector<8x512xf32>
    %c0_42 = arith.constant 0 : index
    %c0_43 = arith.constant 0 : index
    %141 = vector.load %arg2[%c0_42, %c0_43] : memref<128x512xf32, #tpu.memory_space<vmem>>, vector<128x512xf32>
    %cst_44 = arith.constant dense<0.000000e+00> : vector<8x512xf32>
    %142 = tpu.matmul %136, %141, %cst_44 {dimension_numbers = #tpu.dot_dimension_numbers<[1], [0], [0], [1], [0, 0, 1, 1], [], []>} : vector<8x128xf32>, vector<128x512xf32>, vector<8x512xf32> -> vector<8x512xf32>
    %143 = arith.addf %140, %142 : vector<8x512xf32>
    %144 = vector.extract_strided_slice %143 {offsets = [0, 0], sizes = [8, 128], strides = [1, 1]} : vector<8x512xf32> to vector<8x128xf32>
    %145 = arith.negf %144 : vector<8x128xf32>
    %146 = math.exp %145 : vector<8x128xf32>
    %cst_45 = arith.constant 1.000000e+00 : f32
    %147 = vector.broadcast %cst_45 : f32 to vector<8x128xf32>
    %148 = arith.addf %147, %146 : vector<8x128xf32>
    %149 = arith.divf %147, %148 : vector<8x128xf32>
    %150 = vector.extract_strided_slice %143 {offsets = [0, 128], sizes = [8, 128], strides = [1, 1]} : vector<8x512xf32> to vector<8x128xf32>
    %151 = arith.negf %150 : vector<8x128xf32>
    %152 = math.exp %151 : vector<8x128xf32>
    %cst_46 = arith.constant 1.000000e+00 : f32
    %153 = vector.broadcast %cst_46 : f32 to vector<8x128xf32>
    %154 = arith.addf %153, %152 : vector<8x128xf32>
    %155 = arith.divf %153, %154 : vector<8x128xf32>
    %156 = vector.extract_strided_slice %143 {offsets = [0, 256], sizes = [8, 128], strides = [1, 1]} : vector<8x512xf32> to vector<8x128xf32>
    %157 = math.tanh %156 : vector<8x128xf32>
    %158 = vector.extract_strided_slice %143 {offsets = [0, 384], sizes = [8, 128], strides = [1, 1]} : vector<8x512xf32> to vector<8x128xf32>
    %159 = arith.negf %158 : vector<8x128xf32>
    %160 = math.exp %159 : vector<8x128xf32>
    %cst_47 = arith.constant 1.000000e+00 : f32
    %161 = vector.broadcast %cst_47 : f32 to vector<8x128xf32>
    %162 = arith.addf %161, %160 : vector<8x128xf32>
    %163 = arith.divf %161, %162 : vector<8x128xf32>
    %164 = arith.mulf %155, %134 : vector<8x128xf32>
    %165 = arith.mulf %149, %157 : vector<8x128xf32>
    %166 = arith.addf %164, %165 : vector<8x128xf32>
    %167 = math.tanh %166 : vector<8x128xf32>
    %168 = arith.mulf %163, %167 : vector<8x128xf32>
    %c5_i32 = arith.constant 5 : i32
    %c8_i32_48 = arith.constant 8 : i32
    %169 = arith.muli %c5_i32, %c8_i32_48 : i32
    %170 = tpu.assume_multiple %169, 8 : i32
    %171 = arith.index_cast %170 : i32 to index
    %c0_49 = arith.constant 0 : index
    %172 = vector.load %arg8[%171, %c0_49] : memref<128x512xf32, #tpu.memory_space<vmem>>, vector<8x512xf32>
    %c0_50 = arith.constant 0 : index
    %c0_51 = arith.constant 0 : index
    %173 = vector.load %arg2[%c0_50, %c0_51] : memref<128x512xf32, #tpu.memory_space<vmem>>, vector<128x512xf32>
    %cst_52 = arith.constant dense<0.000000e+00> : vector<8x512xf32>
    %174 = tpu.matmul %168, %173, %cst_52 {dimension_numbers = #tpu.dot_dimension_numbers<[1], [0], [0], [1], [0, 0, 1, 1], [], []>} : vector<8x128xf32>, vector<128x512xf32>, vector<8x512xf32> -> vector<8x512xf32>
    %175 = arith.addf %172, %174 : vector<8x512xf32>
    %176 = vector.extract_strided_slice %175 {offsets = [0, 0], sizes = [8, 128], strides = [1, 1]} : vector<8x512xf32> to vector<8x128xf32>
    %177 = arith.negf %176 : vector<8x128xf32>
    %178 = math.exp %177 : vector<8x128xf32>
    %cst_53 = arith.constant 1.000000e+00 : f32
    %179 = vector.broadcast %cst_53 : f32 to vector<8x128xf32>
    %180 = arith.addf %179, %178 : vector<8x128xf32>
    %181 = arith.divf %179, %180 : vector<8x128xf32>
    %182 = vector.extract_strided_slice %175 {offsets = [0, 128], sizes = [8, 128], strides = [1, 1]} : vector<8x512xf32> to vector<8x128xf32>
    %183 = arith.negf %182 : vector<8x128xf32>
    %184 = math.exp %183 : vector<8x128xf32>
    %cst_54 = arith.constant 1.000000e+00 : f32
    %185 = vector.broadcast %cst_54 : f32 to vector<8x128xf32>
    %186 = arith.addf %185, %184 : vector<8x128xf32>
    %187 = arith.divf %185, %186 : vector<8x128xf32>
    %188 = vector.extract_strided_slice %175 {offsets = [0, 256], sizes = [8, 128], strides = [1, 1]} : vector<8x512xf32> to vector<8x128xf32>
    %189 = math.tanh %188 : vector<8x128xf32>
    %190 = vector.extract_strided_slice %175 {offsets = [0, 384], sizes = [8, 128], strides = [1, 1]} : vector<8x512xf32> to vector<8x128xf32>
    %191 = arith.negf %190 : vector<8x128xf32>
    %192 = math.exp %191 : vector<8x128xf32>
    %cst_55 = arith.constant 1.000000e+00 : f32
    %193 = vector.broadcast %cst_55 : f32 to vector<8x128xf32>
    %194 = arith.addf %193, %192 : vector<8x128xf32>
    %195 = arith.divf %193, %194 : vector<8x128xf32>
    %196 = arith.mulf %187, %166 : vector<8x128xf32>
    %197 = arith.mulf %181, %189 : vector<8x128xf32>
    %198 = arith.addf %196, %197 : vector<8x128xf32>
    %199 = math.tanh %198 : vector<8x128xf32>
    %200 = arith.mulf %195, %199 : vector<8x128xf32>
    %c6_i32 = arith.constant 6 : i32
    %c8_i32_56 = arith.constant 8 : i32
    %201 = arith.muli %c6_i32, %c8_i32_56 : i32
    %202 = tpu.assume_multiple %201, 8 : i32
    %203 = arith.index_cast %202 : i32 to index
    %c0_57 = arith.constant 0 : index
    %204 = vector.load %arg8[%203, %c0_57] : memref<128x512xf32, #tpu.memory_space<vmem>>, vector<8x512xf32>
    %c0_58 = arith.constant 0 : index
    %c0_59 = arith.constant 0 : index
    %205 = vector.load %arg2[%c0_58, %c0_59] : memref<128x512xf32, #tpu.memory_space<vmem>>, vector<128x512xf32>
    %cst_60 = arith.constant dense<0.000000e+00> : vector<8x512xf32>
    %206 = tpu.matmul %200, %205, %cst_60 {dimension_numbers = #tpu.dot_dimension_numbers<[1], [0], [0], [1], [0, 0, 1, 1], [], []>} : vector<8x128xf32>, vector<128x512xf32>, vector<8x512xf32> -> vector<8x512xf32>
    %207 = arith.addf %204, %206 : vector<8x512xf32>
    %208 = vector.extract_strided_slice %207 {offsets = [0, 0], sizes = [8, 128], strides = [1, 1]} : vector<8x512xf32> to vector<8x128xf32>
    %209 = arith.negf %208 : vector<8x128xf32>
    %210 = math.exp %209 : vector<8x128xf32>
    %cst_61 = arith.constant 1.000000e+00 : f32
    %211 = vector.broadcast %cst_61 : f32 to vector<8x128xf32>
    %212 = arith.addf %211, %210 : vector<8x128xf32>
    %213 = arith.divf %211, %212 : vector<8x128xf32>
    %214 = vector.extract_strided_slice %207 {offsets = [0, 128], sizes = [8, 128], strides = [1, 1]} : vector<8x512xf32> to vector<8x128xf32>
    %215 = arith.negf %214 : vector<8x128xf32>
    %216 = math.exp %215 : vector<8x128xf32>
    %cst_62 = arith.constant 1.000000e+00 : f32
    %217 = vector.broadcast %cst_62 : f32 to vector<8x128xf32>
    %218 = arith.addf %217, %216 : vector<8x128xf32>
    %219 = arith.divf %217, %218 : vector<8x128xf32>
    %220 = vector.extract_strided_slice %207 {offsets = [0, 256], sizes = [8, 128], strides = [1, 1]} : vector<8x512xf32> to vector<8x128xf32>
    %221 = math.tanh %220 : vector<8x128xf32>
    %222 = vector.extract_strided_slice %207 {offsets = [0, 384], sizes = [8, 128], strides = [1, 1]} : vector<8x512xf32> to vector<8x128xf32>
    %223 = arith.negf %222 : vector<8x128xf32>
    %224 = math.exp %223 : vector<8x128xf32>
    %cst_63 = arith.constant 1.000000e+00 : f32
    %225 = vector.broadcast %cst_63 : f32 to vector<8x128xf32>
    %226 = arith.addf %225, %224 : vector<8x128xf32>
    %227 = arith.divf %225, %226 : vector<8x128xf32>
    %228 = arith.mulf %219, %198 : vector<8x128xf32>
    %229 = arith.mulf %213, %221 : vector<8x128xf32>
    %230 = arith.addf %228, %229 : vector<8x128xf32>
    %231 = math.tanh %230 : vector<8x128xf32>
    %232 = arith.mulf %227, %231 : vector<8x128xf32>
    %c7_i32 = arith.constant 7 : i32
    %c8_i32_64 = arith.constant 8 : i32
    %233 = arith.muli %c7_i32, %c8_i32_64 : i32
    %234 = tpu.assume_multiple %233, 8 : i32
    %235 = arith.index_cast %234 : i32 to index
    %c0_65 = arith.constant 0 : index
    %236 = vector.load %arg8[%235, %c0_65] : memref<128x512xf32, #tpu.memory_space<vmem>>, vector<8x512xf32>
    %c0_66 = arith.constant 0 : index
    %c0_67 = arith.constant 0 : index
    %237 = vector.load %arg2[%c0_66, %c0_67] : memref<128x512xf32, #tpu.memory_space<vmem>>, vector<128x512xf32>
    %cst_68 = arith.constant dense<0.000000e+00> : vector<8x512xf32>
    %238 = tpu.matmul %232, %237, %cst_68 {dimension_numbers = #tpu.dot_dimension_numbers<[1], [0], [0], [1], [0, 0, 1, 1], [], []>} : vector<8x128xf32>, vector<128x512xf32>, vector<8x512xf32> -> vector<8x512xf32>
    %239 = arith.addf %236, %238 : vector<8x512xf32>
    %240 = vector.extract_strided_slice %239 {offsets = [0, 0], sizes = [8, 128], strides = [1, 1]} : vector<8x512xf32> to vector<8x128xf32>
    %241 = arith.negf %240 : vector<8x128xf32>
    %242 = math.exp %241 : vector<8x128xf32>
    %cst_69 = arith.constant 1.000000e+00 : f32
    %243 = vector.broadcast %cst_69 : f32 to vector<8x128xf32>
    %244 = arith.addf %243, %242 : vector<8x128xf32>
    %245 = arith.divf %243, %244 : vector<8x128xf32>
    %246 = vector.extract_strided_slice %239 {offsets = [0, 128], sizes = [8, 128], strides = [1, 1]} : vector<8x512xf32> to vector<8x128xf32>
    %247 = arith.negf %246 : vector<8x128xf32>
    %248 = math.exp %247 : vector<8x128xf32>
    %cst_70 = arith.constant 1.000000e+00 : f32
    %249 = vector.broadcast %cst_70 : f32 to vector<8x128xf32>
    %250 = arith.addf %249, %248 : vector<8x128xf32>
    %251 = arith.divf %249, %250 : vector<8x128xf32>
    %252 = vector.extract_strided_slice %239 {offsets = [0, 256], sizes = [8, 128], strides = [1, 1]} : vector<8x512xf32> to vector<8x128xf32>
    %253 = math.tanh %252 : vector<8x128xf32>
    %254 = vector.extract_strided_slice %239 {offsets = [0, 384], sizes = [8, 128], strides = [1, 1]} : vector<8x512xf32> to vector<8x128xf32>
    %255 = arith.negf %254 : vector<8x128xf32>
    %256 = math.exp %255 : vector<8x128xf32>
    %cst_71 = arith.constant 1.000000e+00 : f32
    %257 = vector.broadcast %cst_71 : f32 to vector<8x128xf32>
    %258 = arith.addf %257, %256 : vector<8x128xf32>
    %259 = arith.divf %257, %258 : vector<8x128xf32>
    %260 = arith.mulf %251, %230 : vector<8x128xf32>
    %261 = arith.mulf %245, %253 : vector<8x128xf32>
    %262 = arith.addf %260, %261 : vector<8x128xf32>
    %263 = math.tanh %262 : vector<8x128xf32>
    %264 = arith.mulf %259, %263 : vector<8x128xf32>
    %c8_i32_72 = arith.constant 8 : i32
    %c8_i32_73 = arith.constant 8 : i32
    %265 = arith.muli %c8_i32_72, %c8_i32_73 : i32
    %266 = tpu.assume_multiple %265, 8 : i32
    %267 = arith.index_cast %266 : i32 to index
    %c0_74 = arith.constant 0 : index
    %268 = vector.load %arg8[%267, %c0_74] : memref<128x512xf32, #tpu.memory_space<vmem>>, vector<8x512xf32>
    %c0_75 = arith.constant 0 : index
    %c0_76 = arith.constant 0 : index
    %269 = vector.load %arg2[%c0_75, %c0_76] : memref<128x512xf32, #tpu.memory_space<vmem>>, vector<128x512xf32>
    %cst_77 = arith.constant dense<0.000000e+00> : vector<8x512xf32>
    %270 = tpu.matmul %264, %269, %cst_77 {dimension_numbers = #tpu.dot_dimension_numbers<[1], [0], [0], [1], [0, 0, 1, 1], [], []>} : vector<8x128xf32>, vector<128x512xf32>, vector<8x512xf32> -> vector<8x512xf32>
    %271 = arith.addf %268, %270 : vector<8x512xf32>
    %272 = vector.extract_strided_slice %271 {offsets = [0, 0], sizes = [8, 128], strides = [1, 1]} : vector<8x512xf32> to vector<8x128xf32>
    %273 = arith.negf %272 : vector<8x128xf32>
    %274 = math.exp %273 : vector<8x128xf32>
    %cst_78 = arith.constant 1.000000e+00 : f32
    %275 = vector.broadcast %cst_78 : f32 to vector<8x128xf32>
    %276 = arith.addf %275, %274 : vector<8x128xf32>
    %277 = arith.divf %275, %276 : vector<8x128xf32>
    %278 = vector.extract_strided_slice %271 {offsets = [0, 128], sizes = [8, 128], strides = [1, 1]} : vector<8x512xf32> to vector<8x128xf32>
    %279 = arith.negf %278 : vector<8x128xf32>
    %280 = math.exp %279 : vector<8x128xf32>
    %cst_79 = arith.constant 1.000000e+00 : f32
    %281 = vector.broadcast %cst_79 : f32 to vector<8x128xf32>
    %282 = arith.addf %281, %280 : vector<8x128xf32>
    %283 = arith.divf %281, %282 : vector<8x128xf32>
    %284 = vector.extract_strided_slice %271 {offsets = [0, 256], sizes = [8, 128], strides = [1, 1]} : vector<8x512xf32> to vector<8x128xf32>
    %285 = math.tanh %284 : vector<8x128xf32>
    %286 = vector.extract_strided_slice %271 {offsets = [0, 384], sizes = [8, 128], strides = [1, 1]} : vector<8x512xf32> to vector<8x128xf32>
    %287 = arith.negf %286 : vector<8x128xf32>
    %288 = math.exp %287 : vector<8x128xf32>
    %cst_80 = arith.constant 1.000000e+00 : f32
    %289 = vector.broadcast %cst_80 : f32 to vector<8x128xf32>
    %290 = arith.addf %289, %288 : vector<8x128xf32>
    %291 = arith.divf %289, %290 : vector<8x128xf32>
    %292 = arith.mulf %283, %262 : vector<8x128xf32>
    %293 = arith.mulf %277, %285 : vector<8x128xf32>
    %294 = arith.addf %292, %293 : vector<8x128xf32>
    %295 = math.tanh %294 : vector<8x128xf32>
    %296 = arith.mulf %291, %295 : vector<8x128xf32>
    %c9_i32 = arith.constant 9 : i32
    %c8_i32_81 = arith.constant 8 : i32
    %297 = arith.muli %c9_i32, %c8_i32_81 : i32
    %298 = tpu.assume_multiple %297, 8 : i32
    %299 = arith.index_cast %298 : i32 to index
    %c0_82 = arith.constant 0 : index
    %300 = vector.load %arg8[%299, %c0_82] : memref<128x512xf32, #tpu.memory_space<vmem>>, vector<8x512xf32>
    %c0_83 = arith.constant 0 : index
    %c0_84 = arith.constant 0 : index
    %301 = vector.load %arg2[%c0_83, %c0_84] : memref<128x512xf32, #tpu.memory_space<vmem>>, vector<128x512xf32>
    %cst_85 = arith.constant dense<0.000000e+00> : vector<8x512xf32>
    %302 = tpu.matmul %296, %301, %cst_85 {dimension_numbers = #tpu.dot_dimension_numbers<[1], [0], [0], [1], [0, 0, 1, 1], [], []>} : vector<8x128xf32>, vector<128x512xf32>, vector<8x512xf32> -> vector<8x512xf32>
    %303 = arith.addf %300, %302 : vector<8x512xf32>
    %304 = vector.extract_strided_slice %303 {offsets = [0, 0], sizes = [8, 128], strides = [1, 1]} : vector<8x512xf32> to vector<8x128xf32>
    %305 = arith.negf %304 : vector<8x128xf32>
    %306 = math.exp %305 : vector<8x128xf32>
    %cst_86 = arith.constant 1.000000e+00 : f32
    %307 = vector.broadcast %cst_86 : f32 to vector<8x128xf32>
    %308 = arith.addf %307, %306 : vector<8x128xf32>
    %309 = arith.divf %307, %308 : vector<8x128xf32>
    %310 = vector.extract_strided_slice %303 {offsets = [0, 128], sizes = [8, 128], strides = [1, 1]} : vector<8x512xf32> to vector<8x128xf32>
    %311 = arith.negf %310 : vector<8x128xf32>
    %312 = math.exp %311 : vector<8x128xf32>
    %cst_87 = arith.constant 1.000000e+00 : f32
    %313 = vector.broadcast %cst_87 : f32 to vector<8x128xf32>
    %314 = arith.addf %313, %312 : vector<8x128xf32>
    %315 = arith.divf %313, %314 : vector<8x128xf32>
    %316 = vector.extract_strided_slice %303 {offsets = [0, 256], sizes = [8, 128], strides = [1, 1]} : vector<8x512xf32> to vector<8x128xf32>
    %317 = math.tanh %316 : vector<8x128xf32>
    %318 = vector.extract_strided_slice %303 {offsets = [0, 384], sizes = [8, 128], strides = [1, 1]} : vector<8x512xf32> to vector<8x128xf32>
    %319 = arith.negf %318 : vector<8x128xf32>
    %320 = math.exp %319 : vector<8x128xf32>
    %cst_88 = arith.constant 1.000000e+00 : f32
    %321 = vector.broadcast %cst_88 : f32 to vector<8x128xf32>
    %322 = arith.addf %321, %320 : vector<8x128xf32>
    %323 = arith.divf %321, %322 : vector<8x128xf32>
    %324 = arith.mulf %315, %294 : vector<8x128xf32>
    %325 = arith.mulf %309, %317 : vector<8x128xf32>
    %326 = arith.addf %324, %325 : vector<8x128xf32>
    %327 = math.tanh %326 : vector<8x128xf32>
    %328 = arith.mulf %323, %327 : vector<8x128xf32>
    %c10_i32 = arith.constant 10 : i32
    %c8_i32_89 = arith.constant 8 : i32
    %329 = arith.muli %c10_i32, %c8_i32_89 : i32
    %330 = tpu.assume_multiple %329, 8 : i32
    %331 = arith.index_cast %330 : i32 to index
    %c0_90 = arith.constant 0 : index
    %332 = vector.load %arg8[%331, %c0_90] : memref<128x512xf32, #tpu.memory_space<vmem>>, vector<8x512xf32>
    %c0_91 = arith.constant 0 : index
    %c0_92 = arith.constant 0 : index
    %333 = vector.load %arg2[%c0_91, %c0_92] : memref<128x512xf32, #tpu.memory_space<vmem>>, vector<128x512xf32>
    %cst_93 = arith.constant dense<0.000000e+00> : vector<8x512xf32>
    %334 = tpu.matmul %328, %333, %cst_93 {dimension_numbers = #tpu.dot_dimension_numbers<[1], [0], [0], [1], [0, 0, 1, 1], [], []>} : vector<8x128xf32>, vector<128x512xf32>, vector<8x512xf32> -> vector<8x512xf32>
    %335 = arith.addf %332, %334 : vector<8x512xf32>
    %336 = vector.extract_strided_slice %335 {offsets = [0, 0], sizes = [8, 128], strides = [1, 1]} : vector<8x512xf32> to vector<8x128xf32>
    %337 = arith.negf %336 : vector<8x128xf32>
    %338 = math.exp %337 : vector<8x128xf32>
    %cst_94 = arith.constant 1.000000e+00 : f32
    %339 = vector.broadcast %cst_94 : f32 to vector<8x128xf32>
    %340 = arith.addf %339, %338 : vector<8x128xf32>
    %341 = arith.divf %339, %340 : vector<8x128xf32>
    %342 = vector.extract_strided_slice %335 {offsets = [0, 128], sizes = [8, 128], strides = [1, 1]} : vector<8x512xf32> to vector<8x128xf32>
    %343 = arith.negf %342 : vector<8x128xf32>
    %344 = math.exp %343 : vector<8x128xf32>
    %cst_95 = arith.constant 1.000000e+00 : f32
    %345 = vector.broadcast %cst_95 : f32 to vector<8x128xf32>
    %346 = arith.addf %345, %344 : vector<8x128xf32>
    %347 = arith.divf %345, %346 : vector<8x128xf32>
    %348 = vector.extract_strided_slice %335 {offsets = [0, 256], sizes = [8, 128], strides = [1, 1]} : vector<8x512xf32> to vector<8x128xf32>
    %349 = math.tanh %348 : vector<8x128xf32>
    %350 = vector.extract_strided_slice %335 {offsets = [0, 384], sizes = [8, 128], strides = [1, 1]} : vector<8x512xf32> to vector<8x128xf32>
    %351 = arith.negf %350 : vector<8x128xf32>
    %352 = math.exp %351 : vector<8x128xf32>
    %cst_96 = arith.constant 1.000000e+00 : f32
    %353 = vector.broadcast %cst_96 : f32 to vector<8x128xf32>
    %354 = arith.addf %353, %352 : vector<8x128xf32>
    %355 = arith.divf %353, %354 : vector<8x128xf32>
    %356 = arith.mulf %347, %326 : vector<8x128xf32>
    %357 = arith.mulf %341, %349 : vector<8x128xf32>
    %358 = arith.addf %356, %357 : vector<8x128xf32>
    %359 = math.tanh %358 : vector<8x128xf32>
    %360 = arith.mulf %355, %359 : vector<8x128xf32>
    %c11_i32 = arith.constant 11 : i32
    %c8_i32_97 = arith.constant 8 : i32
    %361 = arith.muli %c11_i32, %c8_i32_97 : i32
    %362 = tpu.assume_multiple %361, 8 : i32
    %363 = arith.index_cast %362 : i32 to index
    %c0_98 = arith.constant 0 : index
    %364 = vector.load %arg8[%363, %c0_98] : memref<128x512xf32, #tpu.memory_space<vmem>>, vector<8x512xf32>
    %c0_99 = arith.constant 0 : index
    %c0_100 = arith.constant 0 : index
    %365 = vector.load %arg2[%c0_99, %c0_100] : memref<128x512xf32, #tpu.memory_space<vmem>>, vector<128x512xf32>
    %cst_101 = arith.constant dense<0.000000e+00> : vector<8x512xf32>
    %366 = tpu.matmul %360, %365, %cst_101 {dimension_numbers = #tpu.dot_dimension_numbers<[1], [0], [0], [1], [0, 0, 1, 1], [], []>} : vector<8x128xf32>, vector<128x512xf32>, vector<8x512xf32> -> vector<8x512xf32>
    %367 = arith.addf %364, %366 : vector<8x512xf32>
    %368 = vector.extract_strided_slice %367 {offsets = [0, 0], sizes = [8, 128], strides = [1, 1]} : vector<8x512xf32> to vector<8x128xf32>
    %369 = arith.negf %368 : vector<8x128xf32>
    %370 = math.exp %369 : vector<8x128xf32>
    %cst_102 = arith.constant 1.000000e+00 : f32
    %371 = vector.broadcast %cst_102 : f32 to vector<8x128xf32>
    %372 = arith.addf %371, %370 : vector<8x128xf32>
    %373 = arith.divf %371, %372 : vector<8x128xf32>
    %374 = vector.extract_strided_slice %367 {offsets = [0, 128], sizes = [8, 128], strides = [1, 1]} : vector<8x512xf32> to vector<8x128xf32>
    %375 = arith.negf %374 : vector<8x128xf32>
    %376 = math.exp %375 : vector<8x128xf32>
    %cst_103 = arith.constant 1.000000e+00 : f32
    %377 = vector.broadcast %cst_103 : f32 to vector<8x128xf32>
    %378 = arith.addf %377, %376 : vector<8x128xf32>
    %379 = arith.divf %377, %378 : vector<8x128xf32>
    %380 = vector.extract_strided_slice %367 {offsets = [0, 256], sizes = [8, 128], strides = [1, 1]} : vector<8x512xf32> to vector<8x128xf32>
    %381 = math.tanh %380 : vector<8x128xf32>
    %382 = vector.extract_strided_slice %367 {offsets = [0, 384], sizes = [8, 128], strides = [1, 1]} : vector<8x512xf32> to vector<8x128xf32>
    %383 = arith.negf %382 : vector<8x128xf32>
    %384 = math.exp %383 : vector<8x128xf32>
    %cst_104 = arith.constant 1.000000e+00 : f32
    %385 = vector.broadcast %cst_104 : f32 to vector<8x128xf32>
    %386 = arith.addf %385, %384 : vector<8x128xf32>
    %387 = arith.divf %385, %386 : vector<8x128xf32>
    %388 = arith.mulf %379, %358 : vector<8x128xf32>
    %389 = arith.mulf %373, %381 : vector<8x128xf32>
    %390 = arith.addf %388, %389 : vector<8x128xf32>
    %391 = math.tanh %390 : vector<8x128xf32>
    %392 = arith.mulf %387, %391 : vector<8x128xf32>
    %c12_i32 = arith.constant 12 : i32
    %c8_i32_105 = arith.constant 8 : i32
    %393 = arith.muli %c12_i32, %c8_i32_105 : i32
    %394 = tpu.assume_multiple %393, 8 : i32
    %395 = arith.index_cast %394 : i32 to index
    %c0_106 = arith.constant 0 : index
    %396 = vector.load %arg8[%395, %c0_106] : memref<128x512xf32, #tpu.memory_space<vmem>>, vector<8x512xf32>
    %c0_107 = arith.constant 0 : index
    %c0_108 = arith.constant 0 : index
    %397 = vector.load %arg2[%c0_107, %c0_108] : memref<128x512xf32, #tpu.memory_space<vmem>>, vector<128x512xf32>
    %cst_109 = arith.constant dense<0.000000e+00> : vector<8x512xf32>
    %398 = tpu.matmul %392, %397, %cst_109 {dimension_numbers = #tpu.dot_dimension_numbers<[1], [0], [0], [1], [0, 0, 1, 1], [], []>} : vector<8x128xf32>, vector<128x512xf32>, vector<8x512xf32> -> vector<8x512xf32>
    %399 = arith.addf %396, %398 : vector<8x512xf32>
    %400 = vector.extract_strided_slice %399 {offsets = [0, 0], sizes = [8, 128], strides = [1, 1]} : vector<8x512xf32> to vector<8x128xf32>
    %401 = arith.negf %400 : vector<8x128xf32>
    %402 = math.exp %401 : vector<8x128xf32>
    %cst_110 = arith.constant 1.000000e+00 : f32
    %403 = vector.broadcast %cst_110 : f32 to vector<8x128xf32>
    %404 = arith.addf %403, %402 : vector<8x128xf32>
    %405 = arith.divf %403, %404 : vector<8x128xf32>
    %406 = vector.extract_strided_slice %399 {offsets = [0, 128], sizes = [8, 128], strides = [1, 1]} : vector<8x512xf32> to vector<8x128xf32>
    %407 = arith.negf %406 : vector<8x128xf32>
    %408 = math.exp %407 : vector<8x128xf32>
    %cst_111 = arith.constant 1.000000e+00 : f32
    %409 = vector.broadcast %cst_111 : f32 to vector<8x128xf32>
    %410 = arith.addf %409, %408 : vector<8x128xf32>
    %411 = arith.divf %409, %410 : vector<8x128xf32>
    %412 = vector.extract_strided_slice %399 {offsets = [0, 256], sizes = [8, 128], strides = [1, 1]} : vector<8x512xf32> to vector<8x128xf32>
    %413 = math.tanh %412 : vector<8x128xf32>
    %414 = vector.extract_strided_slice %399 {offsets = [0, 384], sizes = [8, 128], strides = [1, 1]} : vector<8x512xf32> to vector<8x128xf32>
    %415 = arith.negf %414 : vector<8x128xf32>
    %416 = math.exp %415 : vector<8x128xf32>
    %cst_112 = arith.constant 1.000000e+00 : f32
    %417 = vector.broadcast %cst_112 : f32 to vector<8x128xf32>
    %418 = arith.addf %417, %416 : vector<8x128xf32>
    %419 = arith.divf %417, %418 : vector<8x128xf32>
    %420 = arith.mulf %411, %390 : vector<8x128xf32>
    %421 = arith.mulf %405, %413 : vector<8x128xf32>
    %422 = arith.addf %420, %421 : vector<8x128xf32>
    %423 = math.tanh %422 : vector<8x128xf32>
    %424 = arith.mulf %419, %423 : vector<8x128xf32>
    %c13_i32 = arith.constant 13 : i32
    %c8_i32_113 = arith.constant 8 : i32
    %425 = arith.muli %c13_i32, %c8_i32_113 : i32
    %426 = tpu.assume_multiple %425, 8 : i32
    %427 = arith.index_cast %426 : i32 to index
    %c0_114 = arith.constant 0 : index
    %428 = vector.load %arg8[%427, %c0_114] : memref<128x512xf32, #tpu.memory_space<vmem>>, vector<8x512xf32>
    %c0_115 = arith.constant 0 : index
    %c0_116 = arith.constant 0 : index
    %429 = vector.load %arg2[%c0_115, %c0_116] : memref<128x512xf32, #tpu.memory_space<vmem>>, vector<128x512xf32>
    %cst_117 = arith.constant dense<0.000000e+00> : vector<8x512xf32>
    %430 = tpu.matmul %424, %429, %cst_117 {dimension_numbers = #tpu.dot_dimension_numbers<[1], [0], [0], [1], [0, 0, 1, 1], [], []>} : vector<8x128xf32>, vector<128x512xf32>, vector<8x512xf32> -> vector<8x512xf32>
    %431 = arith.addf %428, %430 : vector<8x512xf32>
    %432 = vector.extract_strided_slice %431 {offsets = [0, 0], sizes = [8, 128], strides = [1, 1]} : vector<8x512xf32> to vector<8x128xf32>
    %433 = arith.negf %432 : vector<8x128xf32>
    %434 = math.exp %433 : vector<8x128xf32>
    %cst_118 = arith.constant 1.000000e+00 : f32
    %435 = vector.broadcast %cst_118 : f32 to vector<8x128xf32>
    %436 = arith.addf %435, %434 : vector<8x128xf32>
    %437 = arith.divf %435, %436 : vector<8x128xf32>
    %438 = vector.extract_strided_slice %431 {offsets = [0, 128], sizes = [8, 128], strides = [1, 1]} : vector<8x512xf32> to vector<8x128xf32>
    %439 = arith.negf %438 : vector<8x128xf32>
    %440 = math.exp %439 : vector<8x128xf32>
    %cst_119 = arith.constant 1.000000e+00 : f32
    %441 = vector.broadcast %cst_119 : f32 to vector<8x128xf32>
    %442 = arith.addf %441, %440 : vector<8x128xf32>
    %443 = arith.divf %441, %442 : vector<8x128xf32>
    %444 = vector.extract_strided_slice %431 {offsets = [0, 256], sizes = [8, 128], strides = [1, 1]} : vector<8x512xf32> to vector<8x128xf32>
    %445 = math.tanh %444 : vector<8x128xf32>
    %446 = vector.extract_strided_slice %431 {offsets = [0, 384], sizes = [8, 128], strides = [1, 1]} : vector<8x512xf32> to vector<8x128xf32>
    %447 = arith.negf %446 : vector<8x128xf32>
    %448 = math.exp %447 : vector<8x128xf32>
    %cst_120 = arith.constant 1.000000e+00 : f32
    %449 = vector.broadcast %cst_120 : f32 to vector<8x128xf32>
    %450 = arith.addf %449, %448 : vector<8x128xf32>
    %451 = arith.divf %449, %450 : vector<8x128xf32>
    %452 = arith.mulf %443, %422 : vector<8x128xf32>
    %453 = arith.mulf %437, %445 : vector<8x128xf32>
    %454 = arith.addf %452, %453 : vector<8x128xf32>
    %455 = math.tanh %454 : vector<8x128xf32>
    %456 = arith.mulf %451, %455 : vector<8x128xf32>
    %c14_i32 = arith.constant 14 : i32
    %c8_i32_121 = arith.constant 8 : i32
    %457 = arith.muli %c14_i32, %c8_i32_121 : i32
    %458 = tpu.assume_multiple %457, 8 : i32
    %459 = arith.index_cast %458 : i32 to index
    %c0_122 = arith.constant 0 : index
    %460 = vector.load %arg8[%459, %c0_122] : memref<128x512xf32, #tpu.memory_space<vmem>>, vector<8x512xf32>
    %c0_123 = arith.constant 0 : index
    %c0_124 = arith.constant 0 : index
    %461 = vector.load %arg2[%c0_123, %c0_124] : memref<128x512xf32, #tpu.memory_space<vmem>>, vector<128x512xf32>
    %cst_125 = arith.constant dense<0.000000e+00> : vector<8x512xf32>
    %462 = tpu.matmul %456, %461, %cst_125 {dimension_numbers = #tpu.dot_dimension_numbers<[1], [0], [0], [1], [0, 0, 1, 1], [], []>} : vector<8x128xf32>, vector<128x512xf32>, vector<8x512xf32> -> vector<8x512xf32>
    %463 = arith.addf %460, %462 : vector<8x512xf32>
    %464 = vector.extract_strided_slice %463 {offsets = [0, 0], sizes = [8, 128], strides = [1, 1]} : vector<8x512xf32> to vector<8x128xf32>
    %465 = arith.negf %464 : vector<8x128xf32>
    %466 = math.exp %465 : vector<8x128xf32>
    %cst_126 = arith.constant 1.000000e+00 : f32
    %467 = vector.broadcast %cst_126 : f32 to vector<8x128xf32>
    %468 = arith.addf %467, %466 : vector<8x128xf32>
    %469 = arith.divf %467, %468 : vector<8x128xf32>
    %470 = vector.extract_strided_slice %463 {offsets = [0, 128], sizes = [8, 128], strides = [1, 1]} : vector<8x512xf32> to vector<8x128xf32>
    %471 = arith.negf %470 : vector<8x128xf32>
    %472 = math.exp %471 : vector<8x128xf32>
    %cst_127 = arith.constant 1.000000e+00 : f32
    %473 = vector.broadcast %cst_127 : f32 to vector<8x128xf32>
    %474 = arith.addf %473, %472 : vector<8x128xf32>
    %475 = arith.divf %473, %474 : vector<8x128xf32>
    %476 = vector.extract_strided_slice %463 {offsets = [0, 256], sizes = [8, 128], strides = [1, 1]} : vector<8x512xf32> to vector<8x128xf32>
    %477 = math.tanh %476 : vector<8x128xf32>
    %478 = vector.extract_strided_slice %463 {offsets = [0, 384], sizes = [8, 128], strides = [1, 1]} : vector<8x512xf32> to vector<8x128xf32>
    %479 = arith.negf %478 : vector<8x128xf32>
    %480 = math.exp %479 : vector<8x128xf32>
    %cst_128 = arith.constant 1.000000e+00 : f32
    %481 = vector.broadcast %cst_128 : f32 to vector<8x128xf32>
    %482 = arith.addf %481, %480 : vector<8x128xf32>
    %483 = arith.divf %481, %482 : vector<8x128xf32>
    %484 = arith.mulf %475, %454 : vector<8x128xf32>
    %485 = arith.mulf %469, %477 : vector<8x128xf32>
    %486 = arith.addf %484, %485 : vector<8x128xf32>
    %487 = math.tanh %486 : vector<8x128xf32>
    %488 = arith.mulf %483, %487 : vector<8x128xf32>
    %c15_i32 = arith.constant 15 : i32
    %c8_i32_129 = arith.constant 8 : i32
    %489 = arith.muli %c15_i32, %c8_i32_129 : i32
    %490 = tpu.assume_multiple %489, 8 : i32
    %491 = arith.index_cast %490 : i32 to index
    %c0_130 = arith.constant 0 : index
    %492 = vector.load %arg8[%491, %c0_130] : memref<128x512xf32, #tpu.memory_space<vmem>>, vector<8x512xf32>
    %c0_131 = arith.constant 0 : index
    %c0_132 = arith.constant 0 : index
    %493 = vector.load %arg2[%c0_131, %c0_132] : memref<128x512xf32, #tpu.memory_space<vmem>>, vector<128x512xf32>
    %cst_133 = arith.constant dense<0.000000e+00> : vector<8x512xf32>
    %494 = tpu.matmul %488, %493, %cst_133 {dimension_numbers = #tpu.dot_dimension_numbers<[1], [0], [0], [1], [0, 0, 1, 1], [], []>} : vector<8x128xf32>, vector<128x512xf32>, vector<8x512xf32> -> vector<8x512xf32>
    %495 = arith.addf %492, %494 : vector<8x512xf32>
    %496 = vector.extract_strided_slice %495 {offsets = [0, 0], sizes = [8, 128], strides = [1, 1]} : vector<8x512xf32> to vector<8x128xf32>
    %497 = arith.negf %496 : vector<8x128xf32>
    %498 = math.exp %497 : vector<8x128xf32>
    %cst_134 = arith.constant 1.000000e+00 : f32
    %499 = vector.broadcast %cst_134 : f32 to vector<8x128xf32>
    %500 = arith.addf %499, %498 : vector<8x128xf32>
    %501 = arith.divf %499, %500 : vector<8x128xf32>
    %502 = vector.extract_strided_slice %495 {offsets = [0, 128], sizes = [8, 128], strides = [1, 1]} : vector<8x512xf32> to vector<8x128xf32>
    %503 = arith.negf %502 : vector<8x128xf32>
    %504 = math.exp %503 : vector<8x128xf32>
    %cst_135 = arith.constant 1.000000e+00 : f32
    %505 = vector.broadcast %cst_135 : f32 to vector<8x128xf32>
    %506 = arith.addf %505, %504 : vector<8x128xf32>
    %507 = arith.divf %505, %506 : vector<8x128xf32>
    %508 = vector.extract_strided_slice %495 {offsets = [0, 256], sizes = [8, 128], strides = [1, 1]} : vector<8x512xf32> to vector<8x128xf32>
    %509 = math.tanh %508 : vector<8x128xf32>
    %510 = vector.extract_strided_slice %495 {offsets = [0, 384], sizes = [8, 128], strides = [1, 1]} : vector<8x512xf32> to vector<8x128xf32>
    %511 = arith.negf %510 : vector<8x128xf32>
    %512 = math.exp %511 : vector<8x128xf32>
    %cst_136 = arith.constant 1.000000e+00 : f32
    %513 = vector.broadcast %cst_136 : f32 to vector<8x128xf32>
    %514 = arith.addf %513, %512 : vector<8x128xf32>
    %515 = arith.divf %513, %514 : vector<8x128xf32>
    %516 = arith.mulf %507, %486 : vector<8x128xf32>
    %517 = arith.mulf %501, %509 : vector<8x128xf32>
    %518 = arith.addf %516, %517 : vector<8x128xf32>
    %519 = math.tanh %518 : vector<8x128xf32>
    %520 = arith.mulf %515, %519 : vector<8x128xf32>
    %c16_i32 = arith.constant 16 : i32
    %c0_137 = arith.constant 0 : index
    %c0_138 = arith.constant 0 : index
    %521 = vector.load %arg6[%c0_137, %c0_138] : memref<8x128xf32, #tpu.memory_space<vmem>>, vector<8x128xf32>
    tpu.vector_store %arg6[%c0_137, %c0_138], %520 {strides = array<i32>} : memref<8x128xf32, #tpu.memory_space<vmem>>, vector<8x128xf32>,
    %c0_139 = arith.constant 0 : index
    %c0_140 = arith.constant 0 : index
    %522 = vector.load %arg4[%c0_139, %c0_140] : memref<128x1xf32, #tpu.memory_space<vmem>>, vector<128x1xf32>
    %cst_141 = arith.constant dense<0.000000e+00> : vector<8x1xf32>
    %523 = tpu.matmul %520, %522, %cst_141 {dimension_numbers = #tpu.dot_dimension_numbers<[1], [0], [0], [1], [0, 0, 1, 1], [], []>} : vector<8x128xf32>, vector<128x1xf32>, vector<8x1xf32> -> vector<8x1xf32>
    %c0_142 = arith.constant 0 : index
    %c0_143 = arith.constant 0 : index
    %524 = vector.load %arg5[%c0_142, %c0_143] : memref<1x1xf32, #tpu.memory_space<vmem>>, vector<1x1xf32>
    %525 = vector.broadcast %524 : vector<1x1xf32> to vector<8x1xf32>
    %526 = arith.addf %523, %525 : vector<8x1xf32>
    %527 = arith.negf %526 : vector<8x1xf32>
    %528 = math.exp %527 : vector<8x1xf32>
    %cst_144 = arith.constant 1.000000e+00 : f32
    %529 = vector.broadcast %cst_144 : f32 to vector<8x1xf32>
    %530 = arith.addf %529, %528 : vector<8x1xf32>
    %531 = arith.divf %529, %530 : vector<8x1xf32>
    %c0_145 = arith.constant 0 : index
    %c0_146 = arith.constant 0 : index
    %532 = vector.load %arg7[%c0_145, %c0_146] : memref<8x1xf32, #tpu.memory_space<vmem>>, vector<8x1xf32>
    tpu.vector_store %arg7[%c0_145, %c0_146], %531 {strides = array<i32>} : memref<8x1xf32, #tpu.memory_space<vmem>>, vector<8x1xf32>,
    return
  }
}

</mosaic_0001>

<llo_original>
// kernel: lstm_forward.1
$region0: #{lstm_forward.1}
  #allocation0 [shape = 'u32[]', space=smem, size = 0x4, offset = 0x4, fixed_abs, tag = 'smem constant byte address 0x4 - core index']
  #allocation1 [shape = 'u32[144,128]{1,0:T(1,128)}', space=vmem, size = 0x12000, scoped, tag = 'internal scratch']
  #allocation2 [shape = 'f32[128,512]{1,0:T(8,128)}', space=vmem, size = 0x40000, scoped, tag = 'scratch operand']
  #allocation3 [shape = 'f32[1,1]{1,0:T(1,128)S(1)}', space=vmem, size = 0x200, scoped, tag = 'scoped memory for lstm_forward.1']
  %s0 = inlined_call_operand.vmem [shape: f32[128,12], index: 0, kind: input, shape index: {}]
  %s1 = inlined_call_operand.vmem [shape: f32[12,512], index: 1, kind: input, shape index: {}]
  %s2 = inlined_call_operand.hbm [shape: f32[128,512], index: 2, kind: input, shape index: {}]
  %s3 = inlined_call_operand.vmem [shape: f32[1,512], index: 3, kind: input, shape index: {}]
  %s4 = inlined_call_operand.vmem [shape: f32[128,1], index: 4, kind: input, shape index: {}]
  %s5 = inlined_call_operand.<no memory space> [shape: f32[1,1], index: 5, kind: input, shape index: {}]
  %s6 = inlined_call_operand.hbm [shape: f32[8,128], index: 6, kind: output, shape index: {0}]
  %s7 = inlined_call_operand.vmem [shape: f32[8,1], index: 7, kind: output, shape index: {1}]
  %8 = xla_tuple %s6, %s7
  %s9 = sld [smem:[#allocation0]]
  $region46: #{lstm_forward.1} parent=0
    _
  %s11 = ssub.s32 1, %s9
  %s12 = scalar_select 0, %s11, %s9
  %v13 = vstv %s5
  %14 = vst [vmem:[#allocation3] sm:$0x1] %v13
  $region1: #{lstm_forward.1} parent=0
    #allocation4 [shape = 'u8[262144]{0}', space=vmem, size = 0x40000, scoped, tag = 'input window, operand 2, single buffered']
    #allocation5 [shape = 's32[1]{0}', space=sflag, size = 0x4, scoped, tag = 'scoped memory for lstm_forward.1']
    #allocation6 [shape = 's32[1]{0}', space=sflag, size = 0x4, scoped, tag = 'scoped memory for lstm_forward.1']
    #allocation7 [shape = 'u8[4096]{0}', space=vmem, size = 0x1000, scoped, tag = 'output window, operand 0, single buffered']
    %15 = vsyncpa [#allocation5], 0
    %16 = vsyncpa [#allocation6], 0
    // Predicated region
    $region2: #{lstm_forward.1} parent=1 // pred_check
      _
    $region3: #{lstm_forward.1} parent=1 // pred_check_branch
      %18 = sbr.rel (0) target = $region5
    $region4: #{lstm_forward.1} parent=1 // pred_region
      _
    $region5: #{lstm_forward.1} parent=1 // pred_fallthru
      _
    // Predicated region
    $region6: #{lstm_forward.1} parent=1 // pred_check
      _
    $region7: #{lstm_forward.1} parent=1 // pred_check_branch
      %20 = sbr.rel (0) target = $region9
    $region8: #{lstm_forward.1} parent=1 // pred_region
      _
    $region9: #{lstm_forward.1} parent=1 // pred_fallthru
      _
    // Predicated region
    $region10: #{lstm_forward.1} parent=1 // pred_check
      _
    $region11: #{lstm_forward.1} parent=1 // pred_check_branch
      %22 = sbr.rel (0) target = $region13
    $region12: #{lstm_forward.1} parent=1 // pred_region
      %s24 = ssub.s32 8192, 8192
      %25 = vsyncadd [#allocation5], %s24
      %s26 = sshll.u32 [#allocation4], 4
      %s27 = int_to_ptr.vmem [resolvable:$true] %s26
      %32 = dma.hbm_to_vmem [thread:$0]  %s2, 8192, %s27, [#allocation5], 512, 512, 32
    $region13: #{lstm_forward.1} parent=1 // pred_fallthru
      _
    // Predicated region
    $region14: #{lstm_forward.1} parent=1 // pred_check
      _
    $region15: #{lstm_forward.1} parent=1 // pred_check_branch
      %34 = sbr.rel (0) target = $region17
    $region16: #{lstm_forward.1} parent=1 // pred_region
      _
    $region17: #{lstm_forward.1} parent=1 // pred_fallthru
      _
    // Predicated region
    $region18: #{lstm_forward.1} parent=1 // pred_check
      _
    $region19: #{lstm_forward.1} parent=1 // pred_check_branch
      %36 = sbr.rel (0) target = $region21
    $region20: #{lstm_forward.1} parent=1 // pred_region
      _
    $region21: #{lstm_forward.1} parent=1 // pred_fallthru
      _
    // Predicated region
    $region22: #{lstm_forward.1} parent=1 // pred_check
      _
    $region23: #{lstm_forward.1} parent=1 // pred_check_branch
      %38 = sbr.rel (0) target = $region25
    $region24: #{lstm_forward.1} parent=1 // pred_region
      _
    $region25: #{lstm_forward.1} parent=1 // pred_fallthru
      _
    // Predicated region
    $region26: #{lstm_forward.1} parent=1 // pred_check
      _
    $region27: #{lstm_forward.1} parent=1 // pred_check_branch
      %40 = sbr.rel (0) target = $region29
    $region28: #{lstm_forward.1} parent=1 // pred_region
      %41 = dma.done [#allocation5], 8192
    $region29: #{lstm_forward.1} parent=1 // pred_fallthru
      _
    %v42 = vld [vmem:[%s0] sm:$0xff]
    %v43 = vld [vmem:[%s0 + $0x8] sm:$0xff]
    %v44 = vld [vmem:[%s0 + $0x10] sm:$0xff]
    %v45 = vld [vmem:[%s0 + $0x18] sm:$0xff]
    %v46 = vld [vmem:[%s0 + $0x20] sm:$0xff]
    %v47 = vld [vmem:[%s0 + $0x28] sm:$0xff]
    %v48 = vld [vmem:[%s0 + $0x30] sm:$0xff]
    %v49 = vld [vmem:[%s0 + $0x38] sm:$0xff]
    %v50 = vld [vmem:[%s0 + $0x40] sm:$0xff]
    %v51 = vld [vmem:[%s0 + $0x48] sm:$0xff]
    %v52 = vld [vmem:[%s0 + $0x50] sm:$0xff]
    %v53 = vld [vmem:[%s0 + $0x58] sm:$0xff]
    %v54 = vld [vmem:[%s0 + $0x60] sm:$0xff]
    %v55 = vld [vmem:[%s0 + $0x68] sm:$0xff]
    %v56 = vld [vmem:[%s0 + $0x70] sm:$0xff]
    %v57 = vld [vmem:[%s0 + $0x78] sm:$0xff]
    %v58 = vld [vmem:[%s1] sm:$0xff]
    %v59 = vld [vmem:[%s1 + $0x8] sm:$0xff]
    %v60 = vld [vmem:[%s1 + $0x10] sm:$0xff]
    %v61 = vld [vmem:[%s1 + $0x18] sm:$0xff]
    %v62 = vld [vmem:[%s1 + $0x20] sm:$0xf]
    %v63 = vld [vmem:[%s1 + $0x28] sm:$0xf]
    %v64 = vld [vmem:[%s1 + $0x30] sm:$0xf]
    %v65 = vld [vmem:[%s1 + $0x38] sm:$0xf]
    %v66 = vld [vmem:[%s3] sm:$0xf]
    %v68 = vlaneseq
    %v69 = vshrl.u32 %v68, 7
    %v70 = vsub.s32 0, %v69
    %v71 = vrot.slane %v66, %v70
    %v72 = vlaneseq
    %v73 = vshrl.u32 %v72, 7
    %v74 = vsub.s32 1, %v73
    %v75 = vrot.slane %v66, %v74
    %v76 = vlaneseq
    %v77 = vshrl.u32 %v76, 7
    %v78 = vsub.s32 2, %v77
    %v79 = vrot.slane %v66, %v78
    %v80 = vlaneseq
    %v81 = vshrl.u32 %v80, 7
    %v82 = vsub.s32 3, %v81
    %v83 = vrot.slane %v66, %v82
    %vm88 = vcmask 97280
    %v90 = vsel %vm88, %v42, 0
    %v93 = vsel %vm88, %v43, 0
    %v96 = vsel %vm88, %v44, 0
    %v99 = vsel %vm88, %v45, 0
    %v102 = vsel %vm88, %v46, 0
    %v105 = vsel %vm88, %v47, 0
    %v108 = vsel %vm88, %v48, 0
    %v111 = vsel %vm88, %v49, 0
    %v114 = vsel %vm88, %v50, 0
    %v117 = vsel %vm88, %v51, 0
    %v120 = vsel %vm88, %v52, 0
    %v123 = vsel %vm88, %v53, 0
    %v126 = vsel %vm88, %v54, 0
    %v129 = vsel %vm88, %v55, 0
    %v132 = vsel %vm88, %v56, 0
    %v135 = vsel %vm88, %v57, 0
    %vm137 = vcmask 1043456
    %v139 = vsel %vm137, %v62, 0
    %v142 = vsel %vm137, %v63, 0
    %v145 = vsel %vm137, %v64, 0
    %v148 = vsel %vm137, %v65, 0
    %150 = vmatprep.subr.mxu0 %v59
    %151 = vmatpush1.msra.mxu0 %v58
    %152 = vmatprep.subr.mxu0 %v142
    %153 = vmatpush1.msra.mxu0 %v139
    %154 = vmatprep.subr.mxu0 0.0
    %155 = vmatpush1.msra.mxu0 0.0
    %156 = vmatprep.subr.mxu0 0.0
    %157 = vmatpush1.msra.mxu0 0.0
    %158 = vmatprep.subr.mxu0 0.0
    %159 = vmatpush1.msra.mxu0 0.0
    %160 = vmatprep.subr.mxu0 0.0
    %161 = vmatpush1.msra.mxu0 0.0
    %162 = vmatprep.subr.mxu0 0.0
    %163 = vmatpush1.msra.mxu0 0.0
    %164 = vmatprep.subr.mxu0 0.0
    %165 = vmatpush1.msra.mxu0 0.0
    %166 = vmatprep.subr.mxu0 0.0
    %167 = vmatpush1.msra.mxu0 0.0
    %168 = vmatprep.subr.mxu0 0.0
    %169 = vmatpush1.msra.mxu0 0.0
    %170 = vmatprep.subr.mxu0 0.0
    %171 = vmatpush1.msra.mxu0 0.0
    %172 = vmatprep.subr.mxu0 0.0
    %173 = vmatpush1.msra.mxu0 0.0
    %174 = vmatprep.subr.mxu0 0.0
    %175 = vmatpush1.msra.mxu0 0.0
    %176 = vmatprep.subr.mxu0 0.0
    %177 = vmatpush1.msra.mxu0 0.0
    %178 = vmatprep.subr.mxu0 0.0
    %179 = vmatpush1.msra.mxu0 0.0
    %180 = vmatprep.subr.mxu0 0.0
    %181 = vmatpush1.msra.mxu0 0.0
    %182 = vmatprep.subr.mxu0 0.0
    %183 = vmatpush1.msra.mxu0 0.0
    %184 = vmatprep.subr.mxu0 0.0
    %185 = vmatpush1.msra.mxu0 0.0
    %186 = vmatprep.subr.mxu0 0.0
    %187 = vmatpush1.msra.mxu0 0.0
    %188 = vmatprep.subr.mxu0 0.0
    %189 = vmatpush1.msra.mxu0 0.0
    %190 = vmatprep.subr.mxu0 0.0
    %191 = vmatpush1.msra.mxu0 0.0
    %192 = vmatprep.subr.mxu0 0.0
    %193 = vmatpush1.msra.mxu0 0.0
    %194 = vmatprep.subr.mxu0 0.0
    %195 = vmatpush1.msra.mxu0 0.0
    %196 = vmatprep.subr.mxu0 0.0
    %197 = vmatpush1.msra.mxu0 0.0
    %198 = vmatprep.subr.mxu0 0.0
    %199 = vmatpush1.msra.mxu0 0.0
    %200 = vmatprep.subr.mxu0 0.0
    %201 = vmatpush1.msra.mxu0 0.0
    %202 = vmatprep.subr.mxu0 0.0
    %203 = vmatpush1.msra.mxu0 0.0
    %204 = vmatprep.subr.mxu0 0.0
    %205 = vmatpush1.msra.mxu0 0.0
    %206 = vmatprep.subr.mxu0 0.0
    %207 = vmatpush1.msra.mxu0 0.0
    %208 = vmatprep.subr.mxu0 0.0
    %209 = vmatpush1.msra.mxu0 0.0
    %210 = vmatprep.subr.mxu0 0.0
    %211 = vmatpush1.msra.mxu0 0.0
    %212 = vmatprep.subr.mxu0 0.0
    %213 = vmatpush1.msra.mxu0 0.0
    %214 = vmatprep.mubr.f32.mxu0 0.0
    %215 = vmatmul.mubr.f32.gmra.mrb[0].mxu0 %v90
    %v216 = vpop.f32.mrb[0].mxu0
    %v217 = vadd.f32 %v71, %v216
    %v218 = vpop.f32.mrb[0].mxu0
    %v219 = vadd.f32 %v75, %v218
    %220 = vmatprep.mubr.f32.mxu0 0.0
    %221 = vmatmul.mubr.f32.gmra.mrb[0].mxu0 %v93
    %v222 = vpop.f32.mrb[0].mxu0
    %v223 = vadd.f32 %v71, %v222
    %v224 = vpop.f32.mrb[0].mxu0
    %v225 = vadd.f32 %v75, %v224
    %226 = vmatprep.mubr.f32.mxu0 0.0
    %227 = vmatmul.mubr.f32.gmra.mrb[0].mxu0 %v96
    %v228 = vpop.f32.mrb[0].mxu0
    %v229 = vadd.f32 %v71, %v228
    %v230 = vpop.f32.mrb[0].mxu0
    %v231 = vadd.f32 %v75, %v230
    %232 = vmatprep.mubr.f32.mxu0 0.0
    %233 = vmatmul.mubr.f32.gmra.mrb[0].mxu0 %v99
    %v234 = vpop.f32.mrb[0].mxu0
    %v235 = vadd.f32 %v71, %v234
    %v236 = vpop.f32.mrb[0].mxu0
    %v237 = vadd.f32 %v75, %v236
    %238 = vmatprep.mubr.f32.mxu0 0.0
    %239 = vmatmul.mubr.f32.gmra.mrb[0].mxu0 %v102
    %v240 = vpop.f32.mrb[0].mxu0
    %v241 = vadd.f32 %v71, %v240
    %v242 = vpop.f32.mrb[0].mxu0
    %v243 = vadd.f32 %v75, %v242
    %244 = vmatprep.mubr.f32.mxu0 0.0
    %245 = vmatmul.mubr.f32.gmra.mrb[0].mxu0 %v105
    %v246 = vpop.f32.mrb[0].mxu0
    %v247 = vadd.f32 %v71, %v246
    %v248 = vpop.f32.mrb[0].mxu0
    %v249 = vadd.f32 %v75, %v248
    %250 = vmatprep.mubr.f32.mxu0 0.0
    %251 = vmatmul.mubr.f32.gmra.mrb[0].mxu0 %v108
    %v252 = vpop.f32.mrb[0].mxu0
    %v253 = vadd.f32 %v71, %v252
    %v254 = vpop.f32.mrb[0].mxu0
    %v255 = vadd.f32 %v75, %v254
    %256 = vmatprep.mubr.f32.mxu0 0.0
    %257 = vmatmul.mubr.f32.gmra.mrb[0].mxu0 %v111
    %v258 = vpop.f32.mrb[0].mxu0
    %v259 = vadd.f32 %v71, %v258
    %v260 = vpop.f32.mrb[0].mxu0
    %v261 = vadd.f32 %v75, %v260
    %262 = vmatprep.mubr.f32.mxu0 0.0
    %263 = vmatmul.mubr.f32.gmra.mrb[0].mxu0 %v114
    %v264 = vpop.f32.mrb[0].mxu0
    %v265 = vadd.f32 %v71, %v264
    %v266 = vpop.f32.mrb[0].mxu0
    %v267 = vadd.f32 %v75, %v266
    %268 = vmatprep.mubr.f32.mxu0 0.0
    %269 = vmatmul.mubr.f32.gmra.mrb[0].mxu0 %v117
    %v270 = vpop.f32.mrb[0].mxu0
    %v271 = vadd.f32 %v71, %v270
    %v272 = vpop.f32.mrb[0].mxu0
    %v273 = vadd.f32 %v75, %v272
    %274 = vmatprep.mubr.f32.mxu0 0.0
    %275 = vmatmul.mubr.f32.gmra.mrb[0].mxu0 %v120
    %v276 = vpop.f32.mrb[0].mxu0
    %v277 = vadd.f32 %v71, %v276
    %v278 = vpop.f32.mrb[0].mxu0
    %v279 = vadd.f32 %v75, %v278
    %280 = vmatprep.mubr.f32.mxu0 0.0
    %281 = vmatmul.mubr.f32.gmra.mrb[0].mxu0 %v123
    %v282 = vpop.f32.mrb[0].mxu0
    %v283 = vadd.f32 %v71, %v282
    %v284 = vpop.f32.mrb[0].mxu0
    %v285 = vadd.f32 %v75, %v284
    %286 = vmatprep.mubr.f32.mxu0 0.0
    %287 = vmatmul.mubr.f32.gmra.mrb[0].mxu0 %v126
    %v288 = vpop.f32.mrb[0].mxu0
    %v289 = vadd.f32 %v71, %v288
    %v290 = vpop.f32.mrb[0].mxu0
    %v291 = vadd.f32 %v75, %v290
    %292 = vmatprep.mubr.f32.mxu0 0.0
    %293 = vmatmul.mubr.f32.gmra.mrb[0].mxu0 %v129
    %v294 = vpop.f32.mrb[0].mxu0
    %v295 = vadd.f32 %v71, %v294
    %v296 = vpop.f32.mrb[0].mxu0
    %v297 = vadd.f32 %v75, %v296
    %298 = vmatprep.mubr.f32.mxu0 0.0
    %299 = vmatmul.mubr.f32.gmra.mrb[0].mxu0 %v132
    %v300 = vpop.f32.mrb[0].mxu0
    %v301 = vadd.f32 %v71, %v300
    %v302 = vpop.f32.mrb[0].mxu0
    %v303 = vadd.f32 %v75, %v302
    %304 = vmatprep.mubr.f32.mxu0 0.0
    %305 = vmatmul.mubr.f32.gmra.mrb[0].mxu0 %v135
    %v306 = vpop.f32.mrb[0].mxu0
    %v307 = vadd.f32 %v71, %v306
    %v308 = vpop.f32.mrb[0].mxu0
    %v309 = vadd.f32 %v75, %v308
    %310 = vdwg.mxu0
    %311 = vmatprep.subr.mxu0 %v61
    %312 = vmatpush1.msra.mxu0 %v60
    %313 = vmatprep.subr.mxu0 %v148
    %314 = vmatpush1.msra.mxu0 %v145
    %315 = vmatprep.subr.mxu0 0.0
    %316 = vmatpush1.msra.mxu0 0.0
    %317 = vmatprep.subr.mxu0 0.0
    %318 = vmatpush1.msra.mxu0 0.0
    %319 = vmatprep.subr.mxu0 0.0
    %320 = vmatpush1.msra.mxu0 0.0
    %321 = vmatprep.subr.mxu0 0.0
    %322 = vmatpush1.msra.mxu0 0.0
    %323 = vmatprep.subr.mxu0 0.0
    %324 = vmatpush1.msra.mxu0 0.0
    %325 = vmatprep.subr.mxu0 0.0
    %326 = vmatpush1.msra.mxu0 0.0
    %327 = vmatprep.subr.mxu0 0.0
    %328 = vmatpush1.msra.mxu0 0.0
    %329 = vmatprep.subr.mxu0 0.0
    %330 = vmatpush1.msra.mxu0 0.0
    %331 = vmatprep.subr.mxu0 0.0
    %332 = vmatpush1.msra.mxu0 0.0
    %333 = vmatprep.subr.mxu0 0.0
    %334 = vmatpush1.msra.mxu0 0.0
    %335 = vmatprep.subr.mxu0 0.0
    %336 = vmatpush1.msra.mxu0 0.0
    %337 = vmatprep.subr.mxu0 0.0
    %338 = vmatpush1.msra.mxu0 0.0
    %339 = vmatprep.subr.mxu0 0.0
    %340 = vmatpush1.msra.mxu0 0.0
    %341 = vmatprep.subr.mxu0 0.0
    %342 = vmatpush1.msra.mxu0 0.0
    %343 = vmatprep.subr.mxu0 0.0
    %344 = vmatpush1.msra.mxu0 0.0
    %345 = vmatprep.subr.mxu0 0.0
    %346 = vmatpush1.msra.mxu0 0.0
    %347 = vmatprep.subr.mxu0 0.0
    %348 = vmatpush1.msra.mxu0 0.0
    %349 = vmatprep.subr.mxu0 0.0
    %350 = vmatpush1.msra.mxu0 0.0
    %351 = vmatprep.subr.mxu0 0.0
    %352 = vmatpush1.msra.mxu0 0.0
    %353 = vmatprep.subr.mxu0 0.0
    %354 = vmatpush1.msra.mxu0 0.0
    %355 = vmatprep.subr.mxu0 0.0
    %356 = vmatpush1.msra.mxu0 0.0
    %357 = vmatprep.subr.mxu0 0.0
    %358 = vmatpush1.msra.mxu0 0.0
    %359 = vmatprep.subr.mxu0 0.0
    %360 = vmatpush1.msra.mxu0 0.0
    %361 = vmatprep.subr.mxu0 0.0
    %362 = vmatpush1.msra.mxu0 0.0
    %363 = vmatprep.subr.mxu0 0.0
    %364 = vmatpush1.msra.mxu0 0.0
    %365 = vmatprep.subr.mxu0 0.0
    %366 = vmatpush1.msra.mxu0 0.0
    %367 = vmatprep.subr.mxu0 0.0
    %368 = vmatpush1.msra.mxu0 0.0
    %369 = vmatprep.subr.mxu0 0.0
    %370 = vmatpush1.msra.mxu0 0.0
    %371 = vmatprep.subr.mxu0 0.0
    %372 = vmatpush1.msra.mxu0 0.0
    %373 = vmatprep.subr.mxu0 0.0
    %374 = vmatpush1.msra.mxu0 0.0
    %375 = vmatprep.mubr.f32.mxu0 0.0
    %376 = vmatmul.mubr.f32.gmra.mrb[0].mxu0 %v90
    %v377 = vpop.f32.mrb[0].mxu0
    %v378 = vadd.f32 %v79, %v377
    %v379 = vpop.f32.mrb[0].mxu0
    %v380 = vadd.f32 %v83, %v379
    %381 = vmatprep.mubr.f32.mxu0 0.0
    %382 = vmatmul.mubr.f32.gmra.mrb[0].mxu0 %v93
    %v383 = vpop.f32.mrb[0].mxu0
    %v384 = vadd.f32 %v79, %v383
    %v385 = vpop.f32.mrb[0].mxu0
    %v386 = vadd.f32 %v83, %v385
    %387 = vmatprep.mubr.f32.mxu0 0.0
    %388 = vmatmul.mubr.f32.gmra.mrb[0].mxu0 %v96
    %v389 = vpop.f32.mrb[0].mxu0
    %v390 = vadd.f32 %v79, %v389
    %v391 = vpop.f32.mrb[0].mxu0
    %v392 = vadd.f32 %v83, %v391
    %393 = vmatprep.mubr.f32.mxu0 0.0
    %394 = vmatmul.mubr.f32.gmra.mrb[0].mxu0 %v99
    %v395 = vpop.f32.mrb[0].mxu0
    %v396 = vadd.f32 %v79, %v395
    %v397 = vpop.f32.mrb[0].mxu0
    %v398 = vadd.f32 %v83, %v397
    %399 = vmatprep.mubr.f32.mxu0 0.0
    %400 = vmatmul.mubr.f32.gmra.mrb[0].mxu0 %v102
    %v401 = vpop.f32.mrb[0].mxu0
    %v402 = vadd.f32 %v79, %v401
    %v403 = vpop.f32.mrb[0].mxu0
    %v404 = vadd.f32 %v83, %v403
    %405 = vmatprep.mubr.f32.mxu0 0.0
    %406 = vmatmul.mubr.f32.gmra.mrb[0].mxu0 %v105
    %v407 = vpop.f32.mrb[0].mxu0
    %v408 = vadd.f32 %v79, %v407
    %v409 = vpop.f32.mrb[0].mxu0
    %v410 = vadd.f32 %v83, %v409
    %411 = vmatprep.mubr.f32.mxu0 0.0
    %412 = vmatmul.mubr.f32.gmra.mrb[0].mxu0 %v108
    %v413 = vpop.f32.mrb[0].mxu0
    %v414 = vadd.f32 %v79, %v413
    %v415 = vpop.f32.mrb[0].mxu0
    %v416 = vadd.f32 %v83, %v415
    %417 = vmatprep.mubr.f32.mxu0 0.0
    %418 = vmatmul.mubr.f32.gmra.mrb[0].mxu0 %v111
    %v419 = vpop.f32.mrb[0].mxu0
    %v420 = vadd.f32 %v79, %v419
    %v421 = vpop.f32.mrb[0].mxu0
    %v422 = vadd.f32 %v83, %v421
    %423 = vmatprep.mubr.f32.mxu0 0.0
    %424 = vmatmul.mubr.f32.gmra.mrb[0].mxu0 %v114
    %v425 = vpop.f32.mrb[0].mxu0
    %v426 = vadd.f32 %v79, %v425
    %v427 = vpop.f32.mrb[0].mxu0
    %v428 = vadd.f32 %v83, %v427
    %429 = vmatprep.mubr.f32.mxu0 0.0
    %430 = vmatmul.mubr.f32.gmra.mrb[0].mxu0 %v117
    %v431 = vpop.f32.mrb[0].mxu0
    %v432 = vadd.f32 %v79, %v431
    %v433 = vpop.f32.mrb[0].mxu0
    %v434 = vadd.f32 %v83, %v433
    %435 = vmatprep.mubr.f32.mxu0 0.0
    %436 = vmatmul.mubr.f32.gmra.mrb[0].mxu0 %v120
    %v437 = vpop.f32.mrb[0].mxu0
    %v438 = vadd.f32 %v79, %v437
    %v439 = vpop.f32.mrb[0].mxu0
    %v440 = vadd.f32 %v83, %v439
    %441 = vmatprep.mubr.f32.mxu0 0.0
    %442 = vmatmul.mubr.f32.gmra.mrb[0].mxu0 %v123
    %v443 = vpop.f32.mrb[0].mxu0
    %v444 = vadd.f32 %v79, %v443
    %v445 = vpop.f32.mrb[0].mxu0
    %v446 = vadd.f32 %v83, %v445
    %447 = vmatprep.mubr.f32.mxu0 0.0
    %448 = vmatmul.mubr.f32.gmra.mrb[0].mxu0 %v126
    %v449 = vpop.f32.mrb[0].mxu0
    %v450 = vadd.f32 %v79, %v449
    %v451 = vpop.f32.mrb[0].mxu0
    %v452 = vadd.f32 %v83, %v451
    %453 = vmatprep.mubr.f32.mxu0 0.0
    %454 = vmatmul.mubr.f32.gmra.mrb[0].mxu0 %v129
    %v455 = vpop.f32.mrb[0].mxu0
    %v456 = vadd.f32 %v79, %v455
    %v457 = vpop.f32.mrb[0].mxu0
    %v458 = vadd.f32 %v83, %v457
    %459 = vmatprep.mubr.f32.mxu0 0.0
    %460 = vmatmul.mubr.f32.gmra.mrb[0].mxu0 %v132
    %v461 = vpop.f32.mrb[0].mxu0
    %v462 = vadd.f32 %v79, %v461
    %v463 = vpop.f32.mrb[0].mxu0
    %v464 = vadd.f32 %v83, %v463
    %465 = vmatprep.mubr.f32.mxu0 0.0
    %466 = vmatmul.mubr.f32.gmra.mrb[0].mxu0 %v135
    %v467 = vpop.f32.mrb[0].mxu0
    %v468 = vadd.f32 %v79, %v467
    %v469 = vpop.f32.mrb[0].mxu0
    %v470 = vadd.f32 %v83, %v469
    %471 = vdwg.mxu0
    %472 = vst [vmem:[#allocation2] sm:$0xff] %v217
    %473 = vst [vmem:[#allocation2 + $0x8] sm:$0xff] %v219
    %474 = vst [vmem:[#allocation2 + $0x10] sm:$0xff] %v378
    %475 = vst [vmem:[#allocation2 + $0x18] sm:$0xff] %v380
    %476 = vst [vmem:[#allocation2 + $0x20] sm:$0xff] %v223
    %477 = vst [vmem:[#allocation2 + $0x28] sm:$0xff] %v225
    %478 = vst [vmem:[#allocation2 + $0x30] sm:$0xff] %v384
    %479 = vst [vmem:[#allocation2 + $0x38] sm:$0xff] %v386
    %480 = vst [vmem:[#allocation2 + $0x40] sm:$0xff] %v229
    %481 = vst [vmem:[#allocation2 + $0x48] sm:$0xff] %v231
    %482 = vst [vmem:[#allocation2 + $0x50] sm:$0xff] %v390
    %483 = vst [vmem:[#allocation2 + $0x58] sm:$0xff] %v392
    %484 = vst [vmem:[#allocation2 + $0x60] sm:$0xff] %v235
    %485 = vst [vmem:[#allocation2 + $0x68] sm:$0xff] %v237
    %486 = vst [vmem:[#allocation2 + $0x70] sm:$0xff] %v396
    %487 = vst [vmem:[#allocation2 + $0x78] sm:$0xff] %v398
    %488 = vst [vmem:[#allocation2 + $0x80] sm:$0xff] %v241
    %489 = vst [vmem:[#allocation2 + $0x88] sm:$0xff] %v243
    %490 = vst [vmem:[#allocation2 + $0x90] sm:$0xff] %v402
    %491 = vst [vmem:[#allocation2 + $0x98] sm:$0xff] %v404
    %492 = vst [vmem:[#allocation2 + $0xa0] sm:$0xff] %v247
    %493 = vst [vmem:[#allocation2 + $0xa8] sm:$0xff] %v249
    %494 = vst [vmem:[#allocation2 + $0xb0] sm:$0xff] %v408
    %495 = vst [vmem:[#allocation2 + $0xb8] sm:$0xff] %v410
    %496 = vst [vmem:[#allocation2 + $0xc0] sm:$0xff] %v253
    %497 = vst [vmem:[#allocation2 + $0xc8] sm:$0xff] %v255
    %498 = vst [vmem:[#allocation2 + $0xd0] sm:$0xff] %v414
    %499 = vst [vmem:[#allocation2 + $0xd8] sm:$0xff] %v416
    %500 = vst [vmem:[#allocation2 + $0xe0] sm:$0xff] %v259
    %501 = vst [vmem:[#allocation2 + $0xe8] sm:$0xff] %v261
    %502 = vst [vmem:[#allocation2 + $0xf0] sm:$0xff] %v420
    %503 = vst [vmem:[#allocation2 + $0xf8] sm:$0xff] %v422
    %504 = vst [vmem:[#allocation2 + $0x100] sm:$0xff] %v265
    %505 = vst [vmem:[#allocation2 + $0x108] sm:$0xff] %v267
    %506 = vst [vmem:[#allocation2 + $0x110] sm:$0xff] %v426
    %507 = vst [vmem:[#allocation2 + $0x118] sm:$0xff] %v428
    %508 = vst [vmem:[#allocation2 + $0x120] sm:$0xff] %v271
    %509 = vst [vmem:[#allocation2 + $0x128] sm:$0xff] %v273
    %510 = vst [vmem:[#allocation2 + $0x130] sm:$0xff] %v432
    %511 = vst [vmem:[#allocation2 + $0x138] sm:$0xff] %v434
    %512 = vst [vmem:[#allocation2 + $0x140] sm:$0xff] %v277
    %513 = vst [vmem:[#allocation2 + $0x148] sm:$0xff] %v279
    %514 = vst [vmem:[#allocation2 + $0x150] sm:$0xff] %v438
    %515 = vst [vmem:[#allocation2 + $0x158] sm:$0xff] %v440
    %516 = vst [vmem:[#allocation2 + $0x160] sm:$0xff] %v283
    %517 = vst [vmem:[#allocation2 + $0x168] sm:$0xff] %v285
    %518 = vst [vmem:[#allocation2 + $0x170] sm:$0xff] %v444
    %519 = vst [vmem:[#allocation2 + $0x178] sm:$0xff] %v446
    %520 = vst [vmem:[#allocation2 + $0x180] sm:$0xff] %v289
    %521 = vst [vmem:[#allocation2 + $0x188] sm:$0xff] %v291
    %522 = vst [vmem:[#allocation2 + $0x190] sm:$0xff] %v450
    %523 = vst [vmem:[#allocation2 + $0x198] sm:$0xff] %v452
    %524 = vst [vmem:[#allocation2 + $0x1a0] sm:$0xff] %v295
    %525 = vst [vmem:[#allocation2 + $0x1a8] sm:$0xff] %v297
    %526 = vst [vmem:[#allocation2 + $0x1b0] sm:$0xff] %v456
    %527 = vst [vmem:[#allocation2 + $0x1b8] sm:$0xff] %v458
    %528 = vst [vmem:[#allocation2 + $0x1c0] sm:$0xff] %v301
    %529 = vst [vmem:[#allocation2 + $0x1c8] sm:$0xff] %v303
    %530 = vst [vmem:[#allocation2 + $0x1d0] sm:$0xff] %v462
    %531 = vst [vmem:[#allocation2 + $0x1d8] sm:$0xff] %v464
    %532 = vst [vmem:[#allocation2 + $0x1e0] sm:$0xff] %v307
    %533 = vst [vmem:[#allocation2 + $0x1e8] sm:$0xff] %v309
    %534 = vst [vmem:[#allocation2 + $0x1f0] sm:$0xff] %v468
    %535 = vst [vmem:[#allocation2 + $0x1f8] sm:$0xff] %v470
    %s536 = smul.u32 0, 4
    %s537 = smul.addr %s536, 8
    %s538 = scalar_lea.vmem [#allocation2], %s537
    %v539 = vld [vmem:[%s538] sm:$0xff]
    %v540 = vld [vmem:[%s538 + $0x8] sm:$0xff]
    %v541 = vld [vmem:[%s538 + $0x10] sm:$0xff]
    %v542 = vld [vmem:[%s538 + $0x18] sm:$0xff]
    %v543 = vld [vmem:[#allocation4] sm:$0xff]
    %v544 = vld [vmem:[#allocation4 + $0x8] sm:$0xff]
    %v545 = vld [vmem:[#allocation4 + $0x10] sm:$0xff]
    %v546 = vld [vmem:[#allocation4 + $0x18] sm:$0xff]
    %v547 = vld [vmem:[#allocation4 + $0x20] sm:$0xff]
    %v548 = vld [vmem:[#allocation4 + $0x28] sm:$0xff]
    %v549 = vld [vmem:[#allocation4 + $0x30] sm:$0xff]
    %v550 = vld [vmem:[#allocation4 + $0x38] sm:$0xff]
    %v551 = vld [vmem:[#allocation4 + $0x40] sm:$0xff]
    %v552 = vld [vmem:[#allocation4 + $0x48] sm:$0xff]
    %v553 = vld [vmem:[#allocation4 + $0x50] sm:$0xff]
    %v554 = vld [vmem:[#allocation4 + $0x58] sm:$0xff]
    %v555 = vld [vmem:[#allocation4 + $0x60] sm:$0xff]
    %v556 = vld [vmem:[#allocation4 + $0x68] sm:$0xff]
    %v557 = vld [vmem:[#allocation4 + $0x70] sm:$0xff]
    %v558 = vld [vmem:[#allocation4 + $0x78] sm:$0xff]
    %v559 = vld [vmem:[#allocation4 + $0x80] sm:$0xff]
    %v560 = vld [vmem:[#allocation4 + $0x88] sm:$0xff]
    %v561 = vld [vmem:[#allocation4 + $0x90] sm:$0xff]
    %v562 = vld [vmem:[#allocation4 + $0x98] sm:$0xff]
    %v563 = vld [vmem:[#allocation4 + $0xa0] sm:$0xff]
    %v564 = vld [vmem:[#allocation4 + $0xa8] sm:$0xff]
    %v565 = vld [vmem:[#allocation4 + $0xb0] sm:$0xff]
    %v566 = vld [vmem:[#allocation4 + $0xb8] sm:$0xff]
    %v567 = vld [vmem:[#allocation4 + $0xc0] sm:$0xff]
    %v568 = vld [vmem:[#allocation4 + $0xc8] sm:$0xff]
    %v569 = vld [vmem:[#allocation4 + $0xd0] sm:$0xff]
    %v570 = vld [vmem:[#allocation4 + $0xd8] sm:$0xff]
    %v571 = vld [vmem:[#allocation4 + $0xe0] sm:$0xff]
    %v572 = vld [vmem:[#allocation4 + $0xe8] sm:$0xff]
    %v573 = vld [vmem:[#allocation4 + $0xf0] sm:$0xff]
    %v574 = vld [vmem:[#allocation4 + $0xf8] sm:$0xff]
    %v575 = vld [vmem:[#allocation4 + $0x100] sm:$0xff]
    %v576 = vld [vmem:[#allocation4 + $0x108] sm:$0xff]
    %v577 = vld [vmem:[#allocation4 + $0x110] sm:$0xff]
    %v578 = vld [vmem:[#allocation4 + $0x118] sm:$0xff]
    %v579 = vld [vmem:[#allocation4 + $0x120] sm:$0xff]
    %v580 = vld [vmem:[#allocation4 + $0x128] sm:$0xff]
    %v581 = vld [vmem:[#allocation4 + $0x130] sm:$0xff]
    %v582 = vld [vmem:[#allocation4 + $0x138] sm:$0xff]
    %v583 = vld [vmem:[#allocation4 + $0x140] sm:$0xff]
    %v584 = vld [vmem:[#allocation4 + $0x148] sm:$0xff]
    %v585 = vld [vmem:[#allocation4 + $0x150] sm:$0xff]
    %v586 = vld [vmem:[#allocation4 + $0x158] sm:$0xff]
    %v587 = vld [vmem:[#allocation4 + $0x160] sm:$0xff]
    %v588 = vld [vmem:[#allocation4 + $0x168] sm:$0xff]
    %v589 = vld [vmem:[#allocation4 + $0x170] sm:$0xff]
    %v590 = vld [vmem:[#allocation4 + $0x178] sm:$0xff]
    %v591 = vld [vmem:[#allocation4 + $0x180] sm:$0xff]
    %v592 = vld [vmem:[#allocation4 + $0x188] sm:$0xff]
    %v593 = vld [vmem:[#allocation4 + $0x190] sm:$0xff]
    %v594 = vld [vmem:[#allocation4 + $0x198] sm:$0xff]
    %v595 = vld [vmem:[#allocation4 + $0x1a0] sm:$0xff]
    %v596 = vld [vmem:[#allocation4 + $0x1a8] sm:$0xff]
    %v597 = vld [vmem:[#allocation4 + $0x1b0] sm:$0xff]
    %v598 = vld [vmem:[#allocation4 + $0x1b8] sm:$0xff]
    %v599 = vld [vmem:[#allocation4 + $0x1c0] sm:$0xff]
    %v600 = vld [vmem:[#allocation4 + $0x1c8] sm:$0xff]
    %v601 = vld [vmem:[#allocation4 + $0x1d0] sm:$0xff]
    %v602 = vld [vmem:[#allocation4 + $0x1d8] sm:$0xff]
    %v603 = vld [vmem:[#allocation4 + $0x1e0] sm:$0xff]
    %v604 = vld [vmem:[#allocation4 + $0x1e8] sm:$0xff]
    %v605 = vld [vmem:[#allocation4 + $0x1f0] sm:$0xff]
    %v606 = vld [vmem:[#allocation4 + $0x1f8] sm:$0xff]
    %607 = vmatprep.subr.mxu0 %v544
    %608 = vmatpush1.msra.mxu0 %v543
    %609 = vmatprep.subr.mxu0 %v548
    %610 = vmatpush1.msra.mxu0 %v547
    %611 = vmatprep.subr.mxu0 %v552
    %612 = vmatpush1.msra.mxu0 %v551
    %613 = vmatprep.subr.mxu0 %v556
    %614 = vmatpush1.msra.mxu0 %v555
    %615 = vmatprep.subr.mxu0 %v560
    %616 = vmatpush1.msra.mxu0 %v559
    %617 = vmatprep.subr.mxu0 %v564
    %618 = vmatpush1.msra.mxu0 %v563
    %619 = vmatprep.subr.mxu0 %v568
    %620 = vmatpush1.msra.mxu0 %v567
    %621 = vmatprep.subr.mxu0 %v572
    %622 = vmatpush1.msra.mxu0 %v571
    %623 = vmatprep.subr.mxu0 %v576
    %624 = vmatpush1.msra.mxu0 %v575
    %625 = vmatprep.subr.mxu0 %v580
    %626 = vmatpush1.msra.mxu0 %v579
    %627 = vmatprep.subr.mxu0 %v584
    %628 = vmatpush1.msra.mxu0 %v583
    %629 = vmatprep.subr.mxu0 %v588
    %630 = vmatpush1.msra.mxu0 %v587
    %631 = vmatprep.subr.mxu0 %v592
    %632 = vmatpush1.msra.mxu0 %v591
    %633 = vmatprep.subr.mxu0 %v596
    %634 = vmatpush1.msra.mxu0 %v595
    %635 = vmatprep.subr.mxu0 %v600
    %636 = vmatpush1.msra.mxu0 %v599
    %637 = vmatprep.subr.mxu0 %v604
    %638 = vmatpush1.msra.mxu0 %v603
    %639 = vmatprep.subr.mxu0 0.0
    %640 = vmatpush1.msra.mxu0 0.0
    %641 = vmatprep.subr.mxu0 0.0
    %642 = vmatpush1.msra.mxu0 0.0
    %643 = vmatprep.subr.mxu0 0.0
    %644 = vmatpush1.msra.mxu0 0.0
    %645 = vmatprep.subr.mxu0 0.0
    %646 = vmatpush1.msra.mxu0 0.0
    %647 = vmatprep.subr.mxu0 0.0
    %648 = vmatpush1.msra.mxu0 0.0
    %649 = vmatprep.subr.mxu0 0.0
    %650 = vmatpush1.msra.mxu0 0.0
    %651 = vmatprep.subr.mxu0 0.0
    %652 = vmatpush1.msra.mxu0 0.0
    %653 = vmatprep.subr.mxu0 0.0
    %654 = vmatpush1.msra.mxu0 0.0
    %655 = vmatprep.subr.mxu0 0.0
    %656 = vmatpush1.msra.mxu0 0.0
    %657 = vmatprep.subr.mxu0 0.0
    %658 = vmatpush1.msra.mxu0 0.0
    %659 = vmatprep.subr.mxu0 0.0
    %660 = vmatpush1.msra.mxu0 0.0
    %661 = vmatprep.subr.mxu0 0.0
    %662 = vmatpush1.msra.mxu0 0.0
    %663 = vmatprep.subr.mxu0 0.0
    %664 = vmatpush1.msra.mxu0 0.0
    %665 = vmatprep.subr.mxu0 0.0
    %666 = vmatpush1.msra.mxu0 0.0
    %667 = vmatprep.subr.mxu0 0.0
    %668 = vmatpush1.msra.mxu0 0.0
    %669 = vmatprep.subr.mxu0 0.0
    %670 = vmatpush1.msra.mxu0 0.0
    %671 = vmatprep.mubr.f32.mxu0 0.0
    %672 = vmatmul.mubr.f32.gmra.mrb[0].mxu0 0.0
    %v673 = vpop.f32.mrb[0].mxu0
    %v674 = vadd.f32 0.0, %v673
    %v675 = vpop.f32.mrb[0].mxu0
    %v676 = vadd.f32 0.0, %v675
    %677 = vdwg.mxu0
    %678 = vmatprep.subr.mxu0 %v546
    %679 = vmatpush1.msra.mxu0 %v545
    %680 = vmatprep.subr.mxu0 %v550
    %681 = vmatpush1.msra.mxu0 %v549
    %682 = vmatprep.subr.mxu0 %v554
    %683 = vmatpush1.msra.mxu0 %v553
    %684 = vmatprep.subr.mxu0 %v558
    %685 = vmatpush1.msra.mxu0 %v557
    %686 = vmatprep.subr.mxu0 %v562
    %687 = vmatpush1.msra.mxu0 %v561
    %688 = vmatprep.subr.mxu0 %v566
    %689 = vmatpush1.msra.mxu0 %v565
    %690 = vmatprep.subr.mxu0 %v570
    %691 = vmatpush1.msra.mxu0 %v569
    %692 = vmatprep.subr.mxu0 %v574
    %693 = vmatpush1.msra.mxu0 %v573
    %694 = vmatprep.subr.mxu0 %v578
    %695 = vmatpush1.msra.mxu0 %v577
    %696 = vmatprep.subr.mxu0 %v582
    %697 = vmatpush1.msra.mxu0 %v581
    %698 = vmatprep.subr.mxu0 %v586
    %699 = vmatpush1.msra.mxu0 %v585
    %700 = vmatprep.subr.mxu0 %v590
    %701 = vmatpush1.msra.mxu0 %v589
    %702 = vmatprep.subr.mxu0 %v594
    %703 = vmatpush1.msra.mxu0 %v593
    %704 = vmatprep.subr.mxu0 %v598
    %705 = vmatpush1.msra.mxu0 %v597
    %706 = vmatprep.subr.mxu0 %v602
    %707 = vmatpush1.msra.mxu0 %v601
    %708 = vmatprep.subr.mxu0 %v606
    %709 = vmatpush1.msra.mxu0 %v605
    %710 = vmatprep.subr.mxu0 0.0
    %711 = vmatpush1.msra.mxu0 0.0
    %712 = vmatprep.subr.mxu0 0.0
    %713 = vmatpush1.msra.mxu0 0.0
    %714 = vmatprep.subr.mxu0 0.0
    %715 = vmatpush1.msra.mxu0 0.0
    %716 = vmatprep.subr.mxu0 0.0
    %717 = vmatpush1.msra.mxu0 0.0
    %718 = vmatprep.subr.mxu0 0.0
    %719 = vmatpush1.msra.mxu0 0.0
    %720 = vmatprep.subr.mxu0 0.0
    %721 = vmatpush1.msra.mxu0 0.0
    %722 = vmatprep.subr.mxu0 0.0
    %723 = vmatpush1.msra.mxu0 0.0
    %724 = vmatprep.subr.mxu0 0.0
    %725 = vmatpush1.msra.mxu0 0.0
    %726 = vmatprep.subr.mxu0 0.0
    %727 = vmatpush1.msra.mxu0 0.0
    %728 = vmatprep.subr.mxu0 0.0
    %729 = vmatpush1.msra.mxu0 0.0
    %730 = vmatprep.subr.mxu0 0.0
    %731 = vmatpush1.msra.mxu0 0.0
    %732 = vmatprep.subr.mxu0 0.0
    %733 = vmatpush1.msra.mxu0 0.0
    %734 = vmatprep.subr.mxu0 0.0
    %735 = vmatpush1.msra.mxu0 0.0
    %736 = vmatprep.subr.mxu0 0.0
    %737 = vmatpush1.msra.mxu0 0.0
    %738 = vmatprep.subr.mxu0 0.0
    %739 = vmatpush1.msra.mxu0 0.0
    %740 = vmatprep.subr.mxu0 0.0
    %741 = vmatpush1.msra.mxu0 0.0
    %742 = vmatprep.mubr.f32.mxu0 0.0
    %743 = vmatmul.mubr.f32.gmra.mrb[0].mxu0 0.0
    %v744 = vpop.f32.mrb[0].mxu0
    %v745 = vadd.f32 0.0, %v744
    %v746 = vpop.f32.mrb[0].mxu0
    %v747 = vadd.f32 0.0, %v746
    %748 = vdwg.mxu0
    %v749 = vadd.f32 %v539, %v674
    %v750 = vadd.f32 %v540, %v676
    %v751 = vadd.f32 %v541, %v745
    %v752 = vadd.f32 %v542, %v747
    %v753 = vxor.u32 %v749, 2147483648
    %v754 = vmul.f32 %v753, 1.442695
    %v755 = vpow.pop %v754
    %v756 = vadd.f32 %v755, 1.0
    %v757 = vrcp.pop %v756
    %v758 = vmul.f32 1.0, %v757
    %v759 = vxor.u32 %v750, 2147483648
    %v760 = vmul.f32 %v759, 1.442695
    %v761 = vpow.pop %v760
    %v762 = vadd.f32 %v761, 1.0
    %v763 = vrcp.pop %v762
    %v764 = vmul.f32 1.0, %v763
    %v765 = vtanh.pop %v751
    %v766 = vxor.u32 %v752, 2147483648
    %v767 = vmul.f32 %v766, 1.442695
    %v768 = vpow.pop %v767
    %v769 = vadd.f32 %v768, 1.0
    %v770 = vrcp.pop %v769
    %v771 = vmul.f32 1.0, %v770
    %v772 = vmul.f32 %v764, 0.0
    %v773 = vmul.f32 %v758, %v765
    %v774 = vadd.f32 %v772, %v773
    %v775 = vtanh.pop %v774
    %v776 = vmul.f32 %v771, %v775
    %s777 = smul.u32 1, 4
    %s778 = smul.addr %s777, 8
    %s779 = scalar_lea.vmem [#allocation2], %s778
    %v780 = vld [vmem:[%s779] sm:$0xff]
    %v781 = vld [vmem:[%s779 + $0x8] sm:$0xff]
    %v782 = vld [vmem:[%s779 + $0x10] sm:$0xff]
    %v783 = vld [vmem:[%s779 + $0x18] sm:$0xff]
    %784 = vmatprep.subr.mxu0 %v544
    %785 = vmatpush1.msra.mxu0 %v543
    %786 = vmatprep.subr.mxu0 %v548
    %787 = vmatpush1.msra.mxu0 %v547
    %788 = vmatprep.subr.mxu0 %v552
    %789 = vmatpush1.msra.mxu0 %v551
    %790 = vmatprep.subr.mxu0 %v556
    %791 = vmatpush1.msra.mxu0 %v555
    %792 = vmatprep.subr.mxu0 %v560
    %793 = vmatpush1.msra.mxu0 %v559
    %794 = vmatprep.subr.mxu0 %v564
    %795 = vmatpush1.msra.mxu0 %v563
    %796 = vmatprep.subr.mxu0 %v568
    %797 = vmatpush1.msra.mxu0 %v567
    %798 = vmatprep.subr.mxu0 %v572
    %799 = vmatpush1.msra.mxu0 %v571
    %800 = vmatprep.subr.mxu0 %v576
    %801 = vmatpush1.msra.mxu0 %v575
    %802 = vmatprep.subr.mxu0 %v580
    %803 = vmatpush1.msra.mxu0 %v579
    %804 = vmatprep.subr.mxu0 %v584
    %805 = vmatpush1.msra.mxu0 %v583
    %806 = vmatprep.subr.mxu0 %v588
    %807 = vmatpush1.msra.mxu0 %v587
    %808 = vmatprep.subr.mxu0 %v592
    %809 = vmatpush1.msra.mxu0 %v591
    %810 = vmatprep.subr.mxu0 %v596
    %811 = vmatpush1.msra.mxu0 %v595
    %812 = vmatprep.subr.mxu0 %v600
    %813 = vmatpush1.msra.mxu0 %v599
    %814 = vmatprep.subr.mxu0 %v604
    %815 = vmatpush1.msra.mxu0 %v603
    %816 = vmatprep.subr.mxu0 0.0
    %817 = vmatpush1.msra.mxu0 0.0
    %818 = vmatprep.subr.mxu0 0.0
    %819 = vmatpush1.msra.mxu0 0.0
    %820 = vmatprep.subr.mxu0 0.0
    %821 = vmatpush1.msra.mxu0 0.0
    %822 = vmatprep.subr.mxu0 0.0
    %823 = vmatpush1.msra.mxu0 0.0
    %824 = vmatprep.subr.mxu0 0.0
    %825 = vmatpush1.msra.mxu0 0.0
    %826 = vmatprep.subr.mxu0 0.0
    %827 = vmatpush1.msra.mxu0 0.0
    %828 = vmatprep.subr.mxu0 0.0
    %829 = vmatpush1.msra.mxu0 0.0
    %830 = vmatprep.subr.mxu0 0.0
    %831 = vmatpush1.msra.mxu0 0.0
    %832 = vmatprep.subr.mxu0 0.0
    %833 = vmatpush1.msra.mxu0 0.0
    %834 = vmatprep.subr.mxu0 0.0
    %835 = vmatpush1.msra.mxu0 0.0
    %836 = vmatprep.subr.mxu0 0.0
    %837 = vmatpush1.msra.mxu0 0.0
    %838 = vmatprep.subr.mxu0 0.0
    %839 = vmatpush1.msra.mxu0 0.0
    %840 = vmatprep.subr.mxu0 0.0
    %841 = vmatpush1.msra.mxu0 0.0
    %842 = vmatprep.subr.mxu0 0.0
    %843 = vmatpush1.msra.mxu0 0.0
    %844 = vmatprep.subr.mxu0 0.0
    %845 = vmatpush1.msra.mxu0 0.0
    %846 = vmatprep.subr.mxu0 0.0
    %847 = vmatpush1.msra.mxu0 0.0
    %848 = vmatprep.mubr.f32.mxu0 0.0
    %849 = vmatmul.mubr.f32.gmra.mrb[0].mxu0 %v776
    %v850 = vpop.f32.mrb[0].mxu0
    %v851 = vadd.f32 0.0, %v850
    %v852 = vpop.f32.mrb[0].mxu0
    %v853 = vadd.f32 0.0, %v852
    %854 = vdwg.mxu0
    %855 = vmatprep.subr.mxu0 %v546
    %856 = vmatpush1.msra.mxu0 %v545
    %857 = vmatprep.subr.mxu0 %v550
    %858 = vmatpush1.msra.mxu0 %v549
    %859 = vmatprep.subr.mxu0 %v554
    %860 = vmatpush1.msra.mxu0 %v553
    %861 = vmatprep.subr.mxu0 %v558
    %862 = vmatpush1.msra.mxu0 %v557
    %863 = vmatprep.subr.mxu0 %v562
    %864 = vmatpush1.msra.mxu0 %v561
    %865 = vmatprep.subr.mxu0 %v566
    %866 = vmatpush1.msra.mxu0 %v565
    %867 = vmatprep.subr.mxu0 %v570
    %868 = vmatpush1.msra.mxu0 %v569
    %869 = vmatprep.subr.mxu0 %v574
    %870 = vmatpush1.msra.mxu0 %v573
    %871 = vmatprep.subr.mxu0 %v578
    %872 = vmatpush1.msra.mxu0 %v577
    %873 = vmatprep.subr.mxu0 %v582
    %874 = vmatpush1.msra.mxu0 %v581
    %875 = vmatprep.subr.mxu0 %v586
    %876 = vmatpush1.msra.mxu0 %v585
    %877 = vmatprep.subr.mxu0 %v590
    %878 = vmatpush1.msra.mxu0 %v589
    %879 = vmatprep.subr.mxu0 %v594
    %880 = vmatpush1.msra.mxu0 %v593
    %881 = vmatprep.subr.mxu0 %v598
    %882 = vmatpush1.msra.mxu0 %v597
    %883 = vmatprep.subr.mxu0 %v602
    %884 = vmatpush1.msra.mxu0 %v601
    %885 = vmatprep.subr.mxu0 %v606
    %886 = vmatpush1.msra.mxu0 %v605
    %887 = vmatprep.subr.mxu0 0.0
    %888 = vmatpush1.msra.mxu0 0.0
    %889 = vmatprep.subr.mxu0 0.0
    %890 = vmatpush1.msra.mxu0 0.0
    %891 = vmatprep.subr.mxu0 0.0
    %892 = vmatpush1.msra.mxu0 0.0
    %893 = vmatprep.subr.mxu0 0.0
    %894 = vmatpush1.msra.mxu0 0.0
    %895 = vmatprep.subr.mxu0 0.0
    %896 = vmatpush1.msra.mxu0 0.0
    %897 = vmatprep.subr.mxu0 0.0
    %898 = vmatpush1.msra.mxu0 0.0
    %899 = vmatprep.subr.mxu0 0.0
    %900 = vmatpush1.msra.mxu0 0.0
    %901 = vmatprep.subr.mxu0 0.0
    %902 = vmatpush1.msra.mxu0 0.0
    %903 = vmatprep.subr.mxu0 0.0
    %904 = vmatpush1.msra.mxu0 0.0
    %905 = vmatprep.subr.mxu0 0.0
    %906 = vmatpush1.msra.mxu0 0.0
    %907 = vmatprep.subr.mxu0 0.0
    %908 = vmatpush1.msra.mxu0 0.0
    %909 = vmatprep.subr.mxu0 0.0
    %910 = vmatpush1.msra.mxu0 0.0
    %911 = vmatprep.subr.mxu0 0.0
    %912 = vmatpush1.msra.mxu0 0.0
    %913 = vmatprep.subr.mxu0 0.0
    %914 = vmatpush1.msra.mxu0 0.0
    %915 = vmatprep.subr.mxu0 0.0
    %916 = vmatpush1.msra.mxu0 0.0
    %917 = vmatprep.subr.mxu0 0.0
    %918 = vmatpush1.msra.mxu0 0.0
    %919 = vmatprep.mubr.f32.mxu0 0.0
    %920 = vmatmul.mubr.f32.gmra.mrb[0].mxu0 %v776
    %v921 = vpop.f32.mrb[0].mxu0
    %v922 = vadd.f32 0.0, %v921
    %v923 = vpop.f32.mrb[0].mxu0
    %v924 = vadd.f32 0.0, %v923
    %925 = vdwg.mxu0
    %v926 = vadd.f32 %v780, %v851
    %v927 = vadd.f32 %v781, %v853
    %v928 = vadd.f32 %v782, %v922
    %v929 = vadd.f32 %v783, %v924
    %v930 = vxor.u32 %v926, 2147483648
    %v931 = vmul.f32 %v930, 1.442695
    %v932 = vpow.pop %v931
    %v933 = vadd.f32 %v932, 1.0
    %v934 = vrcp.pop %v933
    %v935 = vmul.f32 1.0, %v934
    %v936 = vxor.u32 %v927, 2147483648
    %v937 = vmul.f32 %v936, 1.442695
    %v938 = vpow.pop %v937
    %v939 = vadd.f32 %v938, 1.0
    %v940 = vrcp.pop %v939
    %v941 = vmul.f32 1.0, %v940
    %v942 = vtanh.pop %v928
    %v943 = vxor.u32 %v929, 2147483648
    %v944 = vmul.f32 %v943, 1.442695
    %v945 = vpow.pop %v944
    %v946 = vadd.f32 %v945, 1.0
    %v947 = vrcp.pop %v946
    %v948 = vmul.f32 1.0, %v947
    %v949 = vmul.f32 %v941, %v774
    %v950 = vmul.f32 %v935, %v942
    %v951 = vadd.f32 %v949, %v950
    %v952 = vtanh.pop %v951
    %v953 = vmul.f32 %v948, %v952
    %s954 = smul.u32 2, 4
    %s955 = smul.addr %s954, 8
    %s956 = scalar_lea.vmem [#allocation2], %s955
    %v957 = vld [vmem:[%s956] sm:$0xff]
    %v958 = vld [vmem:[%s956 + $0x8] sm:$0xff]
    %v959 = vld [vmem:[%s956 + $0x10] sm:$0xff]
    %v960 = vld [vmem:[%s956 + $0x18] sm:$0xff]
    %961 = vmatprep.subr.mxu0 %v544
    %962 = vmatpush1.msra.mxu0 %v543
    %963 = vmatprep.subr.mxu0 %v548
    %964 = vmatpush1.msra.mxu0 %v547
    %965 = vmatprep.subr.mxu0 %v552
    %966 = vmatpush1.msra.mxu0 %v551
    %967 = vmatprep.subr.mxu0 %v556
    %968 = vmatpush1.msra.mxu0 %v555
    %969 = vmatprep.subr.mxu0 %v560
    %970 = vmatpush1.msra.mxu0 %v559
    %971 = vmatprep.subr.mxu0 %v564
    %972 = vmatpush1.msra.mxu0 %v563
    %973 = vmatprep.subr.mxu0 %v568
    %974 = vmatpush1.msra.mxu0 %v567
    %975 = vmatprep.subr.mxu0 %v572
    %976 = vmatpush1.msra.mxu0 %v571
    %977 = vmatprep.subr.mxu0 %v576
    %978 = vmatpush1.msra.mxu0 %v575
    %979 = vmatprep.subr.mxu0 %v580
    %980 = vmatpush1.msra.mxu0 %v579
    %981 = vmatprep.subr.mxu0 %v584
    %982 = vmatpush1.msra.mxu0 %v583
    %983 = vmatprep.subr.mxu0 %v588
    %984 = vmatpush1.msra.mxu0 %v587
    %985 = vmatprep.subr.mxu0 %v592
    %986 = vmatpush1.msra.mxu0 %v591
    %987 = vmatprep.subr.mxu0 %v596
    %988 = vmatpush1.msra.mxu0 %v595
    %989 = vmatprep.subr.mxu0 %v600
    %990 = vmatpush1.msra.mxu0 %v599
    %991 = vmatprep.subr.mxu0 %v604
    %992 = vmatpush1.msra.mxu0 %v603
    %993 = vmatprep.subr.mxu0 0.0
    %994 = vmatpush1.msra.mxu0 0.0
    %995 = vmatprep.subr.mxu0 0.0
    %996 = vmatpush1.msra.mxu0 0.0
    %997 = vmatprep.subr.mxu0 0.0
    %998 = vmatpush1.msra.mxu0 0.0
    %999 = vmatprep.subr.mxu0 0.0
    %1000 = vmatpush1.msra.mxu0 0.0
    %1001 = vmatprep.subr.mxu0 0.0
    %1002 = vmatpush1.msra.mxu0 0.0
    %1003 = vmatprep.subr.mxu0 0.0
    %1004 = vmatpush1.msra.mxu0 0.0
    %1005 = vmatprep.subr.mxu0 0.0
    %1006 = vmatpush1.msra.mxu0 0.0
    %1007 = vmatprep.subr.mxu0 0.0
    %1008 = vmatpush1.msra.mxu0 0.0
    %1009 = vmatprep.subr.mxu0 0.0
    %1010 = vmatpush1.msra.mxu0 0.0
    %1011 = vmatprep.subr.mxu0 0.0
    %1012 = vmatpush1.msra.mxu0 0.0
    %1013 = vmatprep.subr.mxu0 0.0
    %1014 = vmatpush1.msra.mxu0 0.0
    %1015 = vmatprep.subr.mxu0 0.0
    %1016 = vmatpush1.msra.mxu0 0.0
    %1017 = vmatprep.subr.mxu0 0.0
    %1018 = vmatpush1.msra.mxu0 0.0
    %1019 = vmatprep.subr.mxu0 0.0
    %1020 = vmatpush1.msra.mxu0 0.0
    %1021 = vmatprep.subr.mxu0 0.0
    %1022 = vmatpush1.msra.mxu0 0.0
    %1023 = vmatprep.subr.mxu0 0.0
    %1024 = vmatpush1.msra.mxu0 0.0
    %1025 = vmatprep.mubr.f32.mxu0 0.0
    %1026 = vmatmul.mubr.f32.gmra.mrb[0].mxu0 %v953
    %v1027 = vpop.f32.mrb[0].mxu0
    %v1028 = vadd.f32 0.0, %v1027
    %v1029 = vpop.f32.mrb[0].mxu0
    %v1030 = vadd.f32 0.0, %v1029
    %1031 = vdwg.mxu0
    %1032 = vmatprep.subr.mxu0 %v546
    %1033 = vmatpush1.msra.mxu0 %v545
    %1034 = vmatprep.subr.mxu0 %v550
    %1035 = vmatpush1.msra.mxu0 %v549
    %1036 = vmatprep.subr.mxu0 %v554
    %1037 = vmatpush1.msra.mxu0 %v553
    %1038 = vmatprep.subr.mxu0 %v558
    %1039 = vmatpush1.msra.mxu0 %v557
    %1040 = vmatprep.subr.mxu0 %v562
    %1041 = vmatpush1.msra.mxu0 %v561
    %1042 = vmatprep.subr.mxu0 %v566
    %1043 = vmatpush1.msra.mxu0 %v565
    %1044 = vmatprep.subr.mxu0 %v570
    %1045 = vmatpush1.msra.mxu0 %v569
    %1046 = vmatprep.subr.mxu0 %v574
    %1047 = vmatpush1.msra.mxu0 %v573
    %1048 = vmatprep.subr.mxu0 %v578
    %1049 = vmatpush1.msra.mxu0 %v577
    %1050 = vmatprep.subr.mxu0 %v582
    %1051 = vmatpush1.msra.mxu0 %v581
    %1052 = vmatprep.subr.mxu0 %v586
    %1053 = vmatpush1.msra.mxu0 %v585
    %1054 = vmatprep.subr.mxu0 %v590
    %1055 = vmatpush1.msra.mxu0 %v589
    %1056 = vmatprep.subr.mxu0 %v594
    %1057 = vmatpush1.msra.mxu0 %v593
    %1058 = vmatprep.subr.mxu0 %v598
    %1059 = vmatpush1.msra.mxu0 %v597
    %1060 = vmatprep.subr.mxu0 %v602
    %1061 = vmatpush1.msra.mxu0 %v601
    %1062 = vmatprep.subr.mxu0 %v606
    %1063 = vmatpush1.msra.mxu0 %v605
    %1064 = vmatprep.subr.mxu0 0.0
    %1065 = vmatpush1.msra.mxu0 0.0
    %1066 = vmatprep.subr.mxu0 0.0
    %1067 = vmatpush1.msra.mxu0 0.0
    %1068 = vmatprep.subr.mxu0 0.0
    %1069 = vmatpush1.msra.mxu0 0.0
    %1070 = vmatprep.subr.mxu0 0.0
    %1071 = vmatpush1.msra.mxu0 0.0
    %1072 = vmatprep.subr.mxu0 0.0
    %1073 = vmatpush1.msra.mxu0 0.0
    %1074 = vmatprep.subr.mxu0 0.0
    %1075 = vmatpush1.msra.mxu0 0.0
    %1076 = vmatprep.subr.mxu0 0.0
    %1077 = vmatpush1.msra.mxu0 0.0
    %1078 = vmatprep.subr.mxu0 0.0
    %1079 = vmatpush1.msra.mxu0 0.0
    %1080 = vmatprep.subr.mxu0 0.0
    %1081 = vmatpush1.msra.mxu0 0.0
    %1082 = vmatprep.subr.mxu0 0.0
    %1083 = vmatpush1.msra.mxu0 0.0
    %1084 = vmatprep.subr.mxu0 0.0
    %1085 = vmatpush1.msra.mxu0 0.0
    %1086 = vmatprep.subr.mxu0 0.0
    %1087 = vmatpush1.msra.mxu0 0.0
    %1088 = vmatprep.subr.mxu0 0.0
    %1089 = vmatpush1.msra.mxu0 0.0
    %1090 = vmatprep.subr.mxu0 0.0
    %1091 = vmatpush1.msra.mxu0 0.0
    %1092 = vmatprep.subr.mxu0 0.0
    %1093 = vmatpush1.msra.mxu0 0.0
    %1094 = vmatprep.subr.mxu0 0.0
    %1095 = vmatpush1.msra.mxu0 0.0
    %1096 = vmatprep.mubr.f32.mxu0 0.0
    %1097 = vmatmul.mubr.f32.gmra.mrb[0].mxu0 %v953
    %v1098 = vpop.f32.mrb[0].mxu0
    %v1099 = vadd.f32 0.0, %v1098
    %v1100 = vpop.f32.mrb[0].mxu0
    %v1101 = vadd.f32 0.0, %v1100
    %1102 = vdwg.mxu0
    %v1103 = vadd.f32 %v957, %v1028
    %v1104 = vadd.f32 %v958, %v1030
    %v1105 = vadd.f32 %v959, %v1099
    %v1106 = vadd.f32 %v960, %v1101
    %v1107 = vxor.u32 %v1103, 2147483648
    %v1108 = vmul.f32 %v1107, 1.442695
    %v1109 = vpow.pop %v1108
    %v1110 = vadd.f32 %v1109, 1.0
    %v1111 = vrcp.pop %v1110
    %v1112 = vmul.f32 1.0, %v1111
    %v1113 = vxor.u32 %v1104, 2147483648
    %v1114 = vmul.f32 %v1113, 1.442695
    %v1115 = vpow.pop %v1114
    %v1116 = vadd.f32 %v1115, 1.0
    %v1117 = vrcp.pop %v1116
    %v1118 = vmul.f32 1.0, %v1117
    %v1119 = vtanh.pop %v1105
    %v1120 = vxor.u32 %v1106, 2147483648
    %v1121 = vmul.f32 %v1120, 1.442695
    %v1122 = vpow.pop %v1121
    %v1123 = vadd.f32 %v1122, 1.0
    %v1124 = vrcp.pop %v1123
    %v1125 = vmul.f32 1.0, %v1124
    %v1126 = vmul.f32 %v1118, %v951
    %v1127 = vmul.f32 %v1112, %v1119
    %v1128 = vadd.f32 %v1126, %v1127
    %v1129 = vtanh.pop %v1128
    %v1130 = vmul.f32 %v1125, %v1129
    %s1131 = smul.u32 3, 4
    %s1132 = smul.addr %s1131, 8
    %s1133 = scalar_lea.vmem [#allocation2], %s1132
    %v1134 = vld [vmem:[%s1133] sm:$0xff]
    %v1135 = vld [vmem:[%s1133 + $0x8] sm:$0xff]
    %v1136 = vld [vmem:[%s1133 + $0x10] sm:$0xff]
    %v1137 = vld [vmem:[%s1133 + $0x18] sm:$0xff]
    %1138 = vmatprep.subr.mxu0 %v544
    %1139 = vmatpush1.msra.mxu0 %v543
    %1140 = vmatprep.subr.mxu0 %v548
    %1141 = vmatpush1.msra.mxu0 %v547
    %1142 = vmatprep.subr.mxu0 %v552
    %1143 = vmatpush1.msra.mxu0 %v551
    %1144 = vmatprep.subr.mxu0 %v556
    %1145 = vmatpush1.msra.mxu0 %v555
    %1146 = vmatprep.subr.mxu0 %v560
    %1147 = vmatpush1.msra.mxu0 %v559
    %1148 = vmatprep.subr.mxu0 %v564
    %1149 = vmatpush1.msra.mxu0 %v563
    %1150 = vmatprep.subr.mxu0 %v568
    %1151 = vmatpush1.msra.mxu0 %v567
    %1152 = vmatprep.subr.mxu0 %v572
    %1153 = vmatpush1.msra.mxu0 %v571
    %1154 = vmatprep.subr.mxu0 %v576
    %1155 = vmatpush1.msra.mxu0 %v575
    %1156 = vmatprep.subr.mxu0 %v580
    %1157 = vmatpush1.msra.mxu0 %v579
    %1158 = vmatprep.subr.mxu0 %v584
    %1159 = vmatpush1.msra.mxu0 %v583
    %1160 = vmatprep.subr.mxu0 %v588
    %1161 = vmatpush1.msra.mxu0 %v587
    %1162 = vmatprep.subr.mxu0 %v592
    %1163 = vmatpush1.msra.mxu0 %v591
    %1164 = vmatprep.subr.mxu0 %v596
    %1165 = vmatpush1.msra.mxu0 %v595
    %1166 = vmatprep.subr.mxu0 %v600
    %1167 = vmatpush1.msra.mxu0 %v599
    %1168 = vmatprep.subr.mxu0 %v604
    %1169 = vmatpush1.msra.mxu0 %v603
    %1170 = vmatprep.subr.mxu0 0.0
    %1171 = vmatpush1.msra.mxu0 0.0
    %1172 = vmatprep.subr.mxu0 0.0
    %1173 = vmatpush1.msra.mxu0 0.0
    %1174 = vmatprep.subr.mxu0 0.0
    %1175 = vmatpush1.msra.mxu0 0.0
    %1176 = vmatprep.subr.mxu0 0.0
    %1177 = vmatpush1.msra.mxu0 0.0
    %1178 = vmatprep.subr.mxu0 0.0
    %1179 = vmatpush1.msra.mxu0 0.0
    %1180 = vmatprep.subr.mxu0 0.0
    %1181 = vmatpush1.msra.mxu0 0.0
    %1182 = vmatprep.subr.mxu0 0.0
    %1183 = vmatpush1.msra.mxu0 0.0
    %1184 = vmatprep.subr.mxu0 0.0
    %1185 = vmatpush1.msra.mxu0 0.0
    %1186 = vmatprep.subr.mxu0 0.0
    %1187 = vmatpush1.msra.mxu0 0.0
    %1188 = vmatprep.subr.mxu0 0.0
    %1189 = vmatpush1.msra.mxu0 0.0
    %1190 = vmatprep.subr.mxu0 0.0
    %1191 = vmatpush1.msra.mxu0 0.0
    %1192 = vmatprep.subr.mxu0 0.0
    %1193 = vmatpush1.msra.mxu0 0.0
    %1194 = vmatprep.subr.mxu0 0.0
    %1195 = vmatpush1.msra.mxu0 0.0
    %1196 = vmatprep.subr.mxu0 0.0
    %1197 = vmatpush1.msra.mxu0 0.0
    %1198 = vmatprep.subr.mxu0 0.0
    %1199 = vmatpush1.msra.mxu0 0.0
    %1200 = vmatprep.subr.mxu0 0.0
    %1201 = vmatpush1.msra.mxu0 0.0
    %1202 = vmatprep.mubr.f32.mxu0 0.0
    %1203 = vmatmul.mubr.f32.gmra.mrb[0].mxu0 %v1130
    %v1204 = vpop.f32.mrb[0].mxu0
    %v1205 = vadd.f32 0.0, %v1204
    %v1206 = vpop.f32.mrb[0].mxu0
    %v1207 = vadd.f32 0.0, %v1206
    %1208 = vdwg.mxu0
    %1209 = vmatprep.subr.mxu0 %v546
    %1210 = vmatpush1.msra.mxu0 %v545
    %1211 = vmatprep.subr.mxu0 %v550
    %1212 = vmatpush1.msra.mxu0 %v549
    %1213 = vmatprep.subr.mxu0 %v554
    %1214 = vmatpush1.msra.mxu0 %v553
    %1215 = vmatprep.subr.mxu0 %v558
    %1216 = vmatpush1.msra.mxu0 %v557
    %1217 = vmatprep.subr.mxu0 %v562
    %1218 = vmatpush1.msra.mxu0 %v561
    %1219 = vmatprep.subr.mxu0 %v566
    %1220 = vmatpush1.msra.mxu0 %v565
    %1221 = vmatprep.subr.mxu0 %v570
    %1222 = vmatpush1.msra.mxu0 %v569
    %1223 = vmatprep.subr.mxu0 %v574
    %1224 = vmatpush1.msra.mxu0 %v573
    %1225 = vmatprep.subr.mxu0 %v578
    %1226 = vmatpush1.msra.mxu0 %v577
    %1227 = vmatprep.subr.mxu0 %v582
    %1228 = vmatpush1.msra.mxu0 %v581
    %1229 = vmatprep.subr.mxu0 %v586
    %1230 = vmatpush1.msra.mxu0 %v585
    %1231 = vmatprep.subr.mxu0 %v590
    %1232 = vmatpush1.msra.mxu0 %v589
    %1233 = vmatprep.subr.mxu0 %v594
    %1234 = vmatpush1.msra.mxu0 %v593
    %1235 = vmatprep.subr.mxu0 %v598
    %1236 = vmatpush1.msra.mxu0 %v597
    %1237 = vmatprep.subr.mxu0 %v602
    %1238 = vmatpush1.msra.mxu0 %v601
    %1239 = vmatprep.subr.mxu0 %v606
    %1240 = vmatpush1.msra.mxu0 %v605
    %1241 = vmatprep.subr.mxu0 0.0
    %1242 = vmatpush1.msra.mxu0 0.0
    %1243 = vmatprep.subr.mxu0 0.0
    %1244 = vmatpush1.msra.mxu0 0.0
    %1245 = vmatprep.subr.mxu0 0.0
    %1246 = vmatpush1.msra.mxu0 0.0
    %1247 = vmatprep.subr.mxu0 0.0
    %1248 = vmatpush1.msra.mxu0 0.0
    %1249 = vmatprep.subr.mxu0 0.0
    %1250 = vmatpush1.msra.mxu0 0.0
    %1251 = vmatprep.subr.mxu0 0.0
    %1252 = vmatpush1.msra.mxu0 0.0
    %1253 = vmatprep.subr.mxu0 0.0
    %1254 = vmatpush1.msra.mxu0 0.0
    %1255 = vmatprep.subr.mxu0 0.0
    %1256 = vmatpush1.msra.mxu0 0.0
    %1257 = vmatprep.subr.mxu0 0.0
    %1258 = vmatpush1.msra.mxu0 0.0
    %1259 = vmatprep.subr.mxu0 0.0
    %1260 = vmatpush1.msra.mxu0 0.0
    %1261 = vmatprep.subr.mxu0 0.0
    %1262 = vmatpush1.msra.mxu0 0.0
    %1263 = vmatprep.subr.mxu0 0.0
    %1264 = vmatpush1.msra.mxu0 0.0
    %1265 = vmatprep.subr.mxu0 0.0
    %1266 = vmatpush1.msra.mxu0 0.0
    %1267 = vmatprep.subr.mxu0 0.0
    %1268 = vmatpush1.msra.mxu0 0.0
    %1269 = vmatprep.subr.mxu0 0.0
    %1270 = vmatpush1.msra.mxu0 0.0
    %1271 = vmatprep.subr.mxu0 0.0
    %1272 = vmatpush1.msra.mxu0 0.0
    %1273 = vmatprep.mubr.f32.mxu0 0.0
    %1274 = vmatmul.mubr.f32.gmra.mrb[0].mxu0 %v1130
    %v1275 = vpop.f32.mrb[0].mxu0
    %v1276 = vadd.f32 0.0, %v1275
    %v1277 = vpop.f32.mrb[0].mxu0
    %v1278 = vadd.f32 0.0, %v1277
    %1279 = vdwg.mxu0
    %v1280 = vadd.f32 %v1134, %v1205
    %v1281 = vadd.f32 %v1135, %v1207
    %v1282 = vadd.f32 %v1136, %v1276
    %v1283 = vadd.f32 %v1137, %v1278
    %v1284 = vxor.u32 %v1280, 2147483648
    %v1285 = vmul.f32 %v1284, 1.442695
    %v1286 = vpow.pop %v1285
    %v1287 = vadd.f32 %v1286, 1.0
    %v1288 = vrcp.pop %v1287
    %v1289 = vmul.f32 1.0, %v1288
    %v1290 = vxor.u32 %v1281, 2147483648
    %v1291 = vmul.f32 %v1290, 1.442695
    %v1292 = vpow.pop %v1291
    %v1293 = vadd.f32 %v1292, 1.0
    %v1294 = vrcp.pop %v1293
    %v1295 = vmul.f32 1.0, %v1294
    %v1296 = vtanh.pop %v1282
    %v1297 = vxor.u32 %v1283, 2147483648
    %v1298 = vmul.f32 %v1297, 1.442695
    %v1299 = vpow.pop %v1298
    %v1300 = vadd.f32 %v1299, 1.0
    %v1301 = vrcp.pop %v1300
    %v1302 = vmul.f32 1.0, %v1301
    %v1303 = vmul.f32 %v1295, %v1128
    %v1304 = vmul.f32 %v1289, %v1296
    %v1305 = vadd.f32 %v1303, %v1304
    %v1306 = vtanh.pop %v1305
    %v1307 = vmul.f32 %v1302, %v1306
    %s1308 = smul.u32 4, 4
    %s1309 = smul.addr %s1308, 8
    %s1310 = scalar_lea.vmem [#allocation2], %s1309
    %v1311 = vld [vmem:[%s1310] sm:$0xff]
    %v1312 = vld [vmem:[%s1310 + $0x8] sm:$0xff]
    %v1313 = vld [vmem:[%s1310 + $0x10] sm:$0xff]
    %v1314 = vld [vmem:[%s1310 + $0x18] sm:$0xff]
    %1315 = vmatprep.subr.mxu0 %v544
    %1316 = vmatpush1.msra.mxu0 %v543
    %1317 = vmatprep.subr.mxu0 %v548
    %1318 = vmatpush1.msra.mxu0 %v547
    %1319 = vmatprep.subr.mxu0 %v552
    %1320 = vmatpush1.msra.mxu0 %v551
    %1321 = vmatprep.subr.mxu0 %v556
    %1322 = vmatpush1.msra.mxu0 %v555
    %1323 = vmatprep.subr.mxu0 %v560
    %1324 = vmatpush1.msra.mxu0 %v559
    %1325 = vmatprep.subr.mxu0 %v564
    %1326 = vmatpush1.msra.mxu0 %v563
    %1327 = vmatprep.subr.mxu0 %v568
    %1328 = vmatpush1.msra.mxu0 %v567
    %1329 = vmatprep.subr.mxu0 %v572
    %1330 = vmatpush1.msra.mxu0 %v571
    %1331 = vmatprep.subr.mxu0 %v576
    %1332 = vmatpush1.msra.mxu0 %v575
    %1333 = vmatprep.subr.mxu0 %v580
    %1334 = vmatpush1.msra.mxu0 %v579
    %1335 = vmatprep.subr.mxu0 %v584
    %1336 = vmatpush1.msra.mxu0 %v583
    %1337 = vmatprep.subr.mxu0 %v588
    %1338 = vmatpush1.msra.mxu0 %v587
    %1339 = vmatprep.subr.mxu0 %v592
    %1340 = vmatpush1.msra.mxu0 %v591
    %1341 = vmatprep.subr.mxu0 %v596
    %1342 = vmatpush1.msra.mxu0 %v595
    %1343 = vmatprep.subr.mxu0 %v600
    %1344 = vmatpush1.msra.mxu0 %v599
    %1345 = vmatprep.subr.mxu0 %v604
    %1346 = vmatpush1.msra.mxu0 %v603
    %1347 = vmatprep.subr.mxu0 0.0
    %1348 = vmatpush1.msra.mxu0 0.0
    %1349 = vmatprep.subr.mxu0 0.0
    %1350 = vmatpush1.msra.mxu0 0.0
    %1351 = vmatprep.subr.mxu0 0.0
    %1352 = vmatpush1.msra.mxu0 0.0
    %1353 = vmatprep.subr.mxu0 0.0
    %1354 = vmatpush1.msra.mxu0 0.0
    %1355 = vmatprep.subr.mxu0 0.0
    %1356 = vmatpush1.msra.mxu0 0.0
    %1357 = vmatprep.subr.mxu0 0.0
    %1358 = vmatpush1.msra.mxu0 0.0
    %1359 = vmatprep.subr.mxu0 0.0
    %1360 = vmatpush1.msra.mxu0 0.0
    %1361 = vmatprep.subr.mxu0 0.0
    %1362 = vmatpush1.msra.mxu0 0.0
    %1363 = vmatprep.subr.mxu0 0.0
    %1364 = vmatpush1.msra.mxu0 0.0
    %1365 = vmatprep.subr.mxu0 0.0
    %1366 = vmatpush1.msra.mxu0 0.0
    %1367 = vmatprep.subr.mxu0 0.0
    %1368 = vmatpush1.msra.mxu0 0.0
    %1369 = vmatprep.subr.mxu0 0.0
    %1370 = vmatpush1.msra.mxu0 0.0
    %1371 = vmatprep.subr.mxu0 0.0
    %1372 = vmatpush1.msra.mxu0 0.0
    %1373 = vmatprep.subr.mxu0 0.0
    %1374 = vmatpush1.msra.mxu0 0.0
    %1375 = vmatprep.subr.mxu0 0.0
    %1376 = vmatpush1.msra.mxu0 0.0
    %1377 = vmatprep.subr.mxu0 0.0
    %1378 = vmatpush1.msra.mxu0 0.0
    %1379 = vmatprep.mubr.f32.mxu0 0.0
    %1380 = vmatmul.mubr.f32.gmra.mrb[0].mxu0 %v1307
    %v1381 = vpop.f32.mrb[0].mxu0
    %v1382 = vadd.f32 0.0, %v1381
    %v1383 = vpop.f32.mrb[0].mxu0
    %v1384 = vadd.f32 0.0, %v1383
    %1385 = vdwg.mxu0
    %1386 = vmatprep.subr.mxu0 %v546
    %1387 = vmatpush1.msra.mxu0 %v545
    %1388 = vmatprep.subr.mxu0 %v550
    %1389 = vmatpush1.msra.mxu0 %v549
    %1390 = vmatprep.subr.mxu0 %v554
    %1391 = vmatpush1.msra.mxu0 %v553
    %1392 = vmatprep.subr.mxu0 %v558
    %1393 = vmatpush1.msra.mxu0 %v557
    %1394 = vmatprep.subr.mxu0 %v562
    %1395 = vmatpush1.msra.mxu0 %v561
    %1396 = vmatprep.subr.mxu0 %v566
    %1397 = vmatpush1.msra.mxu0 %v565
    %1398 = vmatprep.subr.mxu0 %v570
    %1399 = vmatpush1.msra.mxu0 %v569
    %1400 = vmatprep.subr.mxu0 %v574
    %1401 = vmatpush1.msra.mxu0 %v573
    %1402 = vmatprep.subr.mxu0 %v578
    %1403 = vmatpush1.msra.mxu0 %v577
    %1404 = vmatprep.subr.mxu0 %v582
    %1405 = vmatpush1.msra.mxu0 %v581
    %1406 = vmatprep.subr.mxu0 %v586
    %1407 = vmatpush1.msra.mxu0 %v585
    %1408 = vmatprep.subr.mxu0 %v590
    %1409 = vmatpush1.msra.mxu0 %v589
    %1410 = vmatprep.subr.mxu0 %v594
    %1411 = vmatpush1.msra.mxu0 %v593
    %1412 = vmatprep.subr.mxu0 %v598
    %1413 = vmatpush1.msra.mxu0 %v597
    %1414 = vmatprep.subr.mxu0 %v602
    %1415 = vmatpush1.msra.mxu0 %v601
    %1416 = vmatprep.subr.mxu0 %v606
    %1417 = vmatpush1.msra.mxu0 %v605
    %1418 = vmatprep.subr.mxu0 0.0
    %1419 = vmatpush1.msra.mxu0 0.0
    %1420 = vmatprep.subr.mxu0 0.0
    %1421 = vmatpush1.msra.mxu0 0.0
    %1422 = vmatprep.subr.mxu0 0.0
    %1423 = vmatpush1.msra.mxu0 0.0
    %1424 = vmatprep.subr.mxu0 0.0
    %1425 = vmatpush1.msra.mxu0 0.0
    %1426 = vmatprep.subr.mxu0 0.0
    %1427 = vmatpush1.msra.mxu0 0.0
    %1428 = vmatprep.subr.mxu0 0.0
    %1429 = vmatpush1.msra.mxu0 0.0
    %1430 = vmatprep.subr.mxu0 0.0
    %1431 = vmatpush1.msra.mxu0 0.0
    %1432 = vmatprep.subr.mxu0 0.0
    %1433 = vmatpush1.msra.mxu0 0.0
    %1434 = vmatprep.subr.mxu0 0.0
    %1435 = vmatpush1.msra.mxu0 0.0
    %1436 = vmatprep.subr.mxu0 0.0
    %1437 = vmatpush1.msra.mxu0 0.0
    %1438 = vmatprep.subr.mxu0 0.0
    %1439 = vmatpush1.msra.mxu0 0.0
    %1440 = vmatprep.subr.mxu0 0.0
    %1441 = vmatpush1.msra.mxu0 0.0
    %1442 = vmatprep.subr.mxu0 0.0
    %1443 = vmatpush1.msra.mxu0 0.0
    %1444 = vmatprep.subr.mxu0 0.0
    %1445 = vmatpush1.msra.mxu0 0.0
    %1446 = vmatprep.subr.mxu0 0.0
    %1447 = vmatpush1.msra.mxu0 0.0
    %1448 = vmatprep.subr.mxu0 0.0
    %1449 = vmatpush1.msra.mxu0 0.0
    %1450 = vmatprep.mubr.f32.mxu0 0.0
    %1451 = vmatmul.mubr.f32.gmra.mrb[0].mxu0 %v1307
    %v1452 = vpop.f32.mrb[0].mxu0
    %v1453 = vadd.f32 0.0, %v1452
    %v1454 = vpop.f32.mrb[0].mxu0
    %v1455 = vadd.f32 0.0, %v1454
    %1456 = vdwg.mxu0
    %v1457 = vadd.f32 %v1311, %v1382
    %v1458 = vadd.f32 %v1312, %v1384
    %v1459 = vadd.f32 %v1313, %v1453
    %v1460 = vadd.f32 %v1314, %v1455
    %v1461 = vxor.u32 %v1457, 2147483648
    %v1462 = vmul.f32 %v1461, 1.442695
    %v1463 = vpow.pop %v1462
    %v1464 = vadd.f32 %v1463, 1.0
    %v1465 = vrcp.pop %v1464
    %v1466 = vmul.f32 1.0, %v1465
    %v1467 = vxor.u32 %v1458, 2147483648
    %v1468 = vmul.f32 %v1467, 1.442695
    %v1469 = vpow.pop %v1468
    %v1470 = vadd.f32 %v1469, 1.0
    %v1471 = vrcp.pop %v1470
    %v1472 = vmul.f32 1.0, %v1471
    %v1473 = vtanh.pop %v1459
    %v1474 = vxor.u32 %v1460, 2147483648
    %v1475 = vmul.f32 %v1474, 1.442695
    %v1476 = vpow.pop %v1475
    %v1477 = vadd.f32 %v1476, 1.0
    %v1478 = vrcp.pop %v1477
    %v1479 = vmul.f32 1.0, %v1478
    %v1480 = vmul.f32 %v1472, %v1305
    %v1481 = vmul.f32 %v1466, %v1473
    %v1482 = vadd.f32 %v1480, %v1481
    %v1483 = vtanh.pop %v1482
    %v1484 = vmul.f32 %v1479, %v1483
    %s1485 = smul.u32 5, 4
    %s1486 = smul.addr %s1485, 8
    %s1487 = scalar_lea.vmem [#allocation2], %s1486
    %v1488 = vld [vmem:[%s1487] sm:$0xff]
    %v1489 = vld [vmem:[%s1487 + $0x8] sm:$0xff]
    %v1490 = vld [vmem:[%s1487 + $0x10] sm:$0xff]
    %v1491 = vld [vmem:[%s1487 + $0x18] sm:$0xff]
    %1492 = vmatprep.subr.mxu0 %v544
    %1493 = vmatpush1.msra.mxu0 %v543
    %1494 = vmatprep.subr.mxu0 %v548
    %1495 = vmatpush1.msra.mxu0 %v547
    %1496 = vmatprep.subr.mxu0 %v552
    %1497 = vmatpush1.msra.mxu0 %v551
    %1498 = vmatprep.subr.mxu0 %v556
    %1499 = vmatpush1.msra.mxu0 %v555
    %1500 = vmatprep.subr.mxu0 %v560
    %1501 = vmatpush1.msra.mxu0 %v559
    %1502 = vmatprep.subr.mxu0 %v564
    %1503 = vmatpush1.msra.mxu0 %v563
    %1504 = vmatprep.subr.mxu0 %v568
    %1505 = vmatpush1.msra.mxu0 %v567
    %1506 = vmatprep.subr.mxu0 %v572
    %1507 = vmatpush1.msra.mxu0 %v571
    %1508 = vmatprep.subr.mxu0 %v576
    %1509 = vmatpush1.msra.mxu0 %v575
    %1510 = vmatprep.subr.mxu0 %v580
    %1511 = vmatpush1.msra.mxu0 %v579
    %1512 = vmatprep.subr.mxu0 %v584
    %1513 = vmatpush1.msra.mxu0 %v583
    %1514 = vmatprep.subr.mxu0 %v588
    %1515 = vmatpush1.msra.mxu0 %v587
    %1516 = vmatprep.subr.mxu0 %v592
    %1517 = vmatpush1.msra.mxu0 %v591
    %1518 = vmatprep.subr.mxu0 %v596
    %1519 = vmatpush1.msra.mxu0 %v595
    %1520 = vmatprep.subr.mxu0 %v600
    %1521 = vmatpush1.msra.mxu0 %v599
    %1522 = vmatprep.subr.mxu0 %v604
    %1523 = vmatpush1.msra.mxu0 %v603
    %1524 = vmatprep.subr.mxu0 0.0
    %1525 = vmatpush1.msra.mxu0 0.0
    %1526 = vmatprep.subr.mxu0 0.0
    %1527 = vmatpush1.msra.mxu0 0.0
    %1528 = vmatprep.subr.mxu0 0.0
    %1529 = vmatpush1.msra.mxu0 0.0
    %1530 = vmatprep.subr.mxu0 0.0
    %1531 = vmatpush1.msra.mxu0 0.0
    %1532 = vmatprep.subr.mxu0 0.0
    %1533 = vmatpush1.msra.mxu0 0.0
    %1534 = vmatprep.subr.mxu0 0.0
    %1535 = vmatpush1.msra.mxu0 0.0
    %1536 = vmatprep.subr.mxu0 0.0
    %1537 = vmatpush1.msra.mxu0 0.0
    %1538 = vmatprep.subr.mxu0 0.0
    %1539 = vmatpush1.msra.mxu0 0.0
    %1540 = vmatprep.subr.mxu0 0.0
    %1541 = vmatpush1.msra.mxu0 0.0
    %1542 = vmatprep.subr.mxu0 0.0
    %1543 = vmatpush1.msra.mxu0 0.0
    %1544 = vmatprep.subr.mxu0 0.0
    %1545 = vmatpush1.msra.mxu0 0.0
    %1546 = vmatprep.subr.mxu0 0.0
    %1547 = vmatpush1.msra.mxu0 0.0
    %1548 = vmatprep.subr.mxu0 0.0
    %1549 = vmatpush1.msra.mxu0 0.0
    %1550 = vmatprep.subr.mxu0 0.0
    %1551 = vmatpush1.msra.mxu0 0.0
    %1552 = vmatprep.subr.mxu0 0.0
    %1553 = vmatpush1.msra.mxu0 0.0
    %1554 = vmatprep.subr.mxu0 0.0
    %1555 = vmatpush1.msra.mxu0 0.0
    %1556 = vmatprep.mubr.f32.mxu0 0.0
    %1557 = vmatmul.mubr.f32.gmra.mrb[0].mxu0 %v1484
    %v1558 = vpop.f32.mrb[0].mxu0
    %v1559 = vadd.f32 0.0, %v1558
    %v1560 = vpop.f32.mrb[0].mxu0
    %v1561 = vadd.f32 0.0, %v1560
    %1562 = vdwg.mxu0
    %1563 = vmatprep.subr.mxu0 %v546
    %1564 = vmatpush1.msra.mxu0 %v545
    %1565 = vmatprep.subr.mxu0 %v550
    %1566 = vmatpush1.msra.mxu0 %v549
    %1567 = vmatprep.subr.mxu0 %v554
    %1568 = vmatpush1.msra.mxu0 %v553
    %1569 = vmatprep.subr.mxu0 %v558
    %1570 = vmatpush1.msra.mxu0 %v557
    %1571 = vmatprep.subr.mxu0 %v562
    %1572 = vmatpush1.msra.mxu0 %v561
    %1573 = vmatprep.subr.mxu0 %v566
    %1574 = vmatpush1.msra.mxu0 %v565
    %1575 = vmatprep.subr.mxu0 %v570
    %1576 = vmatpush1.msra.mxu0 %v569
    %1577 = vmatprep.subr.mxu0 %v574
    %1578 = vmatpush1.msra.mxu0 %v573
    %1579 = vmatprep.subr.mxu0 %v578
    %1580 = vmatpush1.msra.mxu0 %v577
    %1581 = vmatprep.subr.mxu0 %v582
    %1582 = vmatpush1.msra.mxu0 %v581
    %1583 = vmatprep.subr.mxu0 %v586
    %1584 = vmatpush1.msra.mxu0 %v585
    %1585 = vmatprep.subr.mxu0 %v590
    %1586 = vmatpush1.msra.mxu0 %v589
    %1587 = vmatprep.subr.mxu0 %v594
    %1588 = vmatpush1.msra.mxu0 %v593
    %1589 = vmatprep.subr.mxu0 %v598
    %1590 = vmatpush1.msra.mxu0 %v597
    %1591 = vmatprep.subr.mxu0 %v602
    %1592 = vmatpush1.msra.mxu0 %v601
    %1593 = vmatprep.subr.mxu0 %v606
    %1594 = vmatpush1.msra.mxu0 %v605
    %1595 = vmatprep.subr.mxu0 0.0
    %1596 = vmatpush1.msra.mxu0 0.0
    %1597 = vmatprep.subr.mxu0 0.0
    %1598 = vmatpush1.msra.mxu0 0.0
    %1599 = vmatprep.subr.mxu0 0.0
    %1600 = vmatpush1.msra.mxu0 0.0
    %1601 = vmatprep.subr.mxu0 0.0
    %1602 = vmatpush1.msra.mxu0 0.0
    %1603 = vmatprep.subr.mxu0 0.0
    %1604 = vmatpush1.msra.mxu0 0.0
    %1605 = vmatprep.subr.mxu0 0.0
    %1606 = vmatpush1.msra.mxu0 0.0
    %1607 = vmatprep.subr.mxu0 0.0
    %1608 = vmatpush1.msra.mxu0 0.0
    %1609 = vmatprep.subr.mxu0 0.0
    %1610 = vmatpush1.msra.mxu0 0.0
    %1611 = vmatprep.subr.mxu0 0.0
    %1612 = vmatpush1.msra.mxu0 0.0
    %1613 = vmatprep.subr.mxu0 0.0
    %1614 = vmatpush1.msra.mxu0 0.0
    %1615 = vmatprep.subr.mxu0 0.0
    %1616 = vmatpush1.msra.mxu0 0.0
    %1617 = vmatprep.subr.mxu0 0.0
    %1618 = vmatpush1.msra.mxu0 0.0
    %1619 = vmatprep.subr.mxu0 0.0
    %1620 = vmatpush1.msra.mxu0 0.0
    %1621 = vmatprep.subr.mxu0 0.0
    %1622 = vmatpush1.msra.mxu0 0.0
    %1623 = vmatprep.subr.mxu0 0.0
    %1624 = vmatpush1.msra.mxu0 0.0
    %1625 = vmatprep.subr.mxu0 0.0
    %1626 = vmatpush1.msra.mxu0 0.0
    %1627 = vmatprep.mubr.f32.mxu0 0.0
    %1628 = vmatmul.mubr.f32.gmra.mrb[0].mxu0 %v1484
    %v1629 = vpop.f32.mrb[0].mxu0
    %v1630 = vadd.f32 0.0, %v1629
    %v1631 = vpop.f32.mrb[0].mxu0
    %v1632 = vadd.f32 0.0, %v1631
    %1633 = vdwg.mxu0
    %v1634 = vadd.f32 %v1488, %v1559
    %v1635 = vadd.f32 %v1489, %v1561
    %v1636 = vadd.f32 %v1490, %v1630
    %v1637 = vadd.f32 %v1491, %v1632
    %v1638 = vxor.u32 %v1634, 2147483648
    %v1639 = vmul.f32 %v1638, 1.442695
    %v1640 = vpow.pop %v1639
    %v1641 = vadd.f32 %v1640, 1.0
    %v1642 = vrcp.pop %v1641
    %v1643 = vmul.f32 1.0, %v1642
    %v1644 = vxor.u32 %v1635, 2147483648
    %v1645 = vmul.f32 %v1644, 1.442695
    %v1646 = vpow.pop %v1645
    %v1647 = vadd.f32 %v1646, 1.0
    %v1648 = vrcp.pop %v1647
    %v1649 = vmul.f32 1.0, %v1648
    %v1650 = vtanh.pop %v1636
    %v1651 = vxor.u32 %v1637, 2147483648
    %v1652 = vmul.f32 %v1651, 1.442695
    %v1653 = vpow.pop %v1652
    %v1654 = vadd.f32 %v1653, 1.0
    %v1655 = vrcp.pop %v1654
    %v1656 = vmul.f32 1.0, %v1655
    %v1657 = vmul.f32 %v1649, %v1482
    %v1658 = vmul.f32 %v1643, %v1650
    %v1659 = vadd.f32 %v1657, %v1658
    %v1660 = vtanh.pop %v1659
    %v1661 = vmul.f32 %v1656, %v1660
    %s1662 = smul.u32 6, 4
    %s1663 = smul.addr %s1662, 8
    %s1664 = scalar_lea.vmem [#allocation2], %s1663
    %v1665 = vld [vmem:[%s1664] sm:$0xff]
    %v1666 = vld [vmem:[%s1664 + $0x8] sm:$0xff]
    %v1667 = vld [vmem:[%s1664 + $0x10] sm:$0xff]
    %v1668 = vld [vmem:[%s1664 + $0x18] sm:$0xff]
    %1669 = vmatprep.subr.mxu0 %v544
    %1670 = vmatpush1.msra.mxu0 %v543
    %1671 = vmatprep.subr.mxu0 %v548
    %1672 = vmatpush1.msra.mxu0 %v547
    %1673 = vmatprep.subr.mxu0 %v552
    %1674 = vmatpush1.msra.mxu0 %v551
    %1675 = vmatprep.subr.mxu0 %v556
    %1676 = vmatpush1.msra.mxu0 %v555
    %1677 = vmatprep.subr.mxu0 %v560
    %1678 = vmatpush1.msra.mxu0 %v559
    %1679 = vmatprep.subr.mxu0 %v564
    %1680 = vmatpush1.msra.mxu0 %v563
    %1681 = vmatprep.subr.mxu0 %v568
    %1682 = vmatpush1.msra.mxu0 %v567
    %1683 = vmatprep.subr.mxu0 %v572
    %1684 = vmatpush1.msra.mxu0 %v571
    %1685 = vmatprep.subr.mxu0 %v576
    %1686 = vmatpush1.msra.mxu0 %v575
    %1687 = vmatprep.subr.mxu0 %v580
    %1688 = vmatpush1.msra.mxu0 %v579
    %1689 = vmatprep.subr.mxu0 %v584
    %1690 = vmatpush1.msra.mxu0 %v583
    %1691 = vmatprep.subr.mxu0 %v588
    %1692 = vmatpush1.msra.mxu0 %v587
    %1693 = vmatprep.subr.mxu0 %v592
    %1694 = vmatpush1.msra.mxu0 %v591
    %1695 = vmatprep.subr.mxu0 %v596
    %1696 = vmatpush1.msra.mxu0 %v595
    %1697 = vmatprep.subr.mxu0 %v600
    %1698 = vmatpush1.msra.mxu0 %v599
    %1699 = vmatprep.subr.mxu0 %v604
    %1700 = vmatpush1.msra.mxu0 %v603
    %1701 = vmatprep.subr.mxu0 0.0
    %1702 = vmatpush1.msra.mxu0 0.0
    %1703 = vmatprep.subr.mxu0 0.0
    %1704 = vmatpush1.msra.mxu0 0.0
    %1705 = vmatprep.subr.mxu0 0.0
    %1706 = vmatpush1.msra.mxu0 0.0
    %1707 = vmatprep.subr.mxu0 0.0
    %1708 = vmatpush1.msra.mxu0 0.0
    %1709 = vmatprep.subr.mxu0 0.0
    %1710 = vmatpush1.msra.mxu0 0.0
    %1711 = vmatprep.subr.mxu0 0.0
    %1712 = vmatpush1.msra.mxu0 0.0
    %1713 = vmatprep.subr.mxu0 0.0
    %1714 = vmatpush1.msra.mxu0 0.0
    %1715 = vmatprep.subr.mxu0 0.0
    %1716 = vmatpush1.msra.mxu0 0.0
    %1717 = vmatprep.subr.mxu0 0.0
    %1718 = vmatpush1.msra.mxu0 0.0
    %1719 = vmatprep.subr.mxu0 0.0
    %1720 = vmatpush1.msra.mxu0 0.0
    %1721 = vmatprep.subr.mxu0 0.0
    %1722 = vmatpush1.msra.mxu0 0.0
    %1723 = vmatprep.subr.mxu0 0.0
    %1724 = vmatpush1.msra.mxu0 0.0
    %1725 = vmatprep.subr.mxu0 0.0
    %1726 = vmatpush1.msra.mxu0 0.0
    %1727 = vmatprep.subr.mxu0 0.0
    %1728 = vmatpush1.msra.mxu0 0.0
    %1729 = vmatprep.subr.mxu0 0.0
    %1730 = vmatpush1.msra.mxu0 0.0
    %1731 = vmatprep.subr.mxu0 0.0
    %1732 = vmatpush1.msra.mxu0 0.0
    %1733 = vmatprep.mubr.f32.mxu0 0.0
    %1734 = vmatmul.mubr.f32.gmra.mrb[0].mxu0 %v1661
    %v1735 = vpop.f32.mrb[0].mxu0
    %v1736 = vadd.f32 0.0, %v1735
    %v1737 = vpop.f32.mrb[0].mxu0
    %v1738 = vadd.f32 0.0, %v1737
    %1739 = vdwg.mxu0
    %1740 = vmatprep.subr.mxu0 %v546
    %1741 = vmatpush1.msra.mxu0 %v545
    %1742 = vmatprep.subr.mxu0 %v550
    %1743 = vmatpush1.msra.mxu0 %v549
    %1744 = vmatprep.subr.mxu0 %v554
    %1745 = vmatpush1.msra.mxu0 %v553
    %1746 = vmatprep.subr.mxu0 %v558
    %1747 = vmatpush1.msra.mxu0 %v557
    %1748 = vmatprep.subr.mxu0 %v562
    %1749 = vmatpush1.msra.mxu0 %v561
    %1750 = vmatprep.subr.mxu0 %v566
    %1751 = vmatpush1.msra.mxu0 %v565
    %1752 = vmatprep.subr.mxu0 %v570
    %1753 = vmatpush1.msra.mxu0 %v569
    %1754 = vmatprep.subr.mxu0 %v574
    %1755 = vmatpush1.msra.mxu0 %v573
    %1756 = vmatprep.subr.mxu0 %v578
    %1757 = vmatpush1.msra.mxu0 %v577
    %1758 = vmatprep.subr.mxu0 %v582
    %1759 = vmatpush1.msra.mxu0 %v581
    %1760 = vmatprep.subr.mxu0 %v586
    %1761 = vmatpush1.msra.mxu0 %v585
    %1762 = vmatprep.subr.mxu0 %v590
    %1763 = vmatpush1.msra.mxu0 %v589
    %1764 = vmatprep.subr.mxu0 %v594
    %1765 = vmatpush1.msra.mxu0 %v593
    %1766 = vmatprep.subr.mxu0 %v598
    %1767 = vmatpush1.msra.mxu0 %v597
    %1768 = vmatprep.subr.mxu0 %v602
    %1769 = vmatpush1.msra.mxu0 %v601
    %1770 = vmatprep.subr.mxu0 %v606
    %1771 = vmatpush1.msra.mxu0 %v605
    %1772 = vmatprep.subr.mxu0 0.0
    %1773 = vmatpush1.msra.mxu0 0.0
    %1774 = vmatprep.subr.mxu0 0.0
    %1775 = vmatpush1.msra.mxu0 0.0
    %1776 = vmatprep.subr.mxu0 0.0
    %1777 = vmatpush1.msra.mxu0 0.0
    %1778 = vmatprep.subr.mxu0 0.0
    %1779 = vmatpush1.msra.mxu0 0.0
    %1780 = vmatprep.subr.mxu0 0.0
    %1781 = vmatpush1.msra.mxu0 0.0
    %1782 = vmatprep.subr.mxu0 0.0
    %1783 = vmatpush1.msra.mxu0 0.0
    %1784 = vmatprep.subr.mxu0 0.0
    %1785 = vmatpush1.msra.mxu0 0.0
    %1786 = vmatprep.subr.mxu0 0.0
    %1787 = vmatpush1.msra.mxu0 0.0
    %1788 = vmatprep.subr.mxu0 0.0
    %1789 = vmatpush1.msra.mxu0 0.0
    %1790 = vmatprep.subr.mxu0 0.0
    %1791 = vmatpush1.msra.mxu0 0.0
    %1792 = vmatprep.subr.mxu0 0.0
    %1793 = vmatpush1.msra.mxu0 0.0
    %1794 = vmatprep.subr.mxu0 0.0
    %1795 = vmatpush1.msra.mxu0 0.0
    %1796 = vmatprep.subr.mxu0 0.0
    %1797 = vmatpush1.msra.mxu0 0.0
    %1798 = vmatprep.subr.mxu0 0.0
    %1799 = vmatpush1.msra.mxu0 0.0
    %1800 = vmatprep.subr.mxu0 0.0
    %1801 = vmatpush1.msra.mxu0 0.0
    %1802 = vmatprep.subr.mxu0 0.0
    %1803 = vmatpush1.msra.mxu0 0.0
    %1804 = vmatprep.mubr.f32.mxu0 0.0
    %1805 = vmatmul.mubr.f32.gmra.mrb[0].mxu0 %v1661
    %v1806 = vpop.f32.mrb[0].mxu0
    %v1807 = vadd.f32 0.0, %v1806
    %v1808 = vpop.f32.mrb[0].mxu0
    %v1809 = vadd.f32 0.0, %v1808
    %1810 = vdwg.mxu0
    %v1811 = vadd.f32 %v1665, %v1736
    %v1812 = vadd.f32 %v1666, %v1738
    %v1813 = vadd.f32 %v1667, %v1807
    %v1814 = vadd.f32 %v1668, %v1809
    %v1815 = vxor.u32 %v1811, 2147483648
    %v1816 = vmul.f32 %v1815, 1.442695
    %v1817 = vpow.pop %v1816
    %v1818 = vadd.f32 %v1817, 1.0
    %v1819 = vrcp.pop %v1818
    %v1820 = vmul.f32 1.0, %v1819
    %v1821 = vxor.u32 %v1812, 2147483648
    %v1822 = vmul.f32 %v1821, 1.442695
    %v1823 = vpow.pop %v1822
    %v1824 = vadd.f32 %v1823, 1.0
    %v1825 = vrcp.pop %v1824
    %v1826 = vmul.f32 1.0, %v1825
    %v1827 = vtanh.pop %v1813
    %v1828 = vxor.u32 %v1814, 2147483648
    %v1829 = vmul.f32 %v1828, 1.442695
    %v1830 = vpow.pop %v1829
    %v1831 = vadd.f32 %v1830, 1.0
    %v1832 = vrcp.pop %v1831
    %v1833 = vmul.f32 1.0, %v1832
    %v1834 = vmul.f32 %v1826, %v1659
    %v1835 = vmul.f32 %v1820, %v1827
    %v1836 = vadd.f32 %v1834, %v1835
    %v1837 = vtanh.pop %v1836
    %v1838 = vmul.f32 %v1833, %v1837
    %s1839 = smul.u32 7, 4
    %s1840 = smul.addr %s1839, 8
    %s1841 = scalar_lea.vmem [#allocation2], %s1840
    %v1842 = vld [vmem:[%s1841] sm:$0xff]
    %v1843 = vld [vmem:[%s1841 + $0x8] sm:$0xff]
    %v1844 = vld [vmem:[%s1841 + $0x10] sm:$0xff]
    %v1845 = vld [vmem:[%s1841 + $0x18] sm:$0xff]
    %1846 = vmatprep.subr.mxu0 %v544
    %1847 = vmatpush1.msra.mxu0 %v543
    %1848 = vmatprep.subr.mxu0 %v548
    %1849 = vmatpush1.msra.mxu0 %v547
    %1850 = vmatprep.subr.mxu0 %v552
    %1851 = vmatpush1.msra.mxu0 %v551
    %1852 = vmatprep.subr.mxu0 %v556
    %1853 = vmatpush1.msra.mxu0 %v555
    %1854 = vmatprep.subr.mxu0 %v560
    %1855 = vmatpush1.msra.mxu0 %v559
    %1856 = vmatprep.subr.mxu0 %v564
    %1857 = vmatpush1.msra.mxu0 %v563
    %1858 = vmatprep.subr.mxu0 %v568
    %1859 = vmatpush1.msra.mxu0 %v567
    %1860 = vmatprep.subr.mxu0 %v572
    %1861 = vmatpush1.msra.mxu0 %v571
    %1862 = vmatprep.subr.mxu0 %v576
    %1863 = vmatpush1.msra.mxu0 %v575
    %1864 = vmatprep.subr.mxu0 %v580
    %1865 = vmatpush1.msra.mxu0 %v579
    %1866 = vmatprep.subr.mxu0 %v584
    %1867 = vmatpush1.msra.mxu0 %v583
    %1868 = vmatprep.subr.mxu0 %v588
    %1869 = vmatpush1.msra.mxu0 %v587
    %1870 = vmatprep.subr.mxu0 %v592
    %1871 = vmatpush1.msra.mxu0 %v591
    %1872 = vmatprep.subr.mxu0 %v596
    %1873 = vmatpush1.msra.mxu0 %v595
    %1874 = vmatprep.subr.mxu0 %v600
    %1875 = vmatpush1.msra.mxu0 %v599
    %1876 = vmatprep.subr.mxu0 %v604
    %1877 = vmatpush1.msra.mxu0 %v603
    %1878 = vmatprep.subr.mxu0 0.0
    %1879 = vmatpush1.msra.mxu0 0.0
    %1880 = vmatprep.subr.mxu0 0.0
    %1881 = vmatpush1.msra.mxu0 0.0
    %1882 = vmatprep.subr.mxu0 0.0
    %1883 = vmatpush1.msra.mxu0 0.0
    %1884 = vmatprep.subr.mxu0 0.0
    %1885 = vmatpush1.msra.mxu0 0.0
    %1886 = vmatprep.subr.mxu0 0.0
    %1887 = vmatpush1.msra.mxu0 0.0
    %1888 = vmatprep.subr.mxu0 0.0
    %1889 = vmatpush1.msra.mxu0 0.0
    %1890 = vmatprep.subr.mxu0 0.0
    %1891 = vmatpush1.msra.mxu0 0.0
    %1892 = vmatprep.subr.mxu0 0.0
    %1893 = vmatpush1.msra.mxu0 0.0
    %1894 = vmatprep.subr.mxu0 0.0
    %1895 = vmatpush1.msra.mxu0 0.0
    %1896 = vmatprep.subr.mxu0 0.0
    %1897 = vmatpush1.msra.mxu0 0.0
    %1898 = vmatprep.subr.mxu0 0.0
    %1899 = vmatpush1.msra.mxu0 0.0
    %1900 = vmatprep.subr.mxu0 0.0
    %1901 = vmatpush1.msra.mxu0 0.0
    %1902 = vmatprep.subr.mxu0 0.0
    %1903 = vmatpush1.msra.mxu0 0.0
    %1904 = vmatprep.subr.mxu0 0.0
    %1905 = vmatpush1.msra.mxu0 0.0
    %1906 = vmatprep.subr.mxu0 0.0
    %1907 = vmatpush1.msra.mxu0 0.0
    %1908 = vmatprep.subr.mxu0 0.0
    %1909 = vmatpush1.msra.mxu0 0.0
    %1910 = vmatprep.mubr.f32.mxu0 0.0
    %1911 = vmatmul.mubr.f32.gmra.mrb[0].mxu0 %v1838
    %v1912 = vpop.f32.mrb[0].mxu0
    %v1913 = vadd.f32 0.0, %v1912
    %v1914 = vpop.f32.mrb[0].mxu0
    %v1915 = vadd.f32 0.0, %v1914
    %1916 = vdwg.mxu0
    %1917 = vmatprep.subr.mxu0 %v546
    %1918 = vmatpush1.msra.mxu0 %v545
    %1919 = vmatprep.subr.mxu0 %v550
    %1920 = vmatpush1.msra.mxu0 %v549
    %1921 = vmatprep.subr.mxu0 %v554
    %1922 = vmatpush1.msra.mxu0 %v553
    %1923 = vmatprep.subr.mxu0 %v558
    %1924 = vmatpush1.msra.mxu0 %v557
    %1925 = vmatprep.subr.mxu0 %v562
    %1926 = vmatpush1.msra.mxu0 %v561
    %1927 = vmatprep.subr.mxu0 %v566
    %1928 = vmatpush1.msra.mxu0 %v565
    %1929 = vmatprep.subr.mxu0 %v570
    %1930 = vmatpush1.msra.mxu0 %v569
    %1931 = vmatprep.subr.mxu0 %v574
    %1932 = vmatpush1.msra.mxu0 %v573
    %1933 = vmatprep.subr.mxu0 %v578
    %1934 = vmatpush1.msra.mxu0 %v577
    %1935 = vmatprep.subr.mxu0 %v582
    %1936 = vmatpush1.msra.mxu0 %v581
    %1937 = vmatprep.subr.mxu0 %v586
    %1938 = vmatpush1.msra.mxu0 %v585
    %1939 = vmatprep.subr.mxu0 %v590
    %1940 = vmatpush1.msra.mxu0 %v589
    %1941 = vmatprep.subr.mxu0 %v594
    %1942 = vmatpush1.msra.mxu0 %v593
    %1943 = vmatprep.subr.mxu0 %v598
    %1944 = vmatpush1.msra.mxu0 %v597
    %1945 = vmatprep.subr.mxu0 %v602
    %1946 = vmatpush1.msra.mxu0 %v601
    %1947 = vmatprep.subr.mxu0 %v606
    %1948 = vmatpush1.msra.mxu0 %v605
    %1949 = vmatprep.subr.mxu0 0.0
    %1950 = vmatpush1.msra.mxu0 0.0
    %1951 = vmatprep.subr.mxu0 0.0
    %1952 = vmatpush1.msra.mxu0 0.0
    %1953 = vmatprep.subr.mxu0 0.0
    %1954 = vmatpush1.msra.mxu0 0.0
    %1955 = vmatprep.subr.mxu0 0.0
    %1956 = vmatpush1.msra.mxu0 0.0
    %1957 = vmatprep.subr.mxu0 0.0
    %1958 = vmatpush1.msra.mxu0 0.0
    %1959 = vmatprep.subr.mxu0 0.0
    %1960 = vmatpush1.msra.mxu0 0.0
    %1961 = vmatprep.subr.mxu0 0.0
    %1962 = vmatpush1.msra.mxu0 0.0
    %1963 = vmatprep.subr.mxu0 0.0
    %1964 = vmatpush1.msra.mxu0 0.0
    %1965 = vmatprep.subr.mxu0 0.0
    %1966 = vmatpush1.msra.mxu0 0.0
    %1967 = vmatprep.subr.mxu0 0.0
    %1968 = vmatpush1.msra.mxu0 0.0
    %1969 = vmatprep.subr.mxu0 0.0
    %1970 = vmatpush1.msra.mxu0 0.0
    %1971 = vmatprep.subr.mxu0 0.0
    %1972 = vmatpush1.msra.mxu0 0.0
    %1973 = vmatprep.subr.mxu0 0.0
    %1974 = vmatpush1.msra.mxu0 0.0
    %1975 = vmatprep.subr.mxu0 0.0
    %1976 = vmatpush1.msra.mxu0 0.0
    %1977 = vmatprep.subr.mxu0 0.0
    %1978 = vmatpush1.msra.mxu0 0.0
    %1979 = vmatprep.subr.mxu0 0.0
    %1980 = vmatpush1.msra.mxu0 0.0
    %1981 = vmatprep.mubr.f32.mxu0 0.0
    %1982 = vmatmul.mubr.f32.gmra.mrb[0].mxu0 %v1838
    %v1983 = vpop.f32.mrb[0].mxu0
    %v1984 = vadd.f32 0.0, %v1983
    %v1985 = vpop.f32.mrb[0].mxu0
    %v1986 = vadd.f32 0.0, %v1985
    %1987 = vdwg.mxu0
    %v1988 = vadd.f32 %v1842, %v1913
    %v1989 = vadd.f32 %v1843, %v1915
    %v1990 = vadd.f32 %v1844, %v1984
    %v1991 = vadd.f32 %v1845, %v1986
    %v1992 = vxor.u32 %v1988, 2147483648
    %v1993 = vmul.f32 %v1992, 1.442695
    %v1994 = vpow.pop %v1993
    %v1995 = vadd.f32 %v1994, 1.0
    %v1996 = vrcp.pop %v1995
    %v1997 = vmul.f32 1.0, %v1996
    %v1998 = vxor.u32 %v1989, 2147483648
    %v1999 = vmul.f32 %v1998, 1.442695
    %v2000 = vpow.pop %v1999
    %v2001 = vadd.f32 %v2000, 1.0
    %v2002 = vrcp.pop %v2001
    %v2003 = vmul.f32 1.0, %v2002
    %v2004 = vtanh.pop %v1990
    %v2005 = vxor.u32 %v1991, 2147483648
    %v2006 = vmul.f32 %v2005, 1.442695
    %v2007 = vpow.pop %v2006
    %v2008 = vadd.f32 %v2007, 1.0
    %v2009 = vrcp.pop %v2008
    %v2010 = vmul.f32 1.0, %v2009
    %v2011 = vmul.f32 %v2003, %v1836
    %v2012 = vmul.f32 %v1997, %v2004
    %v2013 = vadd.f32 %v2011, %v2012
    %v2014 = vtanh.pop %v2013
    %v2015 = vmul.f32 %v2010, %v2014
    %s2016 = smul.u32 8, 4
    %s2017 = smul.addr %s2016, 8
    %s2018 = scalar_lea.vmem [#allocation2], %s2017
    %v2019 = vld [vmem:[%s2018] sm:$0xff]
    %v2020 = vld [vmem:[%s2018 + $0x8] sm:$0xff]
    %v2021 = vld [vmem:[%s2018 + $0x10] sm:$0xff]
    %v2022 = vld [vmem:[%s2018 + $0x18] sm:$0xff]
    %2023 = vmatprep.subr.mxu0 %v544
    %2024 = vmatpush1.msra.mxu0 %v543
    %2025 = vmatprep.subr.mxu0 %v548
    %2026 = vmatpush1.msra.mxu0 %v547
    %2027 = vmatprep.subr.mxu0 %v552
    %2028 = vmatpush1.msra.mxu0 %v551
    %2029 = vmatprep.subr.mxu0 %v556
    %2030 = vmatpush1.msra.mxu0 %v555
    %2031 = vmatprep.subr.mxu0 %v560
    %2032 = vmatpush1.msra.mxu0 %v559
    %2033 = vmatprep.subr.mxu0 %v564
    %2034 = vmatpush1.msra.mxu0 %v563
    %2035 = vmatprep.subr.mxu0 %v568
    %2036 = vmatpush1.msra.mxu0 %v567
    %2037 = vmatprep.subr.mxu0 %v572
    %2038 = vmatpush1.msra.mxu0 %v571
    %2039 = vmatprep.subr.mxu0 %v576
    %2040 = vmatpush1.msra.mxu0 %v575
    %2041 = vmatprep.subr.mxu0 %v580
    %2042 = vmatpush1.msra.mxu0 %v579
    %2043 = vmatprep.subr.mxu0 %v584
    %2044 = vmatpush1.msra.mxu0 %v583
    %2045 = vmatprep.subr.mxu0 %v588
    %2046 = vmatpush1.msra.mxu0 %v587
    %2047 = vmatprep.subr.mxu0 %v592
    %2048 = vmatpush1.msra.mxu0 %v591
    %2049 = vmatprep.subr.mxu0 %v596
    %2050 = vmatpush1.msra.mxu0 %v595
    %2051 = vmatprep.subr.mxu0 %v600
    %2052 = vmatpush1.msra.mxu0 %v599
    %2053 = vmatprep.subr.mxu0 %v604
    %2054 = vmatpush1.msra.mxu0 %v603
    %2055 = vmatprep.subr.mxu0 0.0
    %2056 = vmatpush1.msra.mxu0 0.0
    %2057 = vmatprep.subr.mxu0 0.0
    %2058 = vmatpush1.msra.mxu0 0.0
    %2059 = vmatprep.subr.mxu0 0.0
    %2060 = vmatpush1.msra.mxu0 0.0
    %2061 = vmatprep.subr.mxu0 0.0
    %2062 = vmatpush1.msra.mxu0 0.0
    %2063 = vmatprep.subr.mxu0 0.0
    %2064 = vmatpush1.msra.mxu0 0.0
    %2065 = vmatprep.subr.mxu0 0.0
    %2066 = vmatpush1.msra.mxu0 0.0
    %2067 = vmatprep.subr.mxu0 0.0
    %2068 = vmatpush1.msra.mxu0 0.0
    %2069 = vmatprep.subr.mxu0 0.0
    %2070 = vmatpush1.msra.mxu0 0.0
    %2071 = vmatprep.subr.mxu0 0.0
    %2072 = vmatpush1.msra.mxu0 0.0
    %2073 = vmatprep.subr.mxu0 0.0
    %2074 = vmatpush1.msra.mxu0 0.0
    %2075 = vmatprep.subr.mxu0 0.0
    %2076 = vmatpush1.msra.mxu0 0.0
    %2077 = vmatprep.subr.mxu0 0.0
    %2078 = vmatpush1.msra.mxu0 0.0
    %2079 = vmatprep.subr.mxu0 0.0
    %2080 = vmatpush1.msra.mxu0 0.0
    %2081 = vmatprep.subr.mxu0 0.0
    %2082 = vmatpush1.msra.mxu0 0.0
    %2083 = vmatprep.subr.mxu0 0.0
    %2084 = vmatpush1.msra.mxu0 0.0
    %2085 = vmatprep.subr.mxu0 0.0
    %2086 = vmatpush1.msra.mxu0 0.0
    %2087 = vmatprep.mubr.f32.mxu0 0.0
    %2088 = vmatmul.mubr.f32.gmra.mrb[0].mxu0 %v2015
    %v2089 = vpop.f32.mrb[0].mxu0
    %v2090 = vadd.f32 0.0, %v2089
    %v2091 = vpop.f32.mrb[0].mxu0
    %v2092 = vadd.f32 0.0, %v2091
    %2093 = vdwg.mxu0
    %2094 = vmatprep.subr.mxu0 %v546
    %2095 = vmatpush1.msra.mxu0 %v545
    %2096 = vmatprep.subr.mxu0 %v550
    %2097 = vmatpush1.msra.mxu0 %v549
    %2098 = vmatprep.subr.mxu0 %v554
    %2099 = vmatpush1.msra.mxu0 %v553
    %2100 = vmatprep.subr.mxu0 %v558
    %2101 = vmatpush1.msra.mxu0 %v557
    %2102 = vmatprep.subr.mxu0 %v562
    %2103 = vmatpush1.msra.mxu0 %v561
    %2104 = vmatprep.subr.mxu0 %v566
    %2105 = vmatpush1.msra.mxu0 %v565
    %2106 = vmatprep.subr.mxu0 %v570
    %2107 = vmatpush1.msra.mxu0 %v569
    %2108 = vmatprep.subr.mxu0 %v574
    %2109 = vmatpush1.msra.mxu0 %v573
    %2110 = vmatprep.subr.mxu0 %v578
    %2111 = vmatpush1.msra.mxu0 %v577
    %2112 = vmatprep.subr.mxu0 %v582
    %2113 = vmatpush1.msra.mxu0 %v581
    %2114 = vmatprep.subr.mxu0 %v586
    %2115 = vmatpush1.msra.mxu0 %v585
    %2116 = vmatprep.subr.mxu0 %v590
    %2117 = vmatpush1.msra.mxu0 %v589
    %2118 = vmatprep.subr.mxu0 %v594
    %2119 = vmatpush1.msra.mxu0 %v593
    %2120 = vmatprep.subr.mxu0 %v598
    %2121 = vmatpush1.msra.mxu0 %v597
    %2122 = vmatprep.subr.mxu0 %v602
    %2123 = vmatpush1.msra.mxu0 %v601
    %2124 = vmatprep.subr.mxu0 %v606
    %2125 = vmatpush1.msra.mxu0 %v605
    %2126 = vmatprep.subr.mxu0 0.0
    %2127 = vmatpush1.msra.mxu0 0.0
    %2128 = vmatprep.subr.mxu0 0.0
    %2129 = vmatpush1.msra.mxu0 0.0
    %2130 = vmatprep.subr.mxu0 0.0
    %2131 = vmatpush1.msra.mxu0 0.0
    %2132 = vmatprep.subr.mxu0 0.0
    %2133 = vmatpush1.msra.mxu0 0.0
    %2134 = vmatprep.subr.mxu0 0.0
    %2135 = vmatpush1.msra.mxu0 0.0
    %2136 = vmatprep.subr.mxu0 0.0
    %2137 = vmatpush1.msra.mxu0 0.0
    %2138 = vmatprep.subr.mxu0 0.0
    %2139 = vmatpush1.msra.mxu0 0.0
    %2140 = vmatprep.subr.mxu0 0.0
    %2141 = vmatpush1.msra.mxu0 0.0
    %2142 = vmatprep.subr.mxu0 0.0
    %2143 = vmatpush1.msra.mxu0 0.0
    %2144 = vmatprep.subr.mxu0 0.0
    %2145 = vmatpush1.msra.mxu0 0.0
    %2146 = vmatprep.subr.mxu0 0.0
    %2147 = vmatpush1.msra.mxu0 0.0
    %2148 = vmatprep.subr.mxu0 0.0
    %2149 = vmatpush1.msra.mxu0 0.0
    %2150 = vmatprep.subr.mxu0 0.0
    %2151 = vmatpush1.msra.mxu0 0.0
    %2152 = vmatprep.subr.mxu0 0.0
    %2153 = vmatpush1.msra.mxu0 0.0
    %2154 = vmatprep.subr.mxu0 0.0
    %2155 = vmatpush1.msra.mxu0 0.0
    %2156 = vmatprep.subr.mxu0 0.0
    %2157 = vmatpush1.msra.mxu0 0.0
    %2158 = vmatprep.mubr.f32.mxu0 0.0
    %2159 = vmatmul.mubr.f32.gmra.mrb[0].mxu0 %v2015
    %v2160 = vpop.f32.mrb[0].mxu0
    %v2161 = vadd.f32 0.0, %v2160
    %v2162 = vpop.f32.mrb[0].mxu0
    %v2163 = vadd.f32 0.0, %v2162
    %2164 = vdwg.mxu0
    %v2165 = vadd.f32 %v2019, %v2090
    %v2166 = vadd.f32 %v2020, %v2092
    %v2167 = vadd.f32 %v2021, %v2161
    %v2168 = vadd.f32 %v2022, %v2163
    %v2169 = vxor.u32 %v2165, 2147483648
    %v2170 = vmul.f32 %v2169, 1.442695
    %v2171 = vpow.pop %v2170
    %v2172 = vadd.f32 %v2171, 1.0
    %v2173 = vrcp.pop %v2172
    %v2174 = vmul.f32 1.0, %v2173
    %v2175 = vxor.u32 %v2166, 2147483648
    %v2176 = vmul.f32 %v2175, 1.442695
    %v2177 = vpow.pop %v2176
    %v2178 = vadd.f32 %v2177, 1.0
    %v2179 = vrcp.pop %v2178
    %v2180 = vmul.f32 1.0, %v2179
    %v2181 = vtanh.pop %v2167
    %v2182 = vxor.u32 %v2168, 2147483648
    %v2183 = vmul.f32 %v2182, 1.442695
    %v2184 = vpow.pop %v2183
    %v2185 = vadd.f32 %v2184, 1.0
    %v2186 = vrcp.pop %v2185
    %v2187 = vmul.f32 1.0, %v2186
    %v2188 = vmul.f32 %v2180, %v2013
    %v2189 = vmul.f32 %v2174, %v2181
    %v2190 = vadd.f32 %v2188, %v2189
    %v2191 = vtanh.pop %v2190
    %v2192 = vmul.f32 %v2187, %v2191
    %s2193 = smul.u32 9, 4
    %s2194 = smul.addr %s2193, 8
    %s2195 = scalar_lea.vmem [#allocation2], %s2194
    %v2196 = vld [vmem:[%s2195] sm:$0xff]
    %v2197 = vld [vmem:[%s2195 + $0x8] sm:$0xff]
    %v2198 = vld [vmem:[%s2195 + $0x10] sm:$0xff]
    %v2199 = vld [vmem:[%s2195 + $0x18] sm:$0xff]
    %2200 = vmatprep.subr.mxu0 %v544
    %2201 = vmatpush1.msra.mxu0 %v543
    %2202 = vmatprep.subr.mxu0 %v548
    %2203 = vmatpush1.msra.mxu0 %v547
    %2204 = vmatprep.subr.mxu0 %v552
    %2205 = vmatpush1.msra.mxu0 %v551
    %2206 = vmatprep.subr.mxu0 %v556
    %2207 = vmatpush1.msra.mxu0 %v555
    %2208 = vmatprep.subr.mxu0 %v560
    %2209 = vmatpush1.msra.mxu0 %v559
    %2210 = vmatprep.subr.mxu0 %v564
    %2211 = vmatpush1.msra.mxu0 %v563
    %2212 = vmatprep.subr.mxu0 %v568
    %2213 = vmatpush1.msra.mxu0 %v567
    %2214 = vmatprep.subr.mxu0 %v572
    %2215 = vmatpush1.msra.mxu0 %v571
    %2216 = vmatprep.subr.mxu0 %v576
    %2217 = vmatpush1.msra.mxu0 %v575
    %2218 = vmatprep.subr.mxu0 %v580
    %2219 = vmatpush1.msra.mxu0 %v579
    %2220 = vmatprep.subr.mxu0 %v584
    %2221 = vmatpush1.msra.mxu0 %v583
    %2222 = vmatprep.subr.mxu0 %v588
    %2223 = vmatpush1.msra.mxu0 %v587
    %2224 = vmatprep.subr.mxu0 %v592
    %2225 = vmatpush1.msra.mxu0 %v591
    %2226 = vmatprep.subr.mxu0 %v596
    %2227 = vmatpush1.msra.mxu0 %v595
    %2228 = vmatprep.subr.mxu0 %v600
    %2229 = vmatpush1.msra.mxu0 %v599
    %2230 = vmatprep.subr.mxu0 %v604
    %2231 = vmatpush1.msra.mxu0 %v603
    %2232 = vmatprep.subr.mxu0 0.0
    %2233 = vmatpush1.msra.mxu0 0.0
    %2234 = vmatprep.subr.mxu0 0.0
    %2235 = vmatpush1.msra.mxu0 0.0
    %2236 = vmatprep.subr.mxu0 0.0
    %2237 = vmatpush1.msra.mxu0 0.0
    %2238 = vmatprep.subr.mxu0 0.0
    %2239 = vmatpush1.msra.mxu0 0.0
    %2240 = vmatprep.subr.mxu0 0.0
    %2241 = vmatpush1.msra.mxu0 0.0
    %2242 = vmatprep.subr.mxu0 0.0
    %2243 = vmatpush1.msra.mxu0 0.0
    %2244 = vmatprep.subr.mxu0 0.0
    %2245 = vmatpush1.msra.mxu0 0.0
    %2246 = vmatprep.subr.mxu0 0.0
    %2247 = vmatpush1.msra.mxu0 0.0
    %2248 = vmatprep.subr.mxu0 0.0
    %2249 = vmatpush1.msra.mxu0 0.0
    %2250 = vmatprep.subr.mxu0 0.0
    %2251 = vmatpush1.msra.mxu0 0.0
    %2252 = vmatprep.subr.mxu0 0.0
    %2253 = vmatpush1.msra.mxu0 0.0
    %2254 = vmatprep.subr.mxu0 0.0
    %2255 = vmatpush1.msra.mxu0 0.0
    %2256 = vmatprep.subr.mxu0 0.0
    %2257 = vmatpush1.msra.mxu0 0.0
    %2258 = vmatprep.subr.mxu0 0.0
    %2259 = vmatpush1.msra.mxu0 0.0
    %2260 = vmatprep.subr.mxu0 0.0
    %2261 = vmatpush1.msra.mxu0 0.0
    %2262 = vmatprep.subr.mxu0 0.0
    %2263 = vmatpush1.msra.mxu0 0.0
    %2264 = vmatprep.mubr.f32.mxu0 0.0
    %2265 = vmatmul.mubr.f32.gmra.mrb[0].mxu0 %v2192
    %v2266 = vpop.f32.mrb[0].mxu0
    %v2267 = vadd.f32 0.0, %v2266
    %v2268 = vpop.f32.mrb[0].mxu0
    %v2269 = vadd.f32 0.0, %v2268
    %2270 = vdwg.mxu0
    %2271 = vmatprep.subr.mxu0 %v546
    %2272 = vmatpush1.msra.mxu0 %v545
    %2273 = vmatprep.subr.mxu0 %v550
    %2274 = vmatpush1.msra.mxu0 %v549
    %2275 = vmatprep.subr.mxu0 %v554
    %2276 = vmatpush1.msra.mxu0 %v553
    %2277 = vmatprep.subr.mxu0 %v558
    %2278 = vmatpush1.msra.mxu0 %v557
    %2279 = vmatprep.subr.mxu0 %v562
    %2280 = vmatpush1.msra.mxu0 %v561
    %2281 = vmatprep.subr.mxu0 %v566
    %2282 = vmatpush1.msra.mxu0 %v565
    %2283 = vmatprep.subr.mxu0 %v570
    %2284 = vmatpush1.msra.mxu0 %v569
    %2285 = vmatprep.subr.mxu0 %v574
    %2286 = vmatpush1.msra.mxu0 %v573
    %2287 = vmatprep.subr.mxu0 %v578
    %2288 = vmatpush1.msra.mxu0 %v577
    %2289 = vmatprep.subr.mxu0 %v582
    %2290 = vmatpush1.msra.mxu0 %v581
    %2291 = vmatprep.subr.mxu0 %v586
    %2292 = vmatpush1.msra.mxu0 %v585
    %2293 = vmatprep.subr.mxu0 %v590
    %2294 = vmatpush1.msra.mxu0 %v589
    %2295 = vmatprep.subr.mxu0 %v594
    %2296 = vmatpush1.msra.mxu0 %v593
    %2297 = vmatprep.subr.mxu0 %v598
    %2298 = vmatpush1.msra.mxu0 %v597
    %2299 = vmatprep.subr.mxu0 %v602
    %2300 = vmatpush1.msra.mxu0 %v601
    %2301 = vmatprep.subr.mxu0 %v606
    %2302 = vmatpush1.msra.mxu0 %v605
    %2303 = vmatprep.subr.mxu0 0.0
    %2304 = vmatpush1.msra.mxu0 0.0
    %2305 = vmatprep.subr.mxu0 0.0
    %2306 = vmatpush1.msra.mxu0 0.0
    %2307 = vmatprep.subr.mxu0 0.0
    %2308 = vmatpush1.msra.mxu0 0.0
    %2309 = vmatprep.subr.mxu0 0.0
    %2310 = vmatpush1.msra.mxu0 0.0
    %2311 = vmatprep.subr.mxu0 0.0
    %2312 = vmatpush1.msra.mxu0 0.0
    %2313 = vmatprep.subr.mxu0 0.0
    %2314 = vmatpush1.msra.mxu0 0.0
    %2315 = vmatprep.subr.mxu0 0.0
    %2316 = vmatpush1.msra.mxu0 0.0
    %2317 = vmatprep.subr.mxu0 0.0
    %2318 = vmatpush1.msra.mxu0 0.0
    %2319 = vmatprep.subr.mxu0 0.0
    %2320 = vmatpush1.msra.mxu0 0.0
    %2321 = vmatprep.subr.mxu0 0.0
    %2322 = vmatpush1.msra.mxu0 0.0
    %2323 = vmatprep.subr.mxu0 0.0
    %2324 = vmatpush1.msra.mxu0 0.0
    %2325 = vmatprep.subr.mxu0 0.0
    %2326 = vmatpush1.msra.mxu0 0.0
    %2327 = vmatprep.subr.mxu0 0.0
    %2328 = vmatpush1.msra.mxu0 0.0
    %2329 = vmatprep.subr.mxu0 0.0
    %2330 = vmatpush1.msra.mxu0 0.0
    %2331 = vmatprep.subr.mxu0 0.0
    %2332 = vmatpush1.msra.mxu0 0.0
    %2333 = vmatprep.subr.mxu0 0.0
    %2334 = vmatpush1.msra.mxu0 0.0
    %2335 = vmatprep.mubr.f32.mxu0 0.0
    %2336 = vmatmul.mubr.f32.gmra.mrb[0].mxu0 %v2192
    %v2337 = vpop.f32.mrb[0].mxu0
    %v2338 = vadd.f32 0.0, %v2337
    %v2339 = vpop.f32.mrb[0].mxu0
    %v2340 = vadd.f32 0.0, %v2339
    %2341 = vdwg.mxu0
    %v2342 = vadd.f32 %v2196, %v2267
    %v2343 = vadd.f32 %v2197, %v2269
    %v2344 = vadd.f32 %v2198, %v2338
    %v2345 = vadd.f32 %v2199, %v2340
    %v2346 = vxor.u32 %v2342, 2147483648
    %v2347 = vmul.f32 %v2346, 1.442695
    %v2348 = vpow.pop %v2347
    %v2349 = vadd.f32 %v2348, 1.0
    %v2350 = vrcp.pop %v2349
    %v2351 = vmul.f32 1.0, %v2350
    %v2352 = vxor.u32 %v2343, 2147483648
    %v2353 = vmul.f32 %v2352, 1.442695
    %v2354 = vpow.pop %v2353
    %v2355 = vadd.f32 %v2354, 1.0
    %v2356 = vrcp.pop %v2355
    %v2357 = vmul.f32 1.0, %v2356
    %v2358 = vtanh.pop %v2344
    %v2359 = vxor.u32 %v2345, 2147483648
    %v2360 = vmul.f32 %v2359, 1.442695
    %v2361 = vpow.pop %v2360
    %v2362 = vadd.f32 %v2361, 1.0
    %v2363 = vrcp.pop %v2362
    %v2364 = vmul.f32 1.0, %v2363
    %v2365 = vmul.f32 %v2357, %v2190
    %v2366 = vmul.f32 %v2351, %v2358
    %v2367 = vadd.f32 %v2365, %v2366
    %v2368 = vtanh.pop %v2367
    %v2369 = vmul.f32 %v2364, %v2368
    %s2370 = smul.u32 10, 4
    %s2371 = smul.addr %s2370, 8
    %s2372 = scalar_lea.vmem [#allocation2], %s2371
    %v2373 = vld [vmem:[%s2372] sm:$0xff]
    %v2374 = vld [vmem:[%s2372 + $0x8] sm:$0xff]
    %v2375 = vld [vmem:[%s2372 + $0x10] sm:$0xff]
    %v2376 = vld [vmem:[%s2372 + $0x18] sm:$0xff]
    %2377 = vmatprep.subr.mxu0 %v544
    %2378 = vmatpush1.msra.mxu0 %v543
    %2379 = vmatprep.subr.mxu0 %v548
    %2380 = vmatpush1.msra.mxu0 %v547
    %2381 = vmatprep.subr.mxu0 %v552
    %2382 = vmatpush1.msra.mxu0 %v551
    %2383 = vmatprep.subr.mxu0 %v556
    %2384 = vmatpush1.msra.mxu0 %v555
    %2385 = vmatprep.subr.mxu0 %v560
    %2386 = vmatpush1.msra.mxu0 %v559
    %2387 = vmatprep.subr.mxu0 %v564
    %2388 = vmatpush1.msra.mxu0 %v563
    %2389 = vmatprep.subr.mxu0 %v568
    %2390 = vmatpush1.msra.mxu0 %v567
    %2391 = vmatprep.subr.mxu0 %v572
    %2392 = vmatpush1.msra.mxu0 %v571
    %2393 = vmatprep.subr.mxu0 %v576
    %2394 = vmatpush1.msra.mxu0 %v575
    %2395 = vmatprep.subr.mxu0 %v580
    %2396 = vmatpush1.msra.mxu0 %v579
    %2397 = vmatprep.subr.mxu0 %v584
    %2398 = vmatpush1.msra.mxu0 %v583
    %2399 = vmatprep.subr.mxu0 %v588
    %2400 = vmatpush1.msra.mxu0 %v587
    %2401 = vmatprep.subr.mxu0 %v592
    %2402 = vmatpush1.msra.mxu0 %v591
    %2403 = vmatprep.subr.mxu0 %v596
    %2404 = vmatpush1.msra.mxu0 %v595
    %2405 = vmatprep.subr.mxu0 %v600
    %2406 = vmatpush1.msra.mxu0 %v599
    %2407 = vmatprep.subr.mxu0 %v604
    %2408 = vmatpush1.msra.mxu0 %v603
    %2409 = vmatprep.subr.mxu0 0.0
    %2410 = vmatpush1.msra.mxu0 0.0
    %2411 = vmatprep.subr.mxu0 0.0
    %2412 = vmatpush1.msra.mxu0 0.0
    %2413 = vmatprep.subr.mxu0 0.0
    %2414 = vmatpush1.msra.mxu0 0.0
    %2415 = vmatprep.subr.mxu0 0.0
    %2416 = vmatpush1.msra.mxu0 0.0
    %2417 = vmatprep.subr.mxu0 0.0
    %2418 = vmatpush1.msra.mxu0 0.0
    %2419 = vmatprep.subr.mxu0 0.0
    %2420 = vmatpush1.msra.mxu0 0.0
    %2421 = vmatprep.subr.mxu0 0.0
    %2422 = vmatpush1.msra.mxu0 0.0
    %2423 = vmatprep.subr.mxu0 0.0
    %2424 = vmatpush1.msra.mxu0 0.0
    %2425 = vmatprep.subr.mxu0 0.0
    %2426 = vmatpush1.msra.mxu0 0.0
    %2427 = vmatprep.subr.mxu0 0.0
    %2428 = vmatpush1.msra.mxu0 0.0
    %2429 = vmatprep.subr.mxu0 0.0
    %2430 = vmatpush1.msra.mxu0 0.0
    %2431 = vmatprep.subr.mxu0 0.0
    %2432 = vmatpush1.msra.mxu0 0.0
    %2433 = vmatprep.subr.mxu0 0.0
    %2434 = vmatpush1.msra.mxu0 0.0
    %2435 = vmatprep.subr.mxu0 0.0
    %2436 = vmatpush1.msra.mxu0 0.0
    %2437 = vmatprep.subr.mxu0 0.0
    %2438 = vmatpush1.msra.mxu0 0.0
    %2439 = vmatprep.subr.mxu0 0.0
    %2440 = vmatpush1.msra.mxu0 0.0
    %2441 = vmatprep.mubr.f32.mxu0 0.0
    %2442 = vmatmul.mubr.f32.gmra.mrb[0].mxu0 %v2369
    %v2443 = vpop.f32.mrb[0].mxu0
    %v2444 = vadd.f32 0.0, %v2443
    %v2445 = vpop.f32.mrb[0].mxu0
    %v2446 = vadd.f32 0.0, %v2445
    %2447 = vdwg.mxu0
    %2448 = vmatprep.subr.mxu0 %v546
    %2449 = vmatpush1.msra.mxu0 %v545
    %2450 = vmatprep.subr.mxu0 %v550
    %2451 = vmatpush1.msra.mxu0 %v549
    %2452 = vmatprep.subr.mxu0 %v554
    %2453 = vmatpush1.msra.mxu0 %v553
    %2454 = vmatprep.subr.mxu0 %v558
    %2455 = vmatpush1.msra.mxu0 %v557
    %2456 = vmatprep.subr.mxu0 %v562
    %2457 = vmatpush1.msra.mxu0 %v561
    %2458 = vmatprep.subr.mxu0 %v566
    %2459 = vmatpush1.msra.mxu0 %v565
    %2460 = vmatprep.subr.mxu0 %v570
    %2461 = vmatpush1.msra.mxu0 %v569
    %2462 = vmatprep.subr.mxu0 %v574
    %2463 = vmatpush1.msra.mxu0 %v573
    %2464 = vmatprep.subr.mxu0 %v578
    %2465 = vmatpush1.msra.mxu0 %v577
    %2466 = vmatprep.subr.mxu0 %v582
    %2467 = vmatpush1.msra.mxu0 %v581
    %2468 = vmatprep.subr.mxu0 %v586
    %2469 = vmatpush1.msra.mxu0 %v585
    %2470 = vmatprep.subr.mxu0 %v590
    %2471 = vmatpush1.msra.mxu0 %v589
    %2472 = vmatprep.subr.mxu0 %v594
    %2473 = vmatpush1.msra.mxu0 %v593
    %2474 = vmatprep.subr.mxu0 %v598
    %2475 = vmatpush1.msra.mxu0 %v597
    %2476 = vmatprep.subr.mxu0 %v602
    %2477 = vmatpush1.msra.mxu0 %v601
    %2478 = vmatprep.subr.mxu0 %v606
    %2479 = vmatpush1.msra.mxu0 %v605
    %2480 = vmatprep.subr.mxu0 0.0
    %2481 = vmatpush1.msra.mxu0 0.0
    %2482 = vmatprep.subr.mxu0 0.0
    %2483 = vmatpush1.msra.mxu0 0.0
    %2484 = vmatprep.subr.mxu0 0.0
    %2485 = vmatpush1.msra.mxu0 0.0
    %2486 = vmatprep.subr.mxu0 0.0
    %2487 = vmatpush1.msra.mxu0 0.0
    %2488 = vmatprep.subr.mxu0 0.0
    %2489 = vmatpush1.msra.mxu0 0.0
    %2490 = vmatprep.subr.mxu0 0.0
    %2491 = vmatpush1.msra.mxu0 0.0
    %2492 = vmatprep.subr.mxu0 0.0
    %2493 = vmatpush1.msra.mxu0 0.0
    %2494 = vmatprep.subr.mxu0 0.0
    %2495 = vmatpush1.msra.mxu0 0.0
    %2496 = vmatprep.subr.mxu0 0.0
    %2497 = vmatpush1.msra.mxu0 0.0
    %2498 = vmatprep.subr.mxu0 0.0
    %2499 = vmatpush1.msra.mxu0 0.0
    %2500 = vmatprep.subr.mxu0 0.0
    %2501 = vmatpush1.msra.mxu0 0.0
    %2502 = vmatprep.subr.mxu0 0.0
    %2503 = vmatpush1.msra.mxu0 0.0
    %2504 = vmatprep.subr.mxu0 0.0
    %2505 = vmatpush1.msra.mxu0 0.0
    %2506 = vmatprep.subr.mxu0 0.0
    %2507 = vmatpush1.msra.mxu0 0.0
    %2508 = vmatprep.subr.mxu0 0.0
    %2509 = vmatpush1.msra.mxu0 0.0
    %2510 = vmatprep.subr.mxu0 0.0
    %2511 = vmatpush1.msra.mxu0 0.0
    %2512 = vmatprep.mubr.f32.mxu0 0.0
    %2513 = vmatmul.mubr.f32.gmra.mrb[0].mxu0 %v2369
    %v2514 = vpop.f32.mrb[0].mxu0
    %v2515 = vadd.f32 0.0, %v2514
    %v2516 = vpop.f32.mrb[0].mxu0
    %v2517 = vadd.f32 0.0, %v2516
    %2518 = vdwg.mxu0
    %v2519 = vadd.f32 %v2373, %v2444
    %v2520 = vadd.f32 %v2374, %v2446
    %v2521 = vadd.f32 %v2375, %v2515
    %v2522 = vadd.f32 %v2376, %v2517
    %v2523 = vxor.u32 %v2519, 2147483648
    %v2524 = vmul.f32 %v2523, 1.442695
    %v2525 = vpow.pop %v2524
    %v2526 = vadd.f32 %v2525, 1.0
    %v2527 = vrcp.pop %v2526
    %v2528 = vmul.f32 1.0, %v2527
    %v2529 = vxor.u32 %v2520, 2147483648
    %v2530 = vmul.f32 %v2529, 1.442695
    %v2531 = vpow.pop %v2530
    %v2532 = vadd.f32 %v2531, 1.0
    %v2533 = vrcp.pop %v2532
    %v2534 = vmul.f32 1.0, %v2533
    %v2535 = vtanh.pop %v2521
    %v2536 = vxor.u32 %v2522, 2147483648
    %v2537 = vmul.f32 %v2536, 1.442695
    %v2538 = vpow.pop %v2537
    %v2539 = vadd.f32 %v2538, 1.0
    %v2540 = vrcp.pop %v2539
    %v2541 = vmul.f32 1.0, %v2540
    %v2542 = vmul.f32 %v2534, %v2367
    %v2543 = vmul.f32 %v2528, %v2535
    %v2544 = vadd.f32 %v2542, %v2543
    %v2545 = vtanh.pop %v2544
    %v2546 = vmul.f32 %v2541, %v2545
    %s2547 = smul.u32 11, 4
    %s2548 = smul.addr %s2547, 8
    %s2549 = scalar_lea.vmem [#allocation2], %s2548
    %v2550 = vld [vmem:[%s2549] sm:$0xff]
    %v2551 = vld [vmem:[%s2549 + $0x8] sm:$0xff]
    %v2552 = vld [vmem:[%s2549 + $0x10] sm:$0xff]
    %v2553 = vld [vmem:[%s2549 + $0x18] sm:$0xff]
    %2554 = vmatprep.subr.mxu0 %v544
    %2555 = vmatpush1.msra.mxu0 %v543
    %2556 = vmatprep.subr.mxu0 %v548
    %2557 = vmatpush1.msra.mxu0 %v547
    %2558 = vmatprep.subr.mxu0 %v552
    %2559 = vmatpush1.msra.mxu0 %v551
    %2560 = vmatprep.subr.mxu0 %v556
    %2561 = vmatpush1.msra.mxu0 %v555
    %2562 = vmatprep.subr.mxu0 %v560
    %2563 = vmatpush1.msra.mxu0 %v559
    %2564 = vmatprep.subr.mxu0 %v564
    %2565 = vmatpush1.msra.mxu0 %v563
    %2566 = vmatprep.subr.mxu0 %v568
    %2567 = vmatpush1.msra.mxu0 %v567
    %2568 = vmatprep.subr.mxu0 %v572
    %2569 = vmatpush1.msra.mxu0 %v571
    %2570 = vmatprep.subr.mxu0 %v576
    %2571 = vmatpush1.msra.mxu0 %v575
    %2572 = vmatprep.subr.mxu0 %v580
    %2573 = vmatpush1.msra.mxu0 %v579
    %2574 = vmatprep.subr.mxu0 %v584
    %2575 = vmatpush1.msra.mxu0 %v583
    %2576 = vmatprep.subr.mxu0 %v588
    %2577 = vmatpush1.msra.mxu0 %v587
    %2578 = vmatprep.subr.mxu0 %v592
    %2579 = vmatpush1.msra.mxu0 %v591
    %2580 = vmatprep.subr.mxu0 %v596
    %2581 = vmatpush1.msra.mxu0 %v595
    %2582 = vmatprep.subr.mxu0 %v600
    %2583 = vmatpush1.msra.mxu0 %v599
    %2584 = vmatprep.subr.mxu0 %v604
    %2585 = vmatpush1.msra.mxu0 %v603
    %2586 = vmatprep.subr.mxu0 0.0
    %2587 = vmatpush1.msra.mxu0 0.0
    %2588 = vmatprep.subr.mxu0 0.0
    %2589 = vmatpush1.msra.mxu0 0.0
    %2590 = vmatprep.subr.mxu0 0.0
    %2591 = vmatpush1.msra.mxu0 0.0
    %2592 = vmatprep.subr.mxu0 0.0
    %2593 = vmatpush1.msra.mxu0 0.0
    %2594 = vmatprep.subr.mxu0 0.0
    %2595 = vmatpush1.msra.mxu0 0.0
    %2596 = vmatprep.subr.mxu0 0.0
    %2597 = vmatpush1.msra.mxu0 0.0
    %2598 = vmatprep.subr.mxu0 0.0
    %2599 = vmatpush1.msra.mxu0 0.0
    %2600 = vmatprep.subr.mxu0 0.0
    %2601 = vmatpush1.msra.mxu0 0.0
    %2602 = vmatprep.subr.mxu0 0.0
    %2603 = vmatpush1.msra.mxu0 0.0
    %2604 = vmatprep.subr.mxu0 0.0
    %2605 = vmatpush1.msra.mxu0 0.0
    %2606 = vmatprep.subr.mxu0 0.0
    %2607 = vmatpush1.msra.mxu0 0.0
    %2608 = vmatprep.subr.mxu0 0.0
    %2609 = vmatpush1.msra.mxu0 0.0
    %2610 = vmatprep.subr.mxu0 0.0
    %2611 = vmatpush1.msra.mxu0 0.0
    %2612 = vmatprep.subr.mxu0 0.0
    %2613 = vmatpush1.msra.mxu0 0.0
    %2614 = vmatprep.subr.mxu0 0.0
    %2615 = vmatpush1.msra.mxu0 0.0
    %2616 = vmatprep.subr.mxu0 0.0
    %2617 = vmatpush1.msra.mxu0 0.0
    %2618 = vmatprep.mubr.f32.mxu0 0.0
    %2619 = vmatmul.mubr.f32.gmra.mrb[0].mxu0 %v2546
    %v2620 = vpop.f32.mrb[0].mxu0
    %v2621 = vadd.f32 0.0, %v2620
    %v2622 = vpop.f32.mrb[0].mxu0
    %v2623 = vadd.f32 0.0, %v2622
    %2624 = vdwg.mxu0
    %2625 = vmatprep.subr.mxu0 %v546
    %2626 = vmatpush1.msra.mxu0 %v545
    %2627 = vmatprep.subr.mxu0 %v550
    %2628 = vmatpush1.msra.mxu0 %v549
    %2629 = vmatprep.subr.mxu0 %v554
    %2630 = vmatpush1.msra.mxu0 %v553
    %2631 = vmatprep.subr.mxu0 %v558
    %2632 = vmatpush1.msra.mxu0 %v557
    %2633 = vmatprep.subr.mxu0 %v562
    %2634 = vmatpush1.msra.mxu0 %v561
    %2635 = vmatprep.subr.mxu0 %v566
    %2636 = vmatpush1.msra.mxu0 %v565
    %2637 = vmatprep.subr.mxu0 %v570
    %2638 = vmatpush1.msra.mxu0 %v569
    %2639 = vmatprep.subr.mxu0 %v574
    %2640 = vmatpush1.msra.mxu0 %v573
    %2641 = vmatprep.subr.mxu0 %v578
    %2642 = vmatpush1.msra.mxu0 %v577
    %2643 = vmatprep.subr.mxu0 %v582
    %2644 = vmatpush1.msra.mxu0 %v581
    %2645 = vmatprep.subr.mxu0 %v586
    %2646 = vmatpush1.msra.mxu0 %v585
    %2647 = vmatprep.subr.mxu0 %v590
    %2648 = vmatpush1.msra.mxu0 %v589
    %2649 = vmatprep.subr.mxu0 %v594
    %2650 = vmatpush1.msra.mxu0 %v593
    %2651 = vmatprep.subr.mxu0 %v598
    %2652 = vmatpush1.msra.mxu0 %v597
    %2653 = vmatprep.subr.mxu0 %v602
    %2654 = vmatpush1.msra.mxu0 %v601
    %2655 = vmatprep.subr.mxu0 %v606
    %2656 = vmatpush1.msra.mxu0 %v605
    %2657 = vmatprep.subr.mxu0 0.0
    %2658 = vmatpush1.msra.mxu0 0.0
    %2659 = vmatprep.subr.mxu0 0.0
    %2660 = vmatpush1.msra.mxu0 0.0
    %2661 = vmatprep.subr.mxu0 0.0
    %2662 = vmatpush1.msra.mxu0 0.0
    %2663 = vmatprep.subr.mxu0 0.0
    %2664 = vmatpush1.msra.mxu0 0.0
    %2665 = vmatprep.subr.mxu0 0.0
    %2666 = vmatpush1.msra.mxu0 0.0
    %2667 = vmatprep.subr.mxu0 0.0
    %2668 = vmatpush1.msra.mxu0 0.0
    %2669 = vmatprep.subr.mxu0 0.0
    %2670 = vmatpush1.msra.mxu0 0.0
    %2671 = vmatprep.subr.mxu0 0.0
    %2672 = vmatpush1.msra.mxu0 0.0
    %2673 = vmatprep.subr.mxu0 0.0
    %2674 = vmatpush1.msra.mxu0 0.0
    %2675 = vmatprep.subr.mxu0 0.0
    %2676 = vmatpush1.msra.mxu0 0.0
    %2677 = vmatprep.subr.mxu0 0.0
    %2678 = vmatpush1.msra.mxu0 0.0
    %2679 = vmatprep.subr.mxu0 0.0
    %2680 = vmatpush1.msra.mxu0 0.0
    %2681 = vmatprep.subr.mxu0 0.0
    %2682 = vmatpush1.msra.mxu0 0.0
    %2683 = vmatprep.subr.mxu0 0.0
    %2684 = vmatpush1.msra.mxu0 0.0
    %2685 = vmatprep.subr.mxu0 0.0
    %2686 = vmatpush1.msra.mxu0 0.0
    %2687 = vmatprep.subr.mxu0 0.0
    %2688 = vmatpush1.msra.mxu0 0.0
    %2689 = vmatprep.mubr.f32.mxu0 0.0
    %2690 = vmatmul.mubr.f32.gmra.mrb[0].mxu0 %v2546
    %v2691 = vpop.f32.mrb[0].mxu0
    %v2692 = vadd.f32 0.0, %v2691
    %v2693 = vpop.f32.mrb[0].mxu0
    %v2694 = vadd.f32 0.0, %v2693
    %2695 = vdwg.mxu0
    %v2696 = vadd.f32 %v2550, %v2621
    %v2697 = vadd.f32 %v2551, %v2623
    %v2698 = vadd.f32 %v2552, %v2692
    %v2699 = vadd.f32 %v2553, %v2694
    %v2700 = vxor.u32 %v2696, 2147483648
    %v2701 = vmul.f32 %v2700, 1.442695
    %v2702 = vpow.pop %v2701
    %v2703 = vadd.f32 %v2702, 1.0
    %v2704 = vrcp.pop %v2703
    %v2705 = vmul.f32 1.0, %v2704
    %v2706 = vxor.u32 %v2697, 2147483648
    %v2707 = vmul.f32 %v2706, 1.442695
    %v2708 = vpow.pop %v2707
    %v2709 = vadd.f32 %v2708, 1.0
    %v2710 = vrcp.pop %v2709
    %v2711 = vmul.f32 1.0, %v2710
    %v2712 = vtanh.pop %v2698
    %v2713 = vxor.u32 %v2699, 2147483648
    %v2714 = vmul.f32 %v2713, 1.442695
    %v2715 = vpow.pop %v2714
    %v2716 = vadd.f32 %v2715, 1.0
    %v2717 = vrcp.pop %v2716
    %v2718 = vmul.f32 1.0, %v2717
    %v2719 = vmul.f32 %v2711, %v2544
    %v2720 = vmul.f32 %v2705, %v2712
    %v2721 = vadd.f32 %v2719, %v2720
    %v2722 = vtanh.pop %v2721
    %v2723 = vmul.f32 %v2718, %v2722
    %s2724 = smul.u32 12, 4
    %s2725 = smul.addr %s2724, 8
    %s2726 = scalar_lea.vmem [#allocation2], %s2725
    %v2727 = vld [vmem:[%s2726] sm:$0xff]
    %v2728 = vld [vmem:[%s2726 + $0x8] sm:$0xff]
    %v2729 = vld [vmem:[%s2726 + $0x10] sm:$0xff]
    %v2730 = vld [vmem:[%s2726 + $0x18] sm:$0xff]
    %2731 = vmatprep.subr.mxu0 %v544
    %2732 = vmatpush1.msra.mxu0 %v543
    %2733 = vmatprep.subr.mxu0 %v548
    %2734 = vmatpush1.msra.mxu0 %v547
    %2735 = vmatprep.subr.mxu0 %v552
    %2736 = vmatpush1.msra.mxu0 %v551
    %2737 = vmatprep.subr.mxu0 %v556
    %2738 = vmatpush1.msra.mxu0 %v555
    %2739 = vmatprep.subr.mxu0 %v560
    %2740 = vmatpush1.msra.mxu0 %v559
    %2741 = vmatprep.subr.mxu0 %v564
    %2742 = vmatpush1.msra.mxu0 %v563
    %2743 = vmatprep.subr.mxu0 %v568
    %2744 = vmatpush1.msra.mxu0 %v567
    %2745 = vmatprep.subr.mxu0 %v572
    %2746 = vmatpush1.msra.mxu0 %v571
    %2747 = vmatprep.subr.mxu0 %v576
    %2748 = vmatpush1.msra.mxu0 %v575
    %2749 = vmatprep.subr.mxu0 %v580
    %2750 = vmatpush1.msra.mxu0 %v579
    %2751 = vmatprep.subr.mxu0 %v584
    %2752 = vmatpush1.msra.mxu0 %v583
    %2753 = vmatprep.subr.mxu0 %v588
    %2754 = vmatpush1.msra.mxu0 %v587
    %2755 = vmatprep.subr.mxu0 %v592
    %2756 = vmatpush1.msra.mxu0 %v591
    %2757 = vmatprep.subr.mxu0 %v596
    %2758 = vmatpush1.msra.mxu0 %v595
    %2759 = vmatprep.subr.mxu0 %v600
    %2760 = vmatpush1.msra.mxu0 %v599
    %2761 = vmatprep.subr.mxu0 %v604
    %2762 = vmatpush1.msra.mxu0 %v603
    %2763 = vmatprep.subr.mxu0 0.0
    %2764 = vmatpush1.msra.mxu0 0.0
    %2765 = vmatprep.subr.mxu0 0.0
    %2766 = vmatpush1.msra.mxu0 0.0
    %2767 = vmatprep.subr.mxu0 0.0
    %2768 = vmatpush1.msra.mxu0 0.0
    %2769 = vmatprep.subr.mxu0 0.0
    %2770 = vmatpush1.msra.mxu0 0.0
    %2771 = vmatprep.subr.mxu0 0.0
    %2772 = vmatpush1.msra.mxu0 0.0
    %2773 = vmatprep.subr.mxu0 0.0
    %2774 = vmatpush1.msra.mxu0 0.0
    %2775 = vmatprep.subr.mxu0 0.0
    %2776 = vmatpush1.msra.mxu0 0.0
    %2777 = vmatprep.subr.mxu0 0.0
    %2778 = vmatpush1.msra.mxu0 0.0
    %2779 = vmatprep.subr.mxu0 0.0
    %2780 = vmatpush1.msra.mxu0 0.0
    %2781 = vmatprep.subr.mxu0 0.0
    %2782 = vmatpush1.msra.mxu0 0.0
    %2783 = vmatprep.subr.mxu0 0.0
    %2784 = vmatpush1.msra.mxu0 0.0
    %2785 = vmatprep.subr.mxu0 0.0
    %2786 = vmatpush1.msra.mxu0 0.0
    %2787 = vmatprep.subr.mxu0 0.0
    %2788 = vmatpush1.msra.mxu0 0.0
    %2789 = vmatprep.subr.mxu0 0.0
    %2790 = vmatpush1.msra.mxu0 0.0
    %2791 = vmatprep.subr.mxu0 0.0
    %2792 = vmatpush1.msra.mxu0 0.0
    %2793 = vmatprep.subr.mxu0 0.0
    %2794 = vmatpush1.msra.mxu0 0.0
    %2795 = vmatprep.mubr.f32.mxu0 0.0
    %2796 = vmatmul.mubr.f32.gmra.mrb[0].mxu0 %v2723
    %v2797 = vpop.f32.mrb[0].mxu0
    %v2798 = vadd.f32 0.0, %v2797
    %v2799 = vpop.f32.mrb[0].mxu0
    %v2800 = vadd.f32 0.0, %v2799
    %2801 = vdwg.mxu0
    %2802 = vmatprep.subr.mxu0 %v546
    %2803 = vmatpush1.msra.mxu0 %v545
    %2804 = vmatprep.subr.mxu0 %v550
    %2805 = vmatpush1.msra.mxu0 %v549
    %2806 = vmatprep.subr.mxu0 %v554
    %2807 = vmatpush1.msra.mxu0 %v553
    %2808 = vmatprep.subr.mxu0 %v558
    %2809 = vmatpush1.msra.mxu0 %v557
    %2810 = vmatprep.subr.mxu0 %v562
    %2811 = vmatpush1.msra.mxu0 %v561
    %2812 = vmatprep.subr.mxu0 %v566
    %2813 = vmatpush1.msra.mxu0 %v565
    %2814 = vmatprep.subr.mxu0 %v570
    %2815 = vmatpush1.msra.mxu0 %v569
    %2816 = vmatprep.subr.mxu0 %v574
    %2817 = vmatpush1.msra.mxu0 %v573
    %2818 = vmatprep.subr.mxu0 %v578
    %2819 = vmatpush1.msra.mxu0 %v577
    %2820 = vmatprep.subr.mxu0 %v582
    %2821 = vmatpush1.msra.mxu0 %v581
    %2822 = vmatprep.subr.mxu0 %v586
    %2823 = vmatpush1.msra.mxu0 %v585
    %2824 = vmatprep.subr.mxu0 %v590
    %2825 = vmatpush1.msra.mxu0 %v589
    %2826 = vmatprep.subr.mxu0 %v594
    %2827 = vmatpush1.msra.mxu0 %v593
    %2828 = vmatprep.subr.mxu0 %v598
    %2829 = vmatpush1.msra.mxu0 %v597
    %2830 = vmatprep.subr.mxu0 %v602
    %2831 = vmatpush1.msra.mxu0 %v601
    %2832 = vmatprep.subr.mxu0 %v606
    %2833 = vmatpush1.msra.mxu0 %v605
    %2834 = vmatprep.subr.mxu0 0.0
    %2835 = vmatpush1.msra.mxu0 0.0
    %2836 = vmatprep.subr.mxu0 0.0
    %2837 = vmatpush1.msra.mxu0 0.0
    %2838 = vmatprep.subr.mxu0 0.0
    %2839 = vmatpush1.msra.mxu0 0.0
    %2840 = vmatprep.subr.mxu0 0.0
    %2841 = vmatpush1.msra.mxu0 0.0
    %2842 = vmatprep.subr.mxu0 0.0
    %2843 = vmatpush1.msra.mxu0 0.0
    %2844 = vmatprep.subr.mxu0 0.0
    %2845 = vmatpush1.msra.mxu0 0.0
    %2846 = vmatprep.subr.mxu0 0.0
    %2847 = vmatpush1.msra.mxu0 0.0
    %2848 = vmatprep.subr.mxu0 0.0
    %2849 = vmatpush1.msra.mxu0 0.0
    %2850 = vmatprep.subr.mxu0 0.0
    %2851 = vmatpush1.msra.mxu0 0.0
    %2852 = vmatprep.subr.mxu0 0.0
    %2853 = vmatpush1.msra.mxu0 0.0
    %2854 = vmatprep.subr.mxu0 0.0
    %2855 = vmatpush1.msra.mxu0 0.0
    %2856 = vmatprep.subr.mxu0 0.0
    %2857 = vmatpush1.msra.mxu0 0.0
    %2858 = vmatprep.subr.mxu0 0.0
    %2859 = vmatpush1.msra.mxu0 0.0
    %2860 = vmatprep.subr.mxu0 0.0
    %2861 = vmatpush1.msra.mxu0 0.0
    %2862 = vmatprep.subr.mxu0 0.0
    %2863 = vmatpush1.msra.mxu0 0.0
    %2864 = vmatprep.subr.mxu0 0.0
    %2865 = vmatpush1.msra.mxu0 0.0
    %2866 = vmatprep.mubr.f32.mxu0 0.0
    %2867 = vmatmul.mubr.f32.gmra.mrb[0].mxu0 %v2723
    %v2868 = vpop.f32.mrb[0].mxu0
    %v2869 = vadd.f32 0.0, %v2868
    %v2870 = vpop.f32.mrb[0].mxu0
    %v2871 = vadd.f32 0.0, %v2870
    %2872 = vdwg.mxu0
    %v2873 = vadd.f32 %v2727, %v2798
    %v2874 = vadd.f32 %v2728, %v2800
    %v2875 = vadd.f32 %v2729, %v2869
    %v2876 = vadd.f32 %v2730, %v2871
    %v2877 = vxor.u32 %v2873, 2147483648
    %v2878 = vmul.f32 %v2877, 1.442695
    %v2879 = vpow.pop %v2878
    %v2880 = vadd.f32 %v2879, 1.0
    %v2881 = vrcp.pop %v2880
    %v2882 = vmul.f32 1.0, %v2881
    %v2883 = vxor.u32 %v2874, 2147483648
    %v2884 = vmul.f32 %v2883, 1.442695
    %v2885 = vpow.pop %v2884
    %v2886 = vadd.f32 %v2885, 1.0
    %v2887 = vrcp.pop %v2886
    %v2888 = vmul.f32 1.0, %v2887
    %v2889 = vtanh.pop %v2875
    %v2890 = vxor.u32 %v2876, 2147483648
    %v2891 = vmul.f32 %v2890, 1.442695
    %v2892 = vpow.pop %v2891
    %v2893 = vadd.f32 %v2892, 1.0
    %v2894 = vrcp.pop %v2893
    %v2895 = vmul.f32 1.0, %v2894
    %v2896 = vmul.f32 %v2888, %v2721
    %v2897 = vmul.f32 %v2882, %v2889
    %v2898 = vadd.f32 %v2896, %v2897
    %v2899 = vtanh.pop %v2898
    %v2900 = vmul.f32 %v2895, %v2899
    %s2901 = smul.u32 13, 4
    %s2902 = smul.addr %s2901, 8
    %s2903 = scalar_lea.vmem [#allocation2], %s2902
    %v2904 = vld [vmem:[%s2903] sm:$0xff]
    %v2905 = vld [vmem:[%s2903 + $0x8] sm:$0xff]
    %v2906 = vld [vmem:[%s2903 + $0x10] sm:$0xff]
    %v2907 = vld [vmem:[%s2903 + $0x18] sm:$0xff]
    %2908 = vmatprep.subr.mxu0 %v544
    %2909 = vmatpush1.msra.mxu0 %v543
    %2910 = vmatprep.subr.mxu0 %v548
    %2911 = vmatpush1.msra.mxu0 %v547
    %2912 = vmatprep.subr.mxu0 %v552
    %2913 = vmatpush1.msra.mxu0 %v551
    %2914 = vmatprep.subr.mxu0 %v556
    %2915 = vmatpush1.msra.mxu0 %v555
    %2916 = vmatprep.subr.mxu0 %v560
    %2917 = vmatpush1.msra.mxu0 %v559
    %2918 = vmatprep.subr.mxu0 %v564
    %2919 = vmatpush1.msra.mxu0 %v563
    %2920 = vmatprep.subr.mxu0 %v568
    %2921 = vmatpush1.msra.mxu0 %v567
    %2922 = vmatprep.subr.mxu0 %v572
    %2923 = vmatpush1.msra.mxu0 %v571
    %2924 = vmatprep.subr.mxu0 %v576
    %2925 = vmatpush1.msra.mxu0 %v575
    %2926 = vmatprep.subr.mxu0 %v580
    %2927 = vmatpush1.msra.mxu0 %v579
    %2928 = vmatprep.subr.mxu0 %v584
    %2929 = vmatpush1.msra.mxu0 %v583
    %2930 = vmatprep.subr.mxu0 %v588
    %2931 = vmatpush1.msra.mxu0 %v587
    %2932 = vmatprep.subr.mxu0 %v592
    %2933 = vmatpush1.msra.mxu0 %v591
    %2934 = vmatprep.subr.mxu0 %v596
    %2935 = vmatpush1.msra.mxu0 %v595
    %2936 = vmatprep.subr.mxu0 %v600
    %2937 = vmatpush1.msra.mxu0 %v599
    %2938 = vmatprep.subr.mxu0 %v604
    %2939 = vmatpush1.msra.mxu0 %v603
    %2940 = vmatprep.subr.mxu0 0.0
    %2941 = vmatpush1.msra.mxu0 0.0
    %2942 = vmatprep.subr.mxu0 0.0
    %2943 = vmatpush1.msra.mxu0 0.0
    %2944 = vmatprep.subr.mxu0 0.0
    %2945 = vmatpush1.msra.mxu0 0.0
    %2946 = vmatprep.subr.mxu0 0.0
    %2947 = vmatpush1.msra.mxu0 0.0
    %2948 = vmatprep.subr.mxu0 0.0
    %2949 = vmatpush1.msra.mxu0 0.0
    %2950 = vmatprep.subr.mxu0 0.0
    %2951 = vmatpush1.msra.mxu0 0.0
    %2952 = vmatprep.subr.mxu0 0.0
    %2953 = vmatpush1.msra.mxu0 0.0
    %2954 = vmatprep.subr.mxu0 0.0
    %2955 = vmatpush1.msra.mxu0 0.0
    %2956 = vmatprep.subr.mxu0 0.0
    %2957 = vmatpush1.msra.mxu0 0.0
    %2958 = vmatprep.subr.mxu0 0.0
    %2959 = vmatpush1.msra.mxu0 0.0
    %2960 = vmatprep.subr.mxu0 0.0
    %2961 = vmatpush1.msra.mxu0 0.0
    %2962 = vmatprep.subr.mxu0 0.0
    %2963 = vmatpush1.msra.mxu0 0.0
    %2964 = vmatprep.subr.mxu0 0.0
    %2965 = vmatpush1.msra.mxu0 0.0
    %2966 = vmatprep.subr.mxu0 0.0
    %2967 = vmatpush1.msra.mxu0 0.0
    %2968 = vmatprep.subr.mxu0 0.0
    %2969 = vmatpush1.msra.mxu0 0.0
    %2970 = vmatprep.subr.mxu0 0.0
    %2971 = vmatpush1.msra.mxu0 0.0
    %2972 = vmatprep.mubr.f32.mxu0 0.0
    %2973 = vmatmul.mubr.f32.gmra.mrb[0].mxu0 %v2900
    %v2974 = vpop.f32.mrb[0].mxu0
    %v2975 = vadd.f32 0.0, %v2974
    %v2976 = vpop.f32.mrb[0].mxu0
    %v2977 = vadd.f32 0.0, %v2976
    %2978 = vdwg.mxu0
    %2979 = vmatprep.subr.mxu0 %v546
    %2980 = vmatpush1.msra.mxu0 %v545
    %2981 = vmatprep.subr.mxu0 %v550
    %2982 = vmatpush1.msra.mxu0 %v549
    %2983 = vmatprep.subr.mxu0 %v554
    %2984 = vmatpush1.msra.mxu0 %v553
    %2985 = vmatprep.subr.mxu0 %v558
    %2986 = vmatpush1.msra.mxu0 %v557
    %2987 = vmatprep.subr.mxu0 %v562
    %2988 = vmatpush1.msra.mxu0 %v561
    %2989 = vmatprep.subr.mxu0 %v566
    %2990 = vmatpush1.msra.mxu0 %v565
    %2991 = vmatprep.subr.mxu0 %v570
    %2992 = vmatpush1.msra.mxu0 %v569
    %2993 = vmatprep.subr.mxu0 %v574
    %2994 = vmatpush1.msra.mxu0 %v573
    %2995 = vmatprep.subr.mxu0 %v578
    %2996 = vmatpush1.msra.mxu0 %v577
    %2997 = vmatprep.subr.mxu0 %v582
    %2998 = vmatpush1.msra.mxu0 %v581
    %2999 = vmatprep.subr.mxu0 %v586
    %3000 = vmatpush1.msra.mxu0 %v585
    %3001 = vmatprep.subr.mxu0 %v590
    %3002 = vmatpush1.msra.mxu0 %v589
    %3003 = vmatprep.subr.mxu0 %v594
    %3004 = vmatpush1.msra.mxu0 %v593
    %3005 = vmatprep.subr.mxu0 %v598
    %3006 = vmatpush1.msra.mxu0 %v597
    %3007 = vmatprep.subr.mxu0 %v602
    %3008 = vmatpush1.msra.mxu0 %v601
    %3009 = vmatprep.subr.mxu0 %v606
    %3010 = vmatpush1.msra.mxu0 %v605
    %3011 = vmatprep.subr.mxu0 0.0
    %3012 = vmatpush1.msra.mxu0 0.0
    %3013 = vmatprep.subr.mxu0 0.0
    %3014 = vmatpush1.msra.mxu0 0.0
    %3015 = vmatprep.subr.mxu0 0.0
    %3016 = vmatpush1.msra.mxu0 0.0
    %3017 = vmatprep.subr.mxu0 0.0
    %3018 = vmatpush1.msra.mxu0 0.0
    %3019 = vmatprep.subr.mxu0 0.0
    %3020 = vmatpush1.msra.mxu0 0.0
    %3021 = vmatprep.subr.mxu0 0.0
    %3022 = vmatpush1.msra.mxu0 0.0
    %3023 = vmatprep.subr.mxu0 0.0
    %3024 = vmatpush1.msra.mxu0 0.0
    %3025 = vmatprep.subr.mxu0 0.0
    %3026 = vmatpush1.msra.mxu0 0.0
    %3027 = vmatprep.subr.mxu0 0.0
    %3028 = vmatpush1.msra.mxu0 0.0
    %3029 = vmatprep.subr.mxu0 0.0
    %3030 = vmatpush1.msra.mxu0 0.0
    %3031 = vmatprep.subr.mxu0 0.0
    %3032 = vmatpush1.msra.mxu0 0.0
    %3033 = vmatprep.subr.mxu0 0.0
    %3034 = vmatpush1.msra.mxu0 0.0
    %3035 = vmatprep.subr.mxu0 0.0
    %3036 = vmatpush1.msra.mxu0 0.0
    %3037 = vmatprep.subr.mxu0 0.0
    %3038 = vmatpush1.msra.mxu0 0.0
    %3039 = vmatprep.subr.mxu0 0.0
    %3040 = vmatpush1.msra.mxu0 0.0
    %3041 = vmatprep.subr.mxu0 0.0
    %3042 = vmatpush1.msra.mxu0 0.0
    %3043 = vmatprep.mubr.f32.mxu0 0.0
    %3044 = vmatmul.mubr.f32.gmra.mrb[0].mxu0 %v2900
    %v3045 = vpop.f32.mrb[0].mxu0
    %v3046 = vadd.f32 0.0, %v3045
    %v3047 = vpop.f32.mrb[0].mxu0
    %v3048 = vadd.f32 0.0, %v3047
    %3049 = vdwg.mxu0
    %v3050 = vadd.f32 %v2904, %v2975
    %v3051 = vadd.f32 %v2905, %v2977
    %v3052 = vadd.f32 %v2906, %v3046
    %v3053 = vadd.f32 %v2907, %v3048
    %v3054 = vxor.u32 %v3050, 2147483648
    %v3055 = vmul.f32 %v3054, 1.442695
    %v3056 = vpow.pop %v3055
    %v3057 = vadd.f32 %v3056, 1.0
    %v3058 = vrcp.pop %v3057
    %v3059 = vmul.f32 1.0, %v3058
    %v3060 = vxor.u32 %v3051, 2147483648
    %v3061 = vmul.f32 %v3060, 1.442695
    %v3062 = vpow.pop %v3061
    %v3063 = vadd.f32 %v3062, 1.0
    %v3064 = vrcp.pop %v3063
    %v3065 = vmul.f32 1.0, %v3064
    %v3066 = vtanh.pop %v3052
    %v3067 = vxor.u32 %v3053, 2147483648
    %v3068 = vmul.f32 %v3067, 1.442695
    %v3069 = vpow.pop %v3068
    %v3070 = vadd.f32 %v3069, 1.0
    %v3071 = vrcp.pop %v3070
    %v3072 = vmul.f32 1.0, %v3071
    %v3073 = vmul.f32 %v3065, %v2898
    %v3074 = vmul.f32 %v3059, %v3066
    %v3075 = vadd.f32 %v3073, %v3074
    %v3076 = vtanh.pop %v3075
    %v3077 = vmul.f32 %v3072, %v3076
    %s3078 = smul.u32 14, 4
    %s3079 = smul.addr %s3078, 8
    %s3080 = scalar_lea.vmem [#allocation2], %s3079
    %v3081 = vld [vmem:[%s3080] sm:$0xff]
    %v3082 = vld [vmem:[%s3080 + $0x8] sm:$0xff]
    %v3083 = vld [vmem:[%s3080 + $0x10] sm:$0xff]
    %v3084 = vld [vmem:[%s3080 + $0x18] sm:$0xff]
    %3085 = vmatprep.subr.mxu0 %v544
    %3086 = vmatpush1.msra.mxu0 %v543
    %3087 = vmatprep.subr.mxu0 %v548
    %3088 = vmatpush1.msra.mxu0 %v547
    %3089 = vmatprep.subr.mxu0 %v552
    %3090 = vmatpush1.msra.mxu0 %v551
    %3091 = vmatprep.subr.mxu0 %v556
    %3092 = vmatpush1.msra.mxu0 %v555
    %3093 = vmatprep.subr.mxu0 %v560
    %3094 = vmatpush1.msra.mxu0 %v559
    %3095 = vmatprep.subr.mxu0 %v564
    %3096 = vmatpush1.msra.mxu0 %v563
    %3097 = vmatprep.subr.mxu0 %v568
    %3098 = vmatpush1.msra.mxu0 %v567
    %3099 = vmatprep.subr.mxu0 %v572
    %3100 = vmatpush1.msra.mxu0 %v571
    %3101 = vmatprep.subr.mxu0 %v576
    %3102 = vmatpush1.msra.mxu0 %v575
    %3103 = vmatprep.subr.mxu0 %v580
    %3104 = vmatpush1.msra.mxu0 %v579
    %3105 = vmatprep.subr.mxu0 %v584
    %3106 = vmatpush1.msra.mxu0 %v583
    %3107 = vmatprep.subr.mxu0 %v588
    %3108 = vmatpush1.msra.mxu0 %v587
    %3109 = vmatprep.subr.mxu0 %v592
    %3110 = vmatpush1.msra.mxu0 %v591
    %3111 = vmatprep.subr.mxu0 %v596
    %3112 = vmatpush1.msra.mxu0 %v595
    %3113 = vmatprep.subr.mxu0 %v600
    %3114 = vmatpush1.msra.mxu0 %v599
    %3115 = vmatprep.subr.mxu0 %v604
    %3116 = vmatpush1.msra.mxu0 %v603
    %3117 = vmatprep.subr.mxu0 0.0
    %3118 = vmatpush1.msra.mxu0 0.0
    %3119 = vmatprep.subr.mxu0 0.0
    %3120 = vmatpush1.msra.mxu0 0.0
    %3121 = vmatprep.subr.mxu0 0.0
    %3122 = vmatpush1.msra.mxu0 0.0
    %3123 = vmatprep.subr.mxu0 0.0
    %3124 = vmatpush1.msra.mxu0 0.0
    %3125 = vmatprep.subr.mxu0 0.0
    %3126 = vmatpush1.msra.mxu0 0.0
    %3127 = vmatprep.subr.mxu0 0.0
    %3128 = vmatpush1.msra.mxu0 0.0
    %3129 = vmatprep.subr.mxu0 0.0
    %3130 = vmatpush1.msra.mxu0 0.0
    %3131 = vmatprep.subr.mxu0 0.0
    %3132 = vmatpush1.msra.mxu0 0.0
    %3133 = vmatprep.subr.mxu0 0.0
    %3134 = vmatpush1.msra.mxu0 0.0
    %3135 = vmatprep.subr.mxu0 0.0
    %3136 = vmatpush1.msra.mxu0 0.0
    %3137 = vmatprep.subr.mxu0 0.0
    %3138 = vmatpush1.msra.mxu0 0.0
    %3139 = vmatprep.subr.mxu0 0.0
    %3140 = vmatpush1.msra.mxu0 0.0
    %3141 = vmatprep.subr.mxu0 0.0
    %3142 = vmatpush1.msra.mxu0 0.0
    %3143 = vmatprep.subr.mxu0 0.0
    %3144 = vmatpush1.msra.mxu0 0.0
    %3145 = vmatprep.subr.mxu0 0.0
    %3146 = vmatpush1.msra.mxu0 0.0
    %3147 = vmatprep.subr.mxu0 0.0
    %3148 = vmatpush1.msra.mxu0 0.0
    %3149 = vmatprep.mubr.f32.mxu0 0.0
    %3150 = vmatmul.mubr.f32.gmra.mrb[0].mxu0 %v3077
    %v3151 = vpop.f32.mrb[0].mxu0
    %v3152 = vadd.f32 0.0, %v3151
    %v3153 = vpop.f32.mrb[0].mxu0
    %v3154 = vadd.f32 0.0, %v3153
    %3155 = vdwg.mxu0
    %3156 = vmatprep.subr.mxu0 %v546
    %3157 = vmatpush1.msra.mxu0 %v545
    %3158 = vmatprep.subr.mxu0 %v550
    %3159 = vmatpush1.msra.mxu0 %v549
    %3160 = vmatprep.subr.mxu0 %v554
    %3161 = vmatpush1.msra.mxu0 %v553
    %3162 = vmatprep.subr.mxu0 %v558
    %3163 = vmatpush1.msra.mxu0 %v557
    %3164 = vmatprep.subr.mxu0 %v562
    %3165 = vmatpush1.msra.mxu0 %v561
    %3166 = vmatprep.subr.mxu0 %v566
    %3167 = vmatpush1.msra.mxu0 %v565
    %3168 = vmatprep.subr.mxu0 %v570
    %3169 = vmatpush1.msra.mxu0 %v569
    %3170 = vmatprep.subr.mxu0 %v574
    %3171 = vmatpush1.msra.mxu0 %v573
    %3172 = vmatprep.subr.mxu0 %v578
    %3173 = vmatpush1.msra.mxu0 %v577
    %3174 = vmatprep.subr.mxu0 %v582
    %3175 = vmatpush1.msra.mxu0 %v581
    %3176 = vmatprep.subr.mxu0 %v586
    %3177 = vmatpush1.msra.mxu0 %v585
    %3178 = vmatprep.subr.mxu0 %v590
    %3179 = vmatpush1.msra.mxu0 %v589
    %3180 = vmatprep.subr.mxu0 %v594
    %3181 = vmatpush1.msra.mxu0 %v593
    %3182 = vmatprep.subr.mxu0 %v598
    %3183 = vmatpush1.msra.mxu0 %v597
    %3184 = vmatprep.subr.mxu0 %v602
    %3185 = vmatpush1.msra.mxu0 %v601
    %3186 = vmatprep.subr.mxu0 %v606
    %3187 = vmatpush1.msra.mxu0 %v605
    %3188 = vmatprep.subr.mxu0 0.0
    %3189 = vmatpush1.msra.mxu0 0.0
    %3190 = vmatprep.subr.mxu0 0.0
    %3191 = vmatpush1.msra.mxu0 0.0
    %3192 = vmatprep.subr.mxu0 0.0
    %3193 = vmatpush1.msra.mxu0 0.0
    %3194 = vmatprep.subr.mxu0 0.0
    %3195 = vmatpush1.msra.mxu0 0.0
    %3196 = vmatprep.subr.mxu0 0.0
    %3197 = vmatpush1.msra.mxu0 0.0
    %3198 = vmatprep.subr.mxu0 0.0
    %3199 = vmatpush1.msra.mxu0 0.0
    %3200 = vmatprep.subr.mxu0 0.0
    %3201 = vmatpush1.msra.mxu0 0.0
    %3202 = vmatprep.subr.mxu0 0.0
    %3203 = vmatpush1.msra.mxu0 0.0
    %3204 = vmatprep.subr.mxu0 0.0
    %3205 = vmatpush1.msra.mxu0 0.0
    %3206 = vmatprep.subr.mxu0 0.0
    %3207 = vmatpush1.msra.mxu0 0.0
    %3208 = vmatprep.subr.mxu0 0.0
    %3209 = vmatpush1.msra.mxu0 0.0
    %3210 = vmatprep.subr.mxu0 0.0
    %3211 = vmatpush1.msra.mxu0 0.0
    %3212 = vmatprep.subr.mxu0 0.0
    %3213 = vmatpush1.msra.mxu0 0.0
    %3214 = vmatprep.subr.mxu0 0.0
    %3215 = vmatpush1.msra.mxu0 0.0
    %3216 = vmatprep.subr.mxu0 0.0
    %3217 = vmatpush1.msra.mxu0 0.0
    %3218 = vmatprep.subr.mxu0 0.0
    %3219 = vmatpush1.msra.mxu0 0.0
    %3220 = vmatprep.mubr.f32.mxu0 0.0
    %3221 = vmatmul.mubr.f32.gmra.mrb[0].mxu0 %v3077
    %v3222 = vpop.f32.mrb[0].mxu0
    %v3223 = vadd.f32 0.0, %v3222
    %v3224 = vpop.f32.mrb[0].mxu0
    %v3225 = vadd.f32 0.0, %v3224
    %3226 = vdwg.mxu0
    %v3227 = vadd.f32 %v3081, %v3152
    %v3228 = vadd.f32 %v3082, %v3154
    %v3229 = vadd.f32 %v3083, %v3223
    %v3230 = vadd.f32 %v3084, %v3225
    %v3231 = vxor.u32 %v3227, 2147483648
    %v3232 = vmul.f32 %v3231, 1.442695
    %v3233 = vpow.pop %v3232
    %v3234 = vadd.f32 %v3233, 1.0
    %v3235 = vrcp.pop %v3234
    %v3236 = vmul.f32 1.0, %v3235
    %v3237 = vxor.u32 %v3228, 2147483648
    %v3238 = vmul.f32 %v3237, 1.442695
    %v3239 = vpow.pop %v3238
    %v3240 = vadd.f32 %v3239, 1.0
    %v3241 = vrcp.pop %v3240
    %v3242 = vmul.f32 1.0, %v3241
    %v3243 = vtanh.pop %v3229
    %v3244 = vxor.u32 %v3230, 2147483648
    %v3245 = vmul.f32 %v3244, 1.442695
    %v3246 = vpow.pop %v3245
    %v3247 = vadd.f32 %v3246, 1.0
    %v3248 = vrcp.pop %v3247
    %v3249 = vmul.f32 1.0, %v3248
    %v3250 = vmul.f32 %v3242, %v3075
    %v3251 = vmul.f32 %v3236, %v3243
    %v3252 = vadd.f32 %v3250, %v3251
    %v3253 = vtanh.pop %v3252
    %v3254 = vmul.f32 %v3249, %v3253
    %s3255 = smul.u32 15, 4
    %s3256 = smul.addr %s3255, 8
    %s3257 = scalar_lea.vmem [#allocation2], %s3256
    %v3258 = vld [vmem:[%s3257] sm:$0xff]
    %v3259 = vld [vmem:[%s3257 + $0x8] sm:$0xff]
    %v3260 = vld [vmem:[%s3257 + $0x10] sm:$0xff]
    %v3261 = vld [vmem:[%s3257 + $0x18] sm:$0xff]
    %3262 = vmatprep.subr.mxu0 %v544
    %3263 = vmatpush1.msra.mxu0 %v543
    %3264 = vmatprep.subr.mxu0 %v548
    %3265 = vmatpush1.msra.mxu0 %v547
    %3266 = vmatprep.subr.mxu0 %v552
    %3267 = vmatpush1.msra.mxu0 %v551
    %3268 = vmatprep.subr.mxu0 %v556
    %3269 = vmatpush1.msra.mxu0 %v555
    %3270 = vmatprep.subr.mxu0 %v560
    %3271 = vmatpush1.msra.mxu0 %v559
    %3272 = vmatprep.subr.mxu0 %v564
    %3273 = vmatpush1.msra.mxu0 %v563
    %3274 = vmatprep.subr.mxu0 %v568
    %3275 = vmatpush1.msra.mxu0 %v567
    %3276 = vmatprep.subr.mxu0 %v572
    %3277 = vmatpush1.msra.mxu0 %v571
    %3278 = vmatprep.subr.mxu0 %v576
    %3279 = vmatpush1.msra.mxu0 %v575
    %3280 = vmatprep.subr.mxu0 %v580
    %3281 = vmatpush1.msra.mxu0 %v579
    %3282 = vmatprep.subr.mxu0 %v584
    %3283 = vmatpush1.msra.mxu0 %v583
    %3284 = vmatprep.subr.mxu0 %v588
    %3285 = vmatpush1.msra.mxu0 %v587
    %3286 = vmatprep.subr.mxu0 %v592
    %3287 = vmatpush1.msra.mxu0 %v591
    %3288 = vmatprep.subr.mxu0 %v596
    %3289 = vmatpush1.msra.mxu0 %v595
    %3290 = vmatprep.subr.mxu0 %v600
    %3291 = vmatpush1.msra.mxu0 %v599
    %3292 = vmatprep.subr.mxu0 %v604
    %3293 = vmatpush1.msra.mxu0 %v603
    %3294 = vmatprep.subr.mxu0 0.0
    %3295 = vmatpush1.msra.mxu0 0.0
    %3296 = vmatprep.subr.mxu0 0.0
    %3297 = vmatpush1.msra.mxu0 0.0
    %3298 = vmatprep.subr.mxu0 0.0
    %3299 = vmatpush1.msra.mxu0 0.0
    %3300 = vmatprep.subr.mxu0 0.0
    %3301 = vmatpush1.msra.mxu0 0.0
    %3302 = vmatprep.subr.mxu0 0.0
    %3303 = vmatpush1.msra.mxu0 0.0
    %3304 = vmatprep.subr.mxu0 0.0
    %3305 = vmatpush1.msra.mxu0 0.0
    %3306 = vmatprep.subr.mxu0 0.0
    %3307 = vmatpush1.msra.mxu0 0.0
    %3308 = vmatprep.subr.mxu0 0.0
    %3309 = vmatpush1.msra.mxu0 0.0
    %3310 = vmatprep.subr.mxu0 0.0
    %3311 = vmatpush1.msra.mxu0 0.0
    %3312 = vmatprep.subr.mxu0 0.0
    %3313 = vmatpush1.msra.mxu0 0.0
    %3314 = vmatprep.subr.mxu0 0.0
    %3315 = vmatpush1.msra.mxu0 0.0
    %3316 = vmatprep.subr.mxu0 0.0
    %3317 = vmatpush1.msra.mxu0 0.0
    %3318 = vmatprep.subr.mxu0 0.0
    %3319 = vmatpush1.msra.mxu0 0.0
    %3320 = vmatprep.subr.mxu0 0.0
    %3321 = vmatpush1.msra.mxu0 0.0
    %3322 = vmatprep.subr.mxu0 0.0
    %3323 = vmatpush1.msra.mxu0 0.0
    %3324 = vmatprep.subr.mxu0 0.0
    %3325 = vmatpush1.msra.mxu0 0.0
    %3326 = vmatprep.mubr.f32.mxu0 0.0
    %3327 = vmatmul.mubr.f32.gmra.mrb[0].mxu0 %v3254
    %v3328 = vpop.f32.mrb[0].mxu0
    %v3329 = vadd.f32 0.0, %v3328
    %v3330 = vpop.f32.mrb[0].mxu0
    %v3331 = vadd.f32 0.0, %v3330
    %3332 = vdwg.mxu0
    %3333 = vmatprep.subr.mxu0 %v546
    %3334 = vmatpush1.msra.mxu0 %v545
    %3335 = vmatprep.subr.mxu0 %v550
    %3336 = vmatpush1.msra.mxu0 %v549
    %3337 = vmatprep.subr.mxu0 %v554
    %3338 = vmatpush1.msra.mxu0 %v553
    %3339 = vmatprep.subr.mxu0 %v558
    %3340 = vmatpush1.msra.mxu0 %v557
    %3341 = vmatprep.subr.mxu0 %v562
    %3342 = vmatpush1.msra.mxu0 %v561
    %3343 = vmatprep.subr.mxu0 %v566
    %3344 = vmatpush1.msra.mxu0 %v565
    %3345 = vmatprep.subr.mxu0 %v570
    %3346 = vmatpush1.msra.mxu0 %v569
    %3347 = vmatprep.subr.mxu0 %v574
    %3348 = vmatpush1.msra.mxu0 %v573
    %3349 = vmatprep.subr.mxu0 %v578
    %3350 = vmatpush1.msra.mxu0 %v577
    %3351 = vmatprep.subr.mxu0 %v582
    %3352 = vmatpush1.msra.mxu0 %v581
    %3353 = vmatprep.subr.mxu0 %v586
    %3354 = vmatpush1.msra.mxu0 %v585
    %3355 = vmatprep.subr.mxu0 %v590
    %3356 = vmatpush1.msra.mxu0 %v589
    %3357 = vmatprep.subr.mxu0 %v594
    %3358 = vmatpush1.msra.mxu0 %v593
    %3359 = vmatprep.subr.mxu0 %v598
    %3360 = vmatpush1.msra.mxu0 %v597
    %3361 = vmatprep.subr.mxu0 %v602
    %3362 = vmatpush1.msra.mxu0 %v601
    %3363 = vmatprep.subr.mxu0 %v606
    %3364 = vmatpush1.msra.mxu0 %v605
    %3365 = vmatprep.subr.mxu0 0.0
    %3366 = vmatpush1.msra.mxu0 0.0
    %3367 = vmatprep.subr.mxu0 0.0
    %3368 = vmatpush1.msra.mxu0 0.0
    %3369 = vmatprep.subr.mxu0 0.0
    %3370 = vmatpush1.msra.mxu0 0.0
    %3371 = vmatprep.subr.mxu0 0.0
    %3372 = vmatpush1.msra.mxu0 0.0
    %3373 = vmatprep.subr.mxu0 0.0
    %3374 = vmatpush1.msra.mxu0 0.0
    %3375 = vmatprep.subr.mxu0 0.0
    %3376 = vmatpush1.msra.mxu0 0.0
    %3377 = vmatprep.subr.mxu0 0.0
    %3378 = vmatpush1.msra.mxu0 0.0
    %3379 = vmatprep.subr.mxu0 0.0
    %3380 = vmatpush1.msra.mxu0 0.0
    %3381 = vmatprep.subr.mxu0 0.0
    %3382 = vmatpush1.msra.mxu0 0.0
    %3383 = vmatprep.subr.mxu0 0.0
    %3384 = vmatpush1.msra.mxu0 0.0
    %3385 = vmatprep.subr.mxu0 0.0
    %3386 = vmatpush1.msra.mxu0 0.0
    %3387 = vmatprep.subr.mxu0 0.0
    %3388 = vmatpush1.msra.mxu0 0.0
    %3389 = vmatprep.subr.mxu0 0.0
    %3390 = vmatpush1.msra.mxu0 0.0
    %3391 = vmatprep.subr.mxu0 0.0
    %3392 = vmatpush1.msra.mxu0 0.0
    %3393 = vmatprep.subr.mxu0 0.0
    %3394 = vmatpush1.msra.mxu0 0.0
    %3395 = vmatprep.subr.mxu0 0.0
    %3396 = vmatpush1.msra.mxu0 0.0
    %3397 = vmatprep.mubr.f32.mxu0 0.0
    %3398 = vmatmul.mubr.f32.gmra.mrb[0].mxu0 %v3254
    %v3399 = vpop.f32.mrb[0].mxu0
    %v3400 = vadd.f32 0.0, %v3399
    %v3401 = vpop.f32.mrb[0].mxu0
    %v3402 = vadd.f32 0.0, %v3401
    %3403 = vdwg.mxu0
    %v3404 = vadd.f32 %v3258, %v3329
    %v3405 = vadd.f32 %v3259, %v3331
    %v3406 = vadd.f32 %v3260, %v3400
    %v3407 = vadd.f32 %v3261, %v3402
    %v3408 = vxor.u32 %v3404, 2147483648
    %v3409 = vmul.f32 %v3408, 1.442695
    %v3410 = vpow.pop %v3409
    %v3411 = vadd.f32 %v3410, 1.0
    %v3412 = vrcp.pop %v3411
    %v3413 = vmul.f32 1.0, %v3412
    %v3414 = vxor.u32 %v3405, 2147483648
    %v3415 = vmul.f32 %v3414, 1.442695
    %v3416 = vpow.pop %v3415
    %v3417 = vadd.f32 %v3416, 1.0
    %v3418 = vrcp.pop %v3417
    %v3419 = vmul.f32 1.0, %v3418
    %v3420 = vtanh.pop %v3406
    %v3421 = vxor.u32 %v3407, 2147483648
    %v3422 = vmul.f32 %v3421, 1.442695
    %v3423 = vpow.pop %v3422
    %v3424 = vadd.f32 %v3423, 1.0
    %v3425 = vrcp.pop %v3424
    %v3426 = vmul.f32 1.0, %v3425
    %v3427 = vmul.f32 %v3419, %v3252
    %v3428 = vmul.f32 %v3413, %v3420
    %v3429 = vadd.f32 %v3427, %v3428
    %v3430 = vtanh.pop %v3429
    %v3431 = vmul.f32 %v3426, %v3430
    %3432 = vst [vmem:[#allocation7] sm:$0xff] %v3431
    %v3433 = vld [vmem:[%s4] sm:$0xff]
    %v3434 = vld [vmem:[%s4 + $0x8] sm:$0xff]
    %v3435 = vld [vmem:[%s4 + $0x10] sm:$0xff]
    %v3436 = vld [vmem:[%s4 + $0x18] sm:$0xff]
    %v3437 = vld [vmem:[%s4 + $0x20] sm:$0xff]
    %v3438 = vld [vmem:[%s4 + $0x28] sm:$0xff]
    %v3439 = vld [vmem:[%s4 + $0x30] sm:$0xff]
    %v3440 = vld [vmem:[%s4 + $0x38] sm:$0xff]
    %v3441 = vld [vmem:[%s4 + $0x40] sm:$0xff]
    %v3442 = vld [vmem:[%s4 + $0x48] sm:$0xff]
    %v3443 = vld [vmem:[%s4 + $0x50] sm:$0xff]
    %v3444 = vld [vmem:[%s4 + $0x58] sm:$0xff]
    %v3445 = vld [vmem:[%s4 + $0x60] sm:$0xff]
    %v3446 = vld [vmem:[%s4 + $0x68] sm:$0xff]
    %v3447 = vld [vmem:[%s4 + $0x70] sm:$0xff]
    %v3448 = vld [vmem:[%s4 + $0x78] sm:$0xff]
    %v3449 = vld [vmem:[#allocation3] sm:$0x1]
    %v3451 = vlaneseq
    %v3452 = vshrl.u32 %v3451, 7
    %v3453 = vsub.s32 0, %v3452
    %v3454 = vrot.slane %v3449, %v3453
    %3456 = vmatprep.subr.mxu0 0.0
    %3457 = vmatpush1.msra.mxu0 %v3433
    %3458 = vmatprep.subr.mxu0 0.0
    %3459 = vmatpush1.msra.mxu0 %v3434
    %3460 = vmatprep.subr.mxu0 0.0
    %3461 = vmatpush1.msra.mxu0 %v3435
    %3462 = vmatprep.subr.mxu0 0.0
    %3463 = vmatpush1.msra.mxu0 %v3436
    %3464 = vmatprep.subr.mxu0 0.0
    %3465 = vmatpush1.msra.mxu0 %v3437
    %3466 = vmatprep.subr.mxu0 0.0
    %3467 = vmatpush1.msra.mxu0 %v3438
    %3468 = vmatprep.subr.mxu0 0.0
    %3469 = vmatpush1.msra.mxu0 %v3439
    %3470 = vmatprep.subr.mxu0 0.0
    %3471 = vmatpush1.msra.mxu0 %v3440
    %3472 = vmatprep.subr.mxu0 0.0
    %3473 = vmatpush1.msra.mxu0 %v3441
    %3474 = vmatprep.subr.mxu0 0.0
    %3475 = vmatpush1.msra.mxu0 %v3442
    %3476 = vmatprep.subr.mxu0 0.0
    %3477 = vmatpush1.msra.mxu0 %v3443
    %3478 = vmatprep.subr.mxu0 0.0
    %3479 = vmatpush1.msra.mxu0 %v3444
    %3480 = vmatprep.subr.mxu0 0.0
    %3481 = vmatpush1.msra.mxu0 %v3445
    %3482 = vmatprep.subr.mxu0 0.0
    %3483 = vmatpush1.msra.mxu0 %v3446
    %3484 = vmatprep.subr.mxu0 0.0
    %3485 = vmatpush1.msra.mxu0 %v3447
    %3486 = vmatprep.subr.mxu0 0.0
    %3487 = vmatpush1.msra.mxu0 %v3448
    %3488 = vmatprep.subr.mxu0 0.0
    %3489 = vmatpush1.msra.mxu0 0.0
    %3490 = vmatprep.subr.mxu0 0.0
    %3491 = vmatpush1.msra.mxu0 0.0
    %3492 = vmatprep.subr.mxu0 0.0
    %3493 = vmatpush1.msra.mxu0 0.0
    %3494 = vmatprep.subr.mxu0 0.0
    %3495 = vmatpush1.msra.mxu0 0.0
    %3496 = vmatprep.subr.mxu0 0.0
    %3497 = vmatpush1.msra.mxu0 0.0
    %3498 = vmatprep.subr.mxu0 0.0
    %3499 = vmatpush1.msra.mxu0 0.0
    %3500 = vmatprep.subr.mxu0 0.0
    %3501 = vmatpush1.msra.mxu0 0.0
    %3502 = vmatprep.subr.mxu0 0.0
    %3503 = vmatpush1.msra.mxu0 0.0
    %3504 = vmatprep.subr.mxu0 0.0
    %3505 = vmatpush1.msra.mxu0 0.0
    %3506 = vmatprep.subr.mxu0 0.0
    %3507 = vmatpush1.msra.mxu0 0.0
    %3508 = vmatprep.subr.mxu0 0.0
    %3509 = vmatpush1.msra.mxu0 0.0
    %3510 = vmatprep.subr.mxu0 0.0
    %3511 = vmatpush1.msra.mxu0 0.0
    %3512 = vmatprep.subr.mxu0 0.0
    %3513 = vmatpush1.msra.mxu0 0.0
    %3514 = vmatprep.subr.mxu0 0.0
    %3515 = vmatpush1.msra.mxu0 0.0
    %3516 = vmatprep.subr.mxu0 0.0
    %3517 = vmatpush1.msra.mxu0 0.0
    %3518 = vmatprep.subr.mxu0 0.0
    %3519 = vmatpush1.msra.mxu0 0.0
    %3520 = vmatprep.mubr.f32.mxu0 0.0
    %3521 = vmatmul.mubr.f32.gmra.mrb[0].mxu0 %v3431
    %v3522 = vpop.f32.mrb[0].mxu0
    %v3523 = vadd.f32 %v3454, %v3522
    %v3524 = vpop.f32.mrb[0].mxu0
    %3525 = vdwg.mxu0
    %v3526 = vxor.u32 %v3523, 2147483648
    %v3527 = vmul.f32 %v3526, 1.442695
    %v3528 = vpow.pop %v3527
    %v3529 = vadd.f32 %v3528, 1.0
    %v3530 = vrcp.pop %v3529
    %v3531 = vmul.f32 1.0, %v3530
    %vm3532 = vcmask 7168
    %3533 = vst.msk [vmem:[%s7] sm:$0xff] %vm3532, %v3531
    // Predicated region
    $region30: #{lstm_forward.1} parent=1 // pred_check
      _
    $region31: #{lstm_forward.1} parent=1 // pred_check_branch
      %3535 = sbr.rel (0) target = $region33
    $region32: #{lstm_forward.1} parent=1 // pred_region
      %s3537 = ssub.s32 128, 128
      %3538 = vsyncadd [#allocation6], %s3537
      %s3540 = sshll.u32 [#allocation7], 4
      %s3541 = int_to_ptr.vmem [resolvable:$true] %s3540
      %3543 = dma.vmem_to_hbm [thread:$0]  %s3541, 128, %s6, [#allocation6]
    $region33: #{lstm_forward.1} parent=1 // pred_fallthru
      _
    // Predicated region
    $region34: #{lstm_forward.1} parent=1 // pred_check
      _
    $region35: #{lstm_forward.1} parent=1 // pred_check_branch
      %3545 = sbr.rel (0) target = $region37
    $region36: #{lstm_forward.1} parent=1 // pred_region
      _
    $region37: #{lstm_forward.1} parent=1 // pred_fallthru
      _
    // Predicated region
    $region38: #{lstm_forward.1} parent=1 // pred_check
      _
    $region39: #{lstm_forward.1} parent=1 // pred_check_branch
      %3547 = sbr.rel (0) target = $region41
    $region40: #{lstm_forward.1} parent=1 // pred_region
      %3548 = dma.done [#allocation6], 128
    $region41: #{lstm_forward.1} parent=1 // pred_fallthru
      _
    // Predicated region
    $region42: #{lstm_forward.1} parent=1 // pred_check
      _
    $region43: #{lstm_forward.1} parent=1 // pred_check_branch
      %3550 = sbr.rel (0) target = $region45
    $region44: #{lstm_forward.1} parent=1 // pred_region
      _
    $region45: #{lstm_forward.1} parent=1 // pred_fallthru
      _
    %3551 = vsyncpa [#allocation5], 1
    %3552 = vsyncpa [#allocation6], 1

</llo_original>
